<compile_context>
chip_gen: v6e
topology: v6e:2x2x1
jax: 0.10.0
libtpu: 0.0.40
codegen_flags: <defaults>
</compile_context>

<pallas_src>
import jax
import jax.numpy as jnp
from jax import lax
from jax.experimental import pallas as pl
from jax.experimental.pallas import tpu as pltpu

BN_EPS = 1e-5


# ----------------------------------------------------------------------------
# Pallas kernel: max-pool (8x8 -> 1x1) + coords_predictor MLP (BN pre-folded)
# ----------------------------------------------------------------------------
def _coords_head_kernel(x5_ref, w1_ref, b1_ref, w2_ref, b2_ref, w3_ref, b3_ref,
                        out_ref):
    # x5_ref: (TM, H*W, C) f32, C lane-dense.  MaxPool2d(8) over an 8x8 map
    # == global spatial max -> sublane reduce over axis 1.
    pooled = jnp.max(x5_ref[...], axis=1)                               # (TM, C) f32

    # fc1 (+ folded BN1) + ReLU     -- bf16 MXU inputs, f32 accumulation
    h = jnp.dot(pooled.astype(jnp.bfloat16), w1_ref[...],
                preferred_element_type=jnp.float32) + b1_ref[...]
    h = jnp.maximum(h, 0.0)

    # fc2 (+ folded BN2) + ReLU
    h = jnp.dot(h.astype(jnp.bfloat16), w2_ref[...],
                preferred_element_type=jnp.float32) + b2_ref[...]
    h = jnp.maximum(h, 0.0)

    # fc3
    out_ref[...] = (jnp.dot(h.astype(jnp.bfloat16), w3_ref[...],
                            preferred_element_type=jnp.float32)
                    + b3_ref[...]).astype(out_ref.dtype)


def coords_head(x5, p):
    """x5: (N, C, H, W) NCHW -> x_coord: (N, 256).  Pool + MLP in one kernel."""
    n, c, hh, ww = x5.shape
    assert (hh, ww) == (8, 8), (
        "MaxPool2d(8) fusion assumes an 8x8 x5 feature map; got %r" % ((hh, ww),))
    hw = hh * ww

    # (N, C, H, W) -> (N, H*W, C): C lane-dense for pooling + matmul LHS.
    x5_t = jnp.transpose(x5.reshape(n, c, hw), (0, 2, 1))

    # Fold eval-mode BatchNorm1d into the Linear weights/biases (trace time).
    s1 = p["g1"] * lax.rsqrt(p["v1"] + BN_EPS)                 # (1, 1024)
    w1 = (p["w1"] * s1).astype(jnp.bfloat16)                   # (512, 1024) bf16
    b1 = (p["b1"] - p["m1"]) * s1 + p["be1"]                   # (1, 1024) f32
    s2 = p["g2"] * lax.rsqrt(p["v2"] + BN_EPS)
    w2 = (p["w2"] * s2).astype(jnp.bfloat16)                   # (1024, 512) bf16
    b2 = (p["b2"] - p["m2"]) * s2 + p["be2"]                   # (1, 512) f32
    w3 = p["w3"].astype(jnp.bfloat16)                          # (512, 256) bf16
    b3 = p["b3"]                                               # (1, 256) f32

    d1, d2, d_out = w1.shape[1], w2.shape[1], w3.shape[1]

    # Batch grid; weights pinned via constant index_maps (stay VMEM-resident).
    tm = n if n < 256 else 256
    grid = (pl.cdiv(n, tm),)

    def _pin(shape):
        return pl.BlockSpec(shape, lambda i, nd=len(shape): (0,) * nd)

    in_specs = [
        pl.BlockSpec((tm, hw, c), lambda i: (i, 0, 0)),        # x5 tile over batch
        _pin(w1.shape), _pin(b1.shape),
        _pin(w2.shape), _pin(b2.shape),
        _pin(w3.shape), _pin(b3.shape),
    ]
    out_spec = pl.BlockSpec((tm, d_out), lambda i: (i, 0))

    flops = 2 * n * (c * d1 + d1 * d2 + d2 * d_out)
    bytes_accessed = (x5_t.size * 4
                      + (w1.size + w2.size + w3.size) * 2
                      + (b1.size + b2.size + b3.size) * 4
                      + n * d_out * 4)
    cost = pl.CostEstimate(flops=flops, transcendentals=0,
                           bytes_accessed=bytes_accessed)

    return pl.pallas_call(
        _coords_head_kernel,
        out_shape=jax.ShapeDtypeStruct((n, d_out), jnp.float32),
        grid=grid,
        in_specs=in_specs,
        out_specs=out_spec,
        compiler_params=pltpu.CompilerParams(
            dimension_semantics=("parallel",)),
        cost_estimate=cost,
    )(x5_t, w1, b1, w2, b2, w3, b3)


# ----------------------------------------------------------------------------
# Base model stub (external dependency of MultiTaskNet, not part of the module)
# ----------------------------------------------------------------------------
def base_model_stub(x, sp):
    # TODO(synk): base_model is an injected external network (ResUNet18 etc.);
    # stubbed with two deterministic plain-JAX convs producing the
    # (x1, x2, x5, x, x_2d) tuple the MultiTaskNet forward expects.
    dn5 = lax.conv_dimension_numbers(x.shape, sp["w5"].shape, ("NCHW", "OIHW", "NCHW"))
    x5 = lax.conv_general_dilated(x, sp["w5"], window_strides=(2, 2),
                                  padding="SAME", dimension_numbers=dn5)     # (N,512,8,8)
    dn2d = lax.conv_dimension_numbers(x.shape, sp["w2d"].shape, ("NCHW", "OIHW", "NCHW"))
    x_2d = lax.conv_general_dilated(x, sp["w2d"], window_strides=(1, 1),
                                    padding="SAME", dimension_numbers=dn2d)  # (N,2,16,16)
    return x, x, x5, x, x_2d


# ----------------------------------------------------------------------------
# MultiTaskNet.forward  (pooling=True, after_encoder=True, use_time=False,
#                        constraint=False -> returns (x_2d, x_coord))
# ----------------------------------------------------------------------------
def multitasknet_forward(x, stub_params, head_params):
    x1, x2, x5, x_dec, x_2d = base_model_stub(x, stub_params)
    # pooling and after_encoder -> x = max_pool(x5); flatten; coords_predictor
    x_coord = coords_head(x5, head_params)
    return x_2d, x_coord


# ----------------------------------------------------------------------------
# Parameter init (deterministic, PyTorch-shaped) + reference check
# ----------------------------------------------------------------------------
def init_params(key):
    ks = jax.random.split(key, 8)
    f32 = jnp.float32
    # coords_predictor: input_dim=512 (ResUNet18, pooling, after_encoder),
    # depth = [1024, 512, 256]
    head = {
        "w1": 0.02 * jax.random.normal(ks[0], (512, 1024), f32),
        "b1": 0.02 * jax.random.normal(ks[1], (1, 1024), f32),
        "g1": jnp.ones((1, 1024), f32), "be1": jnp.zeros((1, 1024), f32),
        "m1": jnp.zeros((1, 1024), f32), "v1": jnp.ones((1, 1024), f32),
        "w2": 0.02 * jax.random.normal(ks[2], (1024, 512), f32),
        "b2": 0.02 * jax.random.normal(ks[3], (1, 512), f32),
        "g2": jnp.ones((1, 512), f32), "be2": jnp.zeros((1, 512), f32),
        "m2": jnp.zeros((1, 512), f32), "v2": jnp.ones((1, 512), f32),
        "w3": 0.02 * jax.random.normal(ks[4], (512, 256), f32),
        "b3": 0.02 * jax.random.normal(ks[5], (1, 256), f32),
    }
    stub = {
        "w5": 0.05 * jax.random.normal(ks[6], (512, 3, 3, 3), f32),   # OIHW
        "w2d": 0.05 * jax.random.normal(ks[7], (2, 3, 1, 1), f32),    # OIHW
    }
    return stub, head


def coords_head_ref(x5, p):
    """Exact f32 reference of the PyTorch head semantics (pool + Lin/BN/ReLU x2 + Lin)."""
    n = x5.shape[0]
    pooled = jnp.max(x5.reshape(n, x5.shape[1], -1), axis=-1)
    h = pooled @ p["w1"] + p["b1"]
    h = (h - p["m1"]) * lax.rsqrt(p["v1"] + BN_EPS) * p["g1"] + p["be1"]
    h = jnp.maximum(h, 0.0)
    h = h @ p["w2"] + p["b2"]
    h = (h - p["m2"]) * lax.rsqrt(p["v2"] + BN_EPS) * p["g2"] + p["be2"]
    h = jnp.maximum(h, 0.0)
    return h @ p["w3"] + p["b3"]


if __name__ == "__main__":
    key = jax.random.PRNGKey(0)
    kx, kp = jax.random.split(key)
    stub_params, head_params = init_params(kp)

    # Small input image, NCHW: batch=2, channels=3, spatial=16
    x = jax.random.normal(kx, (2, 3, 16, 16), jnp.float32)

    x_2d, x_coord = jax.jit(multitasknet_forward)(x, stub_params, head_params)
    jax.block_until_ready((x_2d, x_coord))

    # Correctness check vs. pure-JAX f32 reference of the head (tolerance sized
    # for the intentional bf16 weight quantization inside the kernel).
    _, _, x5, _, _ = base_model_stub(x, stub_params)
    ref = coords_head_ref(x5, head_params)
    assert x_2d.shape == (2, 2, 16, 16)
    assert x_coord.shape == (2, 256)
    assert jnp.allclose(x_coord, ref, atol=1e-2, rtol=1e-2), (
        float(jnp.max(jnp.abs(x_coord - ref))))

    print("KERNEL_OK")
</pallas_src>

<mosaic_0001>
module attributes {stable_mosaic.version = 11 : i64} {
  func.func @_coords_head_kernel(%arg0: i32, %arg1: memref<2x64x512xf32, #tpu.memory_space<vmem>>, %arg2: memref<512x1024xbf16, #tpu.memory_space<vmem>>, %arg3: memref<1x1024xf32, #tpu.memory_space<vmem>>, %arg4: memref<1024x512xbf16, #tpu.memory_space<vmem>>, %arg5: memref<1x512xf32, #tpu.memory_space<vmem>>, %arg6: memref<512x256xbf16, #tpu.memory_space<vmem>>, %arg7: memref<1x256xf32, #tpu.memory_space<vmem>>, %arg8: memref<2x256xf32, #tpu.memory_space<vmem>>) attributes {dimension_semantics = [#tpu.dimension_semantics<parallel>], iteration_bounds = array<i64: 1>, scalar_prefetch = 0 : i64, scratch_operands = 0 : i64, tpu.core_type = #tpu.core_type<tc>, window_params = [{transform_indices = @transform_0, window_bounds = array<i64: 2, 64, 512>}, {pipeline_mode = #tpu.pipeline_mode<synchronous>, transform_indices = @transform_1, window_bounds = array<i64: 512, 1024>}, {pipeline_mode = #tpu.pipeline_mode<synchronous>, transform_indices = @transform_2, window_bounds = array<i64: 1, 1024>}, {pipeline_mode = #tpu.pipeline_mode<synchronous>, transform_indices = @transform_3, window_bounds = array<i64: 1024, 512>}, {pipeline_mode = #tpu.pipeline_mode<synchronous>, transform_indices = @transform_4, window_bounds = array<i64: 1, 512>}, {pipeline_mode = #tpu.pipeline_mode<synchronous>, transform_indices = @transform_5, window_bounds = array<i64: 512, 256>}, {pipeline_mode = #tpu.pipeline_mode<synchronous>, transform_indices = @transform_6, window_bounds = array<i64: 1, 256>}, {transform_indices = @transform_7, window_bounds = array<i64: 2, 256>}]} {
    %c0 = arith.constant 0 : index
    %c0_0 = arith.constant 0 : index
    %c0_1 = arith.constant 0 : index
    %0 = vector.load %arg1[%c0, %c0_0, %c0_1] : memref<2x64x512xf32, #tpu.memory_space<vmem>>, vector<2x64x512xf32>
    %cst = arith.constant dense<0xFF800000> : vector<2x512xf32>
    %1 = vector.multi_reduction <maximumf>, %0, %cst [1] : vector<2x64x512xf32> to vector<2x512xf32>
    %2 = arith.truncf %1 : vector<2x512xf32> to vector<2x512xbf16>
    %c0_2 = arith.constant 0 : index
    %c0_3 = arith.constant 0 : index
    %3 = vector.load %arg2[%c0_2, %c0_3] : memref<512x1024xbf16, #tpu.memory_space<vmem>>, vector<512x1024xbf16>
    %cst_4 = arith.constant dense<0.000000e+00> : vector<2x1024xf32>
    %4 = tpu.matmul %2, %3, %cst_4 {dimension_numbers = #tpu.dot_dimension_numbers<[1], [0], [0], [1], [0, 0, 1, 1], [], []>} : vector<2x512xbf16>, vector<512x1024xbf16>, vector<2x1024xf32> -> vector<2x1024xf32>
    %c0_5 = arith.constant 0 : index
    %c0_6 = arith.constant 0 : index
    %5 = vector.load %arg3[%c0_5, %c0_6] : memref<1x1024xf32, #tpu.memory_space<vmem>>, vector<1x1024xf32>
    %6 = vector.broadcast %5 : vector<1x1024xf32> to vector<2x1024xf32>
    %7 = arith.addf %4, %6 : vector<2x1024xf32>
    %cst_7 = arith.constant 0.000000e+00 : f32
    %8 = vector.broadcast %cst_7 : f32 to vector<2x1024xf32>
    %9 = arith.maximumf %7, %8 : vector<2x1024xf32>
    %10 = arith.truncf %9 : vector<2x1024xf32> to vector<2x1024xbf16>
    %c0_8 = arith.constant 0 : index
    %c0_9 = arith.constant 0 : index
    %11 = vector.load %arg4[%c0_8, %c0_9] : memref<1024x512xbf16, #tpu.memory_space<vmem>>, vector<1024x512xbf16>
    %cst_10 = arith.constant dense<0.000000e+00> : vector<2x512xf32>
    %12 = tpu.matmul %10, %11, %cst_10 {dimension_numbers = #tpu.dot_dimension_numbers<[1], [0], [0], [1], [0, 0, 1, 1], [], []>} : vector<2x1024xbf16>, vector<1024x512xbf16>, vector<2x512xf32> -> vector<2x512xf32>
    %c0_11 = arith.constant 0 : index
    %c0_12 = arith.constant 0 : index
    %13 = vector.load %arg5[%c0_11, %c0_12] : memref<1x512xf32, #tpu.memory_space<vmem>>, vector<1x512xf32>
    %14 = vector.broadcast %13 : vector<1x512xf32> to vector<2x512xf32>
    %15 = arith.addf %12, %14 : vector<2x512xf32>
    %cst_13 = arith.constant 0.000000e+00 : f32
    %16 = vector.broadcast %cst_13 : f32 to vector<2x512xf32>
    %17 = arith.maximumf %15, %16 : vector<2x512xf32>
    %18 = arith.truncf %17 : vector<2x512xf32> to vector<2x512xbf16>
    %c0_14 = arith.constant 0 : index
    %c0_15 = arith.constant 0 : index
    %19 = vector.load %arg6[%c0_14, %c0_15] : memref<512x256xbf16, #tpu.memory_space<vmem>>, vector<512x256xbf16>
    %cst_16 = arith.constant dense<0.000000e+00> : vector<2x256xf32>
    %20 = tpu.matmul %18, %19, %cst_16 {dimension_numbers = #tpu.dot_dimension_numbers<[1], [0], [0], [1], [0, 0, 1, 1], [], []>} : vector<2x512xbf16>, vector<512x256xbf16>, vector<2x256xf32> -> vector<2x256xf32>
    %c0_17 = arith.constant 0 : index
    %c0_18 = arith.constant 0 : index
    %21 = vector.load %arg7[%c0_17, %c0_18] : memref<1x256xf32, #tpu.memory_space<vmem>>, vector<1x256xf32>
    %22 = vector.broadcast %21 : vector<1x256xf32> to vector<2x256xf32>
    %23 = arith.addf %20, %22 : vector<2x256xf32>
    %c0_19 = arith.constant 0 : index
    %c0_20 = arith.constant 0 : index
    %24 = vector.load %arg8[%c0_19, %c0_20] : memref<2x256xf32, #tpu.memory_space<vmem>>, vector<2x256xf32>
    tpu.vector_store %arg8[%c0_19, %c0_20], %23 {strides = array<i32>} : memref<2x256xf32, #tpu.memory_space<vmem>>, vector<2x256xf32>,
    return
  }
  func.func @transform_0(%arg0: i32) -> (i32, i32, i32) {
    %c0_i32 = arith.constant 0 : i32
    %c0_i32_0 = arith.constant 0 : i32
    %c0_i32_1 = arith.constant 0 : i32
    return %arg0, %c0_i32, %c0_i32_0 : i32, i32, i32
  }
  func.func @transform_1(%arg0: i32) -> (i32, i32) {
    %c0_i32 = arith.constant 0 : i32
    %c0_i32_0 = arith.constant 0 : i32
    %c0_i32_1 = arith.constant 0 : i32
    return %c0_i32, %c0_i32_0 : i32, i32
  }
  func.func @transform_2(%arg0: i32) -> (i32, i32) {
    %c0_i32 = arith.constant 0 : i32
    %c0_i32_0 = arith.constant 0 : i32
    %c0_i32_1 = arith.constant 0 : i32
    return %c0_i32, %c0_i32_0 : i32, i32
  }
  func.func @transform_3(%arg0: i32) -> (i32, i32) {
    %c0_i32 = arith.constant 0 : i32
    %c0_i32_0 = arith.constant 0 : i32
    %c0_i32_1 = arith.constant 0 : i32
    return %c0_i32, %c0_i32_0 : i32, i32
  }
  func.func @transform_4(%arg0: i32) -> (i32, i32) {
    %c0_i32 = arith.constant 0 : i32
    %c0_i32_0 = arith.constant 0 : i32
    %c0_i32_1 = arith.constant 0 : i32
    return %c0_i32, %c0_i32_0 : i32, i32
  }
  func.func @transform_5(%arg0: i32) -> (i32, i32) {
    %c0_i32 = arith.constant 0 : i32
    %c0_i32_0 = arith.constant 0 : i32
    %c0_i32_1 = arith.constant 0 : i32
    return %c0_i32, %c0_i32_0 : i32, i32
  }
  func.func @transform_6(%arg0: i32) -> (i32, i32) {
    %c0_i32 = arith.constant 0 : i32
    %c0_i32_0 = arith.constant 0 : i32
    %c0_i32_1 = arith.constant 0 : i32
    return %c0_i32, %c0_i32_0 : i32, i32
  }
  func.func @transform_7(%arg0: i32) -> (i32, i32) {
    %c0_i32 = arith.constant 0 : i32
    %c0_i32_0 = arith.constant 0 : i32
    return %arg0, %c0_i32 : i32, i32
  }
}

</mosaic_0001>

<llo_original>
// kernel: multitasknet_forward.1
$region0: #{multitasknet_forward.1}
  #allocation0 [shape = 'u32[]', space=smem, size = 0x4, offset = 0x4, fixed_abs, tag = 'smem constant byte address 0x4 - core index']
  #allocation1 [shape = 'u32[144,128]{1,0:T(1,128)}', space=vmem, size = 0x12000, scoped, tag = 'internal scratch']
  %s0 = inlined_call_operand.vmem [shape: f32[2,64,512], index: 0, kind: input, shape index: {}]
  %s1 = inlined_call_operand.vmem [shape: bf16[512,1024], index: 1, kind: input, shape index: {}]
  %s2 = inlined_call_operand.vmem [shape: f32[1,1024], index: 2, kind: input, shape index: {}]
  %s3 = inlined_call_operand.vmem [shape: bf16[1024,512], index: 3, kind: input, shape index: {}]
  %s4 = inlined_call_operand.vmem [shape: f32[1,512], index: 4, kind: input, shape index: {}]
  %s5 = inlined_call_operand.vmem [shape: bf16[512,256], index: 5, kind: input, shape index: {}]
  %s6 = inlined_call_operand.vmem [shape: f32[1,256], index: 6, kind: input, shape index: {}]
  %s7 = inlined_call_operand.hbm [shape: f32[2,256], index: 7, kind: output, shape index: {}]
  %s8 = sld [smem:[#allocation0]]
  $region38: #{multitasknet_forward.1} parent=0
    _
  %s10 = ssub.s32 1, %s8
  %s11 = scalar_select 0, %s10, %s8
  $region1: #{multitasknet_forward.1} parent=0
    #allocation2 [shape = 'u8[2048]{0}', space=vmem, size = 0x800, scoped, tag = 'output window, operand 0, single buffered']
    #allocation3 [shape = 's32[1]{0}', space=sflag, size = 0x4, scoped, tag = 'scoped memory for multitasknet_forward.1']
    %12 = vsyncpa [#allocation3], 0
    // Predicated region
    $region2: #{multitasknet_forward.1} parent=1 // pred_check
      _
    $region3: #{multitasknet_forward.1} parent=1 // pred_check_branch
      %14 = sbr.rel (0) target = $region5
    $region4: #{multitasknet_forward.1} parent=1 // pred_region
      _
    $region5: #{multitasknet_forward.1} parent=1 // pred_fallthru
      _
    // Predicated region
    $region6: #{multitasknet_forward.1} parent=1 // pred_check
      _
    $region7: #{multitasknet_forward.1} parent=1 // pred_check_branch
      %16 = sbr.rel (0) target = $region9
    $region8: #{multitasknet_forward.1} parent=1 // pred_region
      _
    $region9: #{multitasknet_forward.1} parent=1 // pred_fallthru
      _
    // Predicated region
    $region10: #{multitasknet_forward.1} parent=1 // pred_check
      _
    $region11: #{multitasknet_forward.1} parent=1 // pred_check_branch
      %18 = sbr.rel (0) target = $region13
    $region12: #{multitasknet_forward.1} parent=1 // pred_region
      _
    $region13: #{multitasknet_forward.1} parent=1 // pred_fallthru
      _
    // Predicated region
    $region14: #{multitasknet_forward.1} parent=1 // pred_check
      _
    $region15: #{multitasknet_forward.1} parent=1 // pred_check_branch
      %20 = sbr.rel (0) target = $region17
    $region16: #{multitasknet_forward.1} parent=1 // pred_region
      _
    $region17: #{multitasknet_forward.1} parent=1 // pred_fallthru
      _
    // Predicated region
    $region18: #{multitasknet_forward.1} parent=1 // pred_check
      _
    $region19: #{multitasknet_forward.1} parent=1 // pred_check_branch
      %22 = sbr.rel (0) target = $region21
    $region20: #{multitasknet_forward.1} parent=1 // pred_region
      _
    $region21: #{multitasknet_forward.1} parent=1 // pred_fallthru
      _
    // Predicated region
    $region22: #{multitasknet_forward.1} parent=1 // pred_check
      _
    $region23: #{multitasknet_forward.1} parent=1 // pred_check_branch
      %24 = sbr.rel (0) target = $region25
    $region24: #{multitasknet_forward.1} parent=1 // pred_region
      _
    $region25: #{multitasknet_forward.1} parent=1 // pred_fallthru
      _
    // Predicated region
    $region26: #{multitasknet_forward.1} parent=1 // pred_check
      _
    $region27: #{multitasknet_forward.1} parent=1 // pred_check_branch
      %26 = sbr.rel (0) target = $region29
    $region28: #{multitasknet_forward.1} parent=1 // pred_region
      _
    $region29: #{multitasknet_forward.1} parent=1 // pred_fallthru
      _
    %v27 = vld [vmem:[%s0] sm:$0xff]
    %v28 = vld [vmem:[%s0 + $0x8] sm:$0xff]
    %v29 = vld [vmem:[%s0 + $0x10] sm:$0xff]
    %v30 = vld [vmem:[%s0 + $0x18] sm:$0xff]
    %v31 = vld [vmem:[%s0 + $0x20] sm:$0xff]
    %v32 = vld [vmem:[%s0 + $0x28] sm:$0xff]
    %v33 = vld [vmem:[%s0 + $0x30] sm:$0xff]
    %v34 = vld [vmem:[%s0 + $0x38] sm:$0xff]
    %v35 = vld [vmem:[%s0 + $0x40] sm:$0xff]
    %v36 = vld [vmem:[%s0 + $0x48] sm:$0xff]
    %v37 = vld [vmem:[%s0 + $0x50] sm:$0xff]
    %v38 = vld [vmem:[%s0 + $0x58] sm:$0xff]
    %v39 = vld [vmem:[%s0 + $0x60] sm:$0xff]
    %v40 = vld [vmem:[%s0 + $0x68] sm:$0xff]
    %v41 = vld [vmem:[%s0 + $0x70] sm:$0xff]
    %v42 = vld [vmem:[%s0 + $0x78] sm:$0xff]
    %v43 = vld [vmem:[%s0 + $0x80] sm:$0xff]
    %v44 = vld [vmem:[%s0 + $0x88] sm:$0xff]
    %v45 = vld [vmem:[%s0 + $0x90] sm:$0xff]
    %v46 = vld [vmem:[%s0 + $0x98] sm:$0xff]
    %v47 = vld [vmem:[%s0 + $0xa0] sm:$0xff]
    %v48 = vld [vmem:[%s0 + $0xa8] sm:$0xff]
    %v49 = vld [vmem:[%s0 + $0xb0] sm:$0xff]
    %v50 = vld [vmem:[%s0 + $0xb8] sm:$0xff]
    %v51 = vld [vmem:[%s0 + $0xc0] sm:$0xff]
    %v52 = vld [vmem:[%s0 + $0xc8] sm:$0xff]
    %v53 = vld [vmem:[%s0 + $0xd0] sm:$0xff]
    %v54 = vld [vmem:[%s0 + $0xd8] sm:$0xff]
    %v55 = vld [vmem:[%s0 + $0xe0] sm:$0xff]
    %v56 = vld [vmem:[%s0 + $0xe8] sm:$0xff]
    %v57 = vld [vmem:[%s0 + $0xf0] sm:$0xff]
    %v58 = vld [vmem:[%s0 + $0xf8] sm:$0xff]
    %v59 = vld [vmem:[%s0 + $0x100] sm:$0xff]
    %v60 = vld [vmem:[%s0 + $0x108] sm:$0xff]
    %v61 = vld [vmem:[%s0 + $0x110] sm:$0xff]
    %v62 = vld [vmem:[%s0 + $0x118] sm:$0xff]
    %v63 = vld [vmem:[%s0 + $0x120] sm:$0xff]
    %v64 = vld [vmem:[%s0 + $0x128] sm:$0xff]
    %v65 = vld [vmem:[%s0 + $0x130] sm:$0xff]
    %v66 = vld [vmem:[%s0 + $0x138] sm:$0xff]
    %v67 = vld [vmem:[%s0 + $0x140] sm:$0xff]
    %v68 = vld [vmem:[%s0 + $0x148] sm:$0xff]
    %v69 = vld [vmem:[%s0 + $0x150] sm:$0xff]
    %v70 = vld [vmem:[%s0 + $0x158] sm:$0xff]
    %v71 = vld [vmem:[%s0 + $0x160] sm:$0xff]
    %v72 = vld [vmem:[%s0 + $0x168] sm:$0xff]
    %v73 = vld [vmem:[%s0 + $0x170] sm:$0xff]
    %v74 = vld [vmem:[%s0 + $0x178] sm:$0xff]
    %v75 = vld [vmem:[%s0 + $0x180] sm:$0xff]
    %v76 = vld [vmem:[%s0 + $0x188] sm:$0xff]
    %v77 = vld [vmem:[%s0 + $0x190] sm:$0xff]
    %v78 = vld [vmem:[%s0 + $0x198] sm:$0xff]
    %v79 = vld [vmem:[%s0 + $0x1a0] sm:$0xff]
    %v80 = vld [vmem:[%s0 + $0x1a8] sm:$0xff]
    %v81 = vld [vmem:[%s0 + $0x1b0] sm:$0xff]
    %v82 = vld [vmem:[%s0 + $0x1b8] sm:$0xff]
    %v83 = vld [vmem:[%s0 + $0x1c0] sm:$0xff]
    %v84 = vld [vmem:[%s0 + $0x1c8] sm:$0xff]
    %v85 = vld [vmem:[%s0 + $0x1d0] sm:$0xff]
    %v86 = vld [vmem:[%s0 + $0x1d8] sm:$0xff]
    %v87 = vld [vmem:[%s0 + $0x1e0] sm:$0xff]
    %v88 = vld [vmem:[%s0 + $0x1e8] sm:$0xff]
    %v89 = vld [vmem:[%s0 + $0x1f0] sm:$0xff]
    %v90 = vld [vmem:[%s0 + $0x1f8] sm:$0xff]
    %v91 = vmax.f32 %v27, %v31
    %v92 = vmax.f32 %v91, %v35
    %v93 = vmax.f32 %v92, %v39
    %v94 = vmax.f32 %v93, %v43
    %v95 = vmax.f32 %v94, %v47
    %v96 = vmax.f32 %v95, %v51
    %v97 = vmax.f32 %v96, %v55
    %v98 = vrot.slane %v97, 4
    %v99 = vmax.f32 %v97, %v98
    %v100 = vrot.slane %v99, 2
    %v101 = vmax.f32 %v99, %v100
    %v102 = vrot.slane %v101, 1
    %v103 = vmax.f32 %v101, %v102
    %v104 = vmax.f32 %v28, %v32
    %v105 = vmax.f32 %v104, %v36
    %v106 = vmax.f32 %v105, %v40
    %v107 = vmax.f32 %v106, %v44
    %v108 = vmax.f32 %v107, %v48
    %v109 = vmax.f32 %v108, %v52
    %v110 = vmax.f32 %v109, %v56
    %v111 = vrot.slane %v110, 4
    %v112 = vmax.f32 %v110, %v111
    %v113 = vrot.slane %v112, 2
    %v114 = vmax.f32 %v112, %v113
    %v115 = vrot.slane %v114, 1
    %v116 = vmax.f32 %v114, %v115
    %v117 = vmax.f32 %v29, %v33
    %v118 = vmax.f32 %v117, %v37
    %v119 = vmax.f32 %v118, %v41
    %v120 = vmax.f32 %v119, %v45
    %v121 = vmax.f32 %v120, %v49
    %v122 = vmax.f32 %v121, %v53
    %v123 = vmax.f32 %v122, %v57
    %v124 = vrot.slane %v123, 4
    %v125 = vmax.f32 %v123, %v124
    %v126 = vrot.slane %v125, 2
    %v127 = vmax.f32 %v125, %v126
    %v128 = vrot.slane %v127, 1
    %v129 = vmax.f32 %v127, %v128
    %v130 = vmax.f32 %v30, %v34
    %v131 = vmax.f32 %v130, %v38
    %v132 = vmax.f32 %v131, %v42
    %v133 = vmax.f32 %v132, %v46
    %v134 = vmax.f32 %v133, %v50
    %v135 = vmax.f32 %v134, %v54
    %v136 = vmax.f32 %v135, %v58
    %v137 = vrot.slane %v136, 4
    %v138 = vmax.f32 %v136, %v137
    %v139 = vrot.slane %v138, 2
    %v140 = vmax.f32 %v138, %v139
    %v141 = vrot.slane %v140, 1
    %v142 = vmax.f32 %v140, %v141
    %v143 = vmax.f32 %v59, %v63
    %v144 = vmax.f32 %v143, %v67
    %v145 = vmax.f32 %v144, %v71
    %v146 = vmax.f32 %v145, %v75
    %v147 = vmax.f32 %v146, %v79
    %v148 = vmax.f32 %v147, %v83
    %v149 = vmax.f32 %v148, %v87
    %v150 = vrot.slane %v149, 4
    %v151 = vmax.f32 %v149, %v150
    %v152 = vrot.slane %v151, 2
    %v153 = vmax.f32 %v151, %v152
    %v154 = vrot.slane %v153, 1
    %v155 = vmax.f32 %v153, %v154
    %v156 = vmax.f32 %v60, %v64
    %v157 = vmax.f32 %v156, %v68
    %v158 = vmax.f32 %v157, %v72
    %v159 = vmax.f32 %v158, %v76
    %v160 = vmax.f32 %v159, %v80
    %v161 = vmax.f32 %v160, %v84
    %v162 = vmax.f32 %v161, %v88
    %v163 = vrot.slane %v162, 4
    %v164 = vmax.f32 %v162, %v163
    %v165 = vrot.slane %v164, 2
    %v166 = vmax.f32 %v164, %v165
    %v167 = vrot.slane %v166, 1
    %v168 = vmax.f32 %v166, %v167
    %v169 = vmax.f32 %v61, %v65
    %v170 = vmax.f32 %v169, %v69
    %v171 = vmax.f32 %v170, %v73
    %v172 = vmax.f32 %v171, %v77
    %v173 = vmax.f32 %v172, %v81
    %v174 = vmax.f32 %v173, %v85
    %v175 = vmax.f32 %v174, %v89
    %v176 = vrot.slane %v175, 4
    %v177 = vmax.f32 %v175, %v176
    %v178 = vrot.slane %v177, 2
    %v179 = vmax.f32 %v177, %v178
    %v180 = vrot.slane %v179, 1
    %v181 = vmax.f32 %v179, %v180
    %v182 = vmax.f32 %v62, %v66
    %v183 = vmax.f32 %v182, %v70
    %v184 = vmax.f32 %v183, %v74
    %v185 = vmax.f32 %v184, %v78
    %v186 = vmax.f32 %v185, %v82
    %v187 = vmax.f32 %v186, %v86
    %v188 = vmax.f32 %v187, %v90
    %v189 = vrot.slane %v188, 4
    %v190 = vmax.f32 %v188, %v189
    %v191 = vrot.slane %v190, 2
    %v192 = vmax.f32 %v190, %v191
    %v193 = vrot.slane %v192, 1
    %v194 = vmax.f32 %v192, %v193
    %v195 = vpack.c.bf16 %v103, %v103
    %v196 = vpack.c.bf16 %v116, %v116
    %v197 = vpack.c.bf16 %v129, %v129
    %v198 = vpack.c.bf16 %v142, %v142
    %v199 = vpack.c.bf16 %v155, %v155
    %v200 = vpack.c.bf16 %v168, %v168
    %v201 = vpack.c.bf16 %v181, %v181
    %v202 = vpack.c.bf16 %v194, %v194
    %v203 = vld [vmem:[%s1] sm:$0xff]
    %v204 = vld [vmem:[%s1 + $0x8] sm:$0xff]
    %v205 = vld [vmem:[%s1 + $0x10] sm:$0xff]
    %v206 = vld [vmem:[%s1 + $0x18] sm:$0xff]
    %v207 = vld [vmem:[%s1 + $0x20] sm:$0xff]
    %v208 = vld [vmem:[%s1 + $0x28] sm:$0xff]
    %v209 = vld [vmem:[%s1 + $0x30] sm:$0xff]
    %v210 = vld [vmem:[%s1 + $0x38] sm:$0xff]
    %v211 = vld [vmem:[%s1 + $0x40] sm:$0xff]
    %v212 = vld [vmem:[%s1 + $0x48] sm:$0xff]
    %v213 = vld [vmem:[%s1 + $0x50] sm:$0xff]
    %v214 = vld [vmem:[%s1 + $0x58] sm:$0xff]
    %v215 = vld [vmem:[%s1 + $0x60] sm:$0xff]
    %v216 = vld [vmem:[%s1 + $0x68] sm:$0xff]
    %v217 = vld [vmem:[%s1 + $0x70] sm:$0xff]
    %v218 = vld [vmem:[%s1 + $0x78] sm:$0xff]
    %v219 = vld [vmem:[%s1 + $0x80] sm:$0xff]
    %v220 = vld [vmem:[%s1 + $0x88] sm:$0xff]
    %v221 = vld [vmem:[%s1 + $0x90] sm:$0xff]
    %v222 = vld [vmem:[%s1 + $0x98] sm:$0xff]
    %v223 = vld [vmem:[%s1 + $0xa0] sm:$0xff]
    %v224 = vld [vmem:[%s1 + $0xa8] sm:$0xff]
    %v225 = vld [vmem:[%s1 + $0xb0] sm:$0xff]
    %v226 = vld [vmem:[%s1 + $0xb8] sm:$0xff]
    %v227 = vld [vmem:[%s1 + $0xc0] sm:$0xff]
    %v228 = vld [vmem:[%s1 + $0xc8] sm:$0xff]
    %v229 = vld [vmem:[%s1 + $0xd0] sm:$0xff]
    %v230 = vld [vmem:[%s1 + $0xd8] sm:$0xff]
    %v231 = vld [vmem:[%s1 + $0xe0] sm:$0xff]
    %v232 = vld [vmem:[%s1 + $0xe8] sm:$0xff]
    %v233 = vld [vmem:[%s1 + $0xf0] sm:$0xff]
    %v234 = vld [vmem:[%s1 + $0xf8] sm:$0xff]
    %v235 = vld [vmem:[%s1 + $0x100] sm:$0xff]
    %v236 = vld [vmem:[%s1 + $0x108] sm:$0xff]
    %v237 = vld [vmem:[%s1 + $0x110] sm:$0xff]
    %v238 = vld [vmem:[%s1 + $0x118] sm:$0xff]
    %v239 = vld [vmem:[%s1 + $0x120] sm:$0xff]
    %v240 = vld [vmem:[%s1 + $0x128] sm:$0xff]
    %v241 = vld [vmem:[%s1 + $0x130] sm:$0xff]
    %v242 = vld [vmem:[%s1 + $0x138] sm:$0xff]
    %v243 = vld [vmem:[%s1 + $0x140] sm:$0xff]
    %v244 = vld [vmem:[%s1 + $0x148] sm:$0xff]
    %v245 = vld [vmem:[%s1 + $0x150] sm:$0xff]
    %v246 = vld [vmem:[%s1 + $0x158] sm:$0xff]
    %v247 = vld [vmem:[%s1 + $0x160] sm:$0xff]
    %v248 = vld [vmem:[%s1 + $0x168] sm:$0xff]
    %v249 = vld [vmem:[%s1 + $0x170] sm:$0xff]
    %v250 = vld [vmem:[%s1 + $0x178] sm:$0xff]
    %v251 = vld [vmem:[%s1 + $0x180] sm:$0xff]
    %v252 = vld [vmem:[%s1 + $0x188] sm:$0xff]
    %v253 = vld [vmem:[%s1 + $0x190] sm:$0xff]
    %v254 = vld [vmem:[%s1 + $0x198] sm:$0xff]
    %v255 = vld [vmem:[%s1 + $0x1a0] sm:$0xff]
    %v256 = vld [vmem:[%s1 + $0x1a8] sm:$0xff]
    %v257 = vld [vmem:[%s1 + $0x1b0] sm:$0xff]
    %v258 = vld [vmem:[%s1 + $0x1b8] sm:$0xff]
    %v259 = vld [vmem:[%s1 + $0x1c0] sm:$0xff]
    %v260 = vld [vmem:[%s1 + $0x1c8] sm:$0xff]
    %v261 = vld [vmem:[%s1 + $0x1d0] sm:$0xff]
    %v262 = vld [vmem:[%s1 + $0x1d8] sm:$0xff]
    %v263 = vld [vmem:[%s1 + $0x1e0] sm:$0xff]
    %v264 = vld [vmem:[%s1 + $0x1e8] sm:$0xff]
    %v265 = vld [vmem:[%s1 + $0x1f0] sm:$0xff]
    %v266 = vld [vmem:[%s1 + $0x1f8] sm:$0xff]
    %v267 = vld [vmem:[%s1 + $0x200] sm:$0xff]
    %v268 = vld [vmem:[%s1 + $0x208] sm:$0xff]
    %v269 = vld [vmem:[%s1 + $0x210] sm:$0xff]
    %v270 = vld [vmem:[%s1 + $0x218] sm:$0xff]
    %v271 = vld [vmem:[%s1 + $0x220] sm:$0xff]
    %v272 = vld [vmem:[%s1 + $0x228] sm:$0xff]
    %v273 = vld [vmem:[%s1 + $0x230] sm:$0xff]
    %v274 = vld [vmem:[%s1 + $0x238] sm:$0xff]
    %v275 = vld [vmem:[%s1 + $0x240] sm:$0xff]
    %v276 = vld [vmem:[%s1 + $0x248] sm:$0xff]
    %v277 = vld [vmem:[%s1 + $0x250] sm:$0xff]
    %v278 = vld [vmem:[%s1 + $0x258] sm:$0xff]
    %v279 = vld [vmem:[%s1 + $0x260] sm:$0xff]
    %v280 = vld [vmem:[%s1 + $0x268] sm:$0xff]
    %v281 = vld [vmem:[%s1 + $0x270] sm:$0xff]
    %v282 = vld [vmem:[%s1 + $0x278] sm:$0xff]
    %v283 = vld [vmem:[%s1 + $0x280] sm:$0xff]
    %v284 = vld [vmem:[%s1 + $0x288] sm:$0xff]
    %v285 = vld [vmem:[%s1 + $0x290] sm:$0xff]
    %v286 = vld [vmem:[%s1 + $0x298] sm:$0xff]
    %v287 = vld [vmem:[%s1 + $0x2a0] sm:$0xff]
    %v288 = vld [vmem:[%s1 + $0x2a8] sm:$0xff]
    %v289 = vld [vmem:[%s1 + $0x2b0] sm:$0xff]
    %v290 = vld [vmem:[%s1 + $0x2b8] sm:$0xff]
    %v291 = vld [vmem:[%s1 + $0x2c0] sm:$0xff]
    %v292 = vld [vmem:[%s1 + $0x2c8] sm:$0xff]
    %v293 = vld [vmem:[%s1 + $0x2d0] sm:$0xff]
    %v294 = vld [vmem:[%s1 + $0x2d8] sm:$0xff]
    %v295 = vld [vmem:[%s1 + $0x2e0] sm:$0xff]
    %v296 = vld [vmem:[%s1 + $0x2e8] sm:$0xff]
    %v297 = vld [vmem:[%s1 + $0x2f0] sm:$0xff]
    %v298 = vld [vmem:[%s1 + $0x2f8] sm:$0xff]
    %v299 = vld [vmem:[%s1 + $0x300] sm:$0xff]
    %v300 = vld [vmem:[%s1 + $0x308] sm:$0xff]
    %v301 = vld [vmem:[%s1 + $0x310] sm:$0xff]
    %v302 = vld [vmem:[%s1 + $0x318] sm:$0xff]
    %v303 = vld [vmem:[%s1 + $0x320] sm:$0xff]
    %v304 = vld [vmem:[%s1 + $0x328] sm:$0xff]
    %v305 = vld [vmem:[%s1 + $0x330] sm:$0xff]
    %v306 = vld [vmem:[%s1 + $0x338] sm:$0xff]
    %v307 = vld [vmem:[%s1 + $0x340] sm:$0xff]
    %v308 = vld [vmem:[%s1 + $0x348] sm:$0xff]
    %v309 = vld [vmem:[%s1 + $0x350] sm:$0xff]
    %v310 = vld [vmem:[%s1 + $0x358] sm:$0xff]
    %v311 = vld [vmem:[%s1 + $0x360] sm:$0xff]
    %v312 = vld [vmem:[%s1 + $0x368] sm:$0xff]
    %v313 = vld [vmem:[%s1 + $0x370] sm:$0xff]
    %v314 = vld [vmem:[%s1 + $0x378] sm:$0xff]
    %v315 = vld [vmem:[%s1 + $0x380] sm:$0xff]
    %v316 = vld [vmem:[%s1 + $0x388] sm:$0xff]
    %v317 = vld [vmem:[%s1 + $0x390] sm:$0xff]
    %v318 = vld [vmem:[%s1 + $0x398] sm:$0xff]
    %v319 = vld [vmem:[%s1 + $0x3a0] sm:$0xff]
    %v320 = vld [vmem:[%s1 + $0x3a8] sm:$0xff]
    %v321 = vld [vmem:[%s1 + $0x3b0] sm:$0xff]
    %v322 = vld [vmem:[%s1 + $0x3b8] sm:$0xff]
    %v323 = vld [vmem:[%s1 + $0x3c0] sm:$0xff]
    %v324 = vld [vmem:[%s1 + $0x3c8] sm:$0xff]
    %v325 = vld [vmem:[%s1 + $0x3d0] sm:$0xff]
    %v326 = vld [vmem:[%s1 + $0x3d8] sm:$0xff]
    %v327 = vld [vmem:[%s1 + $0x3e0] sm:$0xff]
    %v328 = vld [vmem:[%s1 + $0x3e8] sm:$0xff]
    %v329 = vld [vmem:[%s1 + $0x3f0] sm:$0xff]
    %v330 = vld [vmem:[%s1 + $0x3f8] sm:$0xff]
    %v331 = vld [vmem:[%s1 + $0x400] sm:$0xff]
    %v332 = vld [vmem:[%s1 + $0x408] sm:$0xff]
    %v333 = vld [vmem:[%s1 + $0x410] sm:$0xff]
    %v334 = vld [vmem:[%s1 + $0x418] sm:$0xff]
    %v335 = vld [vmem:[%s1 + $0x420] sm:$0xff]
    %v336 = vld [vmem:[%s1 + $0x428] sm:$0xff]
    %v337 = vld [vmem:[%s1 + $0x430] sm:$0xff]
    %v338 = vld [vmem:[%s1 + $0x438] sm:$0xff]
    %v339 = vld [vmem:[%s1 + $0x440] sm:$0xff]
    %v340 = vld [vmem:[%s1 + $0x448] sm:$0xff]
    %v341 = vld [vmem:[%s1 + $0x450] sm:$0xff]
    %v342 = vld [vmem:[%s1 + $0x458] sm:$0xff]
    %v343 = vld [vmem:[%s1 + $0x460] sm:$0xff]
    %v344 = vld [vmem:[%s1 + $0x468] sm:$0xff]
    %v345 = vld [vmem:[%s1 + $0x470] sm:$0xff]
    %v346 = vld [vmem:[%s1 + $0x478] sm:$0xff]
    %v347 = vld [vmem:[%s1 + $0x480] sm:$0xff]
    %v348 = vld [vmem:[%s1 + $0x488] sm:$0xff]
    %v349 = vld [vmem:[%s1 + $0x490] sm:$0xff]
    %v350 = vld [vmem:[%s1 + $0x498] sm:$0xff]
    %v351 = vld [vmem:[%s1 + $0x4a0] sm:$0xff]
    %v352 = vld [vmem:[%s1 + $0x4a8] sm:$0xff]
    %v353 = vld [vmem:[%s1 + $0x4b0] sm:$0xff]
    %v354 = vld [vmem:[%s1 + $0x4b8] sm:$0xff]
    %v355 = vld [vmem:[%s1 + $0x4c0] sm:$0xff]
    %v356 = vld [vmem:[%s1 + $0x4c8] sm:$0xff]
    %v357 = vld [vmem:[%s1 + $0x4d0] sm:$0xff]
    %v358 = vld [vmem:[%s1 + $0x4d8] sm:$0xff]
    %v359 = vld [vmem:[%s1 + $0x4e0] sm:$0xff]
    %v360 = vld [vmem:[%s1 + $0x4e8] sm:$0xff]
    %v361 = vld [vmem:[%s1 + $0x4f0] sm:$0xff]
    %v362 = vld [vmem:[%s1 + $0x4f8] sm:$0xff]
    %v363 = vld [vmem:[%s1 + $0x500] sm:$0xff]
    %v364 = vld [vmem:[%s1 + $0x508] sm:$0xff]
    %v365 = vld [vmem:[%s1 + $0x510] sm:$0xff]
    %v366 = vld [vmem:[%s1 + $0x518] sm:$0xff]
    %v367 = vld [vmem:[%s1 + $0x520] sm:$0xff]
    %v368 = vld [vmem:[%s1 + $0x528] sm:$0xff]
    %v369 = vld [vmem:[%s1 + $0x530] sm:$0xff]
    %v370 = vld [vmem:[%s1 + $0x538] sm:$0xff]
    %v371 = vld [vmem:[%s1 + $0x540] sm:$0xff]
    %v372 = vld [vmem:[%s1 + $0x548] sm:$0xff]
    %v373 = vld [vmem:[%s1 + $0x550] sm:$0xff]
    %v374 = vld [vmem:[%s1 + $0x558] sm:$0xff]
    %v375 = vld [vmem:[%s1 + $0x560] sm:$0xff]
    %v376 = vld [vmem:[%s1 + $0x568] sm:$0xff]
    %v377 = vld [vmem:[%s1 + $0x570] sm:$0xff]
    %v378 = vld [vmem:[%s1 + $0x578] sm:$0xff]
    %v379 = vld [vmem:[%s1 + $0x580] sm:$0xff]
    %v380 = vld [vmem:[%s1 + $0x588] sm:$0xff]
    %v381 = vld [vmem:[%s1 + $0x590] sm:$0xff]
    %v382 = vld [vmem:[%s1 + $0x598] sm:$0xff]
    %v383 = vld [vmem:[%s1 + $0x5a0] sm:$0xff]
    %v384 = vld [vmem:[%s1 + $0x5a8] sm:$0xff]
    %v385 = vld [vmem:[%s1 + $0x5b0] sm:$0xff]
    %v386 = vld [vmem:[%s1 + $0x5b8] sm:$0xff]
    %v387 = vld [vmem:[%s1 + $0x5c0] sm:$0xff]
    %v388 = vld [vmem:[%s1 + $0x5c8] sm:$0xff]
    %v389 = vld [vmem:[%s1 + $0x5d0] sm:$0xff]
    %v390 = vld [vmem:[%s1 + $0x5d8] sm:$0xff]
    %v391 = vld [vmem:[%s1 + $0x5e0] sm:$0xff]
    %v392 = vld [vmem:[%s1 + $0x5e8] sm:$0xff]
    %v393 = vld [vmem:[%s1 + $0x5f0] sm:$0xff]
    %v394 = vld [vmem:[%s1 + $0x5f8] sm:$0xff]
    %v395 = vld [vmem:[%s1 + $0x600] sm:$0xff]
    %v396 = vld [vmem:[%s1 + $0x608] sm:$0xff]
    %v397 = vld [vmem:[%s1 + $0x610] sm:$0xff]
    %v398 = vld [vmem:[%s1 + $0x618] sm:$0xff]
    %v399 = vld [vmem:[%s1 + $0x620] sm:$0xff]
    %v400 = vld [vmem:[%s1 + $0x628] sm:$0xff]
    %v401 = vld [vmem:[%s1 + $0x630] sm:$0xff]
    %v402 = vld [vmem:[%s1 + $0x638] sm:$0xff]
    %v403 = vld [vmem:[%s1 + $0x640] sm:$0xff]
    %v404 = vld [vmem:[%s1 + $0x648] sm:$0xff]
    %v405 = vld [vmem:[%s1 + $0x650] sm:$0xff]
    %v406 = vld [vmem:[%s1 + $0x658] sm:$0xff]
    %v407 = vld [vmem:[%s1 + $0x660] sm:$0xff]
    %v408 = vld [vmem:[%s1 + $0x668] sm:$0xff]
    %v409 = vld [vmem:[%s1 + $0x670] sm:$0xff]
    %v410 = vld [vmem:[%s1 + $0x678] sm:$0xff]
    %v411 = vld [vmem:[%s1 + $0x680] sm:$0xff]
    %v412 = vld [vmem:[%s1 + $0x688] sm:$0xff]
    %v413 = vld [vmem:[%s1 + $0x690] sm:$0xff]
    %v414 = vld [vmem:[%s1 + $0x698] sm:$0xff]
    %v415 = vld [vmem:[%s1 + $0x6a0] sm:$0xff]
    %v416 = vld [vmem:[%s1 + $0x6a8] sm:$0xff]
    %v417 = vld [vmem:[%s1 + $0x6b0] sm:$0xff]
    %v418 = vld [vmem:[%s1 + $0x6b8] sm:$0xff]
    %v419 = vld [vmem:[%s1 + $0x6c0] sm:$0xff]
    %v420 = vld [vmem:[%s1 + $0x6c8] sm:$0xff]
    %v421 = vld [vmem:[%s1 + $0x6d0] sm:$0xff]
    %v422 = vld [vmem:[%s1 + $0x6d8] sm:$0xff]
    %v423 = vld [vmem:[%s1 + $0x6e0] sm:$0xff]
    %v424 = vld [vmem:[%s1 + $0x6e8] sm:$0xff]
    %v425 = vld [vmem:[%s1 + $0x6f0] sm:$0xff]
    %v426 = vld [vmem:[%s1 + $0x6f8] sm:$0xff]
    %v427 = vld [vmem:[%s1 + $0x700] sm:$0xff]
    %v428 = vld [vmem:[%s1 + $0x708] sm:$0xff]
    %v429 = vld [vmem:[%s1 + $0x710] sm:$0xff]
    %v430 = vld [vmem:[%s1 + $0x718] sm:$0xff]
    %v431 = vld [vmem:[%s1 + $0x720] sm:$0xff]
    %v432 = vld [vmem:[%s1 + $0x728] sm:$0xff]
    %v433 = vld [vmem:[%s1 + $0x730] sm:$0xff]
    %v434 = vld [vmem:[%s1 + $0x738] sm:$0xff]
    %v435 = vld [vmem:[%s1 + $0x740] sm:$0xff]
    %v436 = vld [vmem:[%s1 + $0x748] sm:$0xff]
    %v437 = vld [vmem:[%s1 + $0x750] sm:$0xff]
    %v438 = vld [vmem:[%s1 + $0x758] sm:$0xff]
    %v439 = vld [vmem:[%s1 + $0x760] sm:$0xff]
    %v440 = vld [vmem:[%s1 + $0x768] sm:$0xff]
    %v441 = vld [vmem:[%s1 + $0x770] sm:$0xff]
    %v442 = vld [vmem:[%s1 + $0x778] sm:$0xff]
    %v443 = vld [vmem:[%s1 + $0x780] sm:$0xff]
    %v444 = vld [vmem:[%s1 + $0x788] sm:$0xff]
    %v445 = vld [vmem:[%s1 + $0x790] sm:$0xff]
    %v446 = vld [vmem:[%s1 + $0x798] sm:$0xff]
    %v447 = vld [vmem:[%s1 + $0x7a0] sm:$0xff]
    %v448 = vld [vmem:[%s1 + $0x7a8] sm:$0xff]
    %v449 = vld [vmem:[%s1 + $0x7b0] sm:$0xff]
    %v450 = vld [vmem:[%s1 + $0x7b8] sm:$0xff]
    %v451 = vld [vmem:[%s1 + $0x7c0] sm:$0xff]
    %v452 = vld [vmem:[%s1 + $0x7c8] sm:$0xff]
    %v453 = vld [vmem:[%s1 + $0x7d0] sm:$0xff]
    %v454 = vld [vmem:[%s1 + $0x7d8] sm:$0xff]
    %v455 = vld [vmem:[%s1 + $0x7e0] sm:$0xff]
    %v456 = vld [vmem:[%s1 + $0x7e8] sm:$0xff]
    %v457 = vld [vmem:[%s1 + $0x7f0] sm:$0xff]
    %v458 = vld [vmem:[%s1 + $0x7f8] sm:$0xff]
    %v459 = vld [vmem:[%s2] sm:$0xff]
    %v461 = vlaneseq
    %v462 = vshrl.u32 %v461, 7
    %v463 = vsub.s32 0, %v462
    %v464 = vrot.slane %v459, %v463
    %v465 = vlaneseq
    %v466 = vshrl.u32 %v465, 7
    %v467 = vsub.s32 1, %v466
    %v468 = vrot.slane %v459, %v467
    %v469 = vlaneseq
    %v470 = vshrl.u32 %v469, 7
    %v471 = vsub.s32 2, %v470
    %v472 = vrot.slane %v459, %v471
    %v473 = vlaneseq
    %v474 = vshrl.u32 %v473, 7
    %v475 = vsub.s32 3, %v474
    %v476 = vrot.slane %v459, %v475
    %v477 = vlaneseq
    %v478 = vshrl.u32 %v477, 7
    %v479 = vsub.s32 4, %v478
    %v480 = vrot.slane %v459, %v479
    %v481 = vlaneseq
    %v482 = vshrl.u32 %v481, 7
    %v483 = vsub.s32 5, %v482
    %v484 = vrot.slane %v459, %v483
    %v485 = vlaneseq
    %v486 = vshrl.u32 %v485, 7
    %v487 = vsub.s32 6, %v486
    %v488 = vrot.slane %v459, %v487
    %v489 = vlaneseq
    %v490 = vshrl.u32 %v489, 7
    %v491 = vsub.s32 7, %v490
    %v492 = vrot.slane %v459, %v491
    %v509 = vunpack.c.l.b16 %v195
    %v510 = vunpack.c.l.b16 %v196
    %v511 = vunpack.c.l.b16 %v197
    %v512 = vunpack.c.l.b16 %v198
    %v513 = vunpack.c.l.b16 %v199
    %v514 = vunpack.c.l.b16 %v200
    %v515 = vunpack.c.l.b16 %v201
    %v516 = vunpack.c.l.b16 %v202
    %vm517 = vcmask 1041409
    %v518 = vsel %vm517, %v513, %v509
    %v519 = vsel %vm517, %v514, %v510
    %v520 = vsel %vm517, %v515, %v511
    %v521 = vsel %vm517, %v516, %v512
    %v522 = vpack.c.b16 %v518, %v518
    %v523 = vpack.c.b16 %v519, %v519
    %v524 = vpack.c.b16 %v520, %v520
    %v525 = vpack.c.b16 %v521, %v521
    %v786 = vunpack.c.l.b16 %v203
    %v787 = vunpack.c.h.b16 %v203
    %v788 = vunpack.c.l.b16 %v204
    %v789 = vunpack.c.h.b16 %v204
    %v790 = vunpack.c.l.b16 %v205
    %v791 = vunpack.c.h.b16 %v205
    %v792 = vunpack.c.l.b16 %v206
    %v793 = vunpack.c.h.b16 %v206
    %v794 = vunpack.c.l.b16 %v207
    %v795 = vunpack.c.h.b16 %v207
    %v796 = vunpack.c.l.b16 %v208
    %v797 = vunpack.c.h.b16 %v208
    %v798 = vunpack.c.l.b16 %v209
    %v799 = vunpack.c.h.b16 %v209
    %v800 = vunpack.c.l.b16 %v210
    %v801 = vunpack.c.h.b16 %v210
    %v802 = vunpack.c.l.b16 %v211
    %v803 = vunpack.c.h.b16 %v211
    %v804 = vunpack.c.l.b16 %v212
    %v805 = vunpack.c.h.b16 %v212
    %v806 = vunpack.c.l.b16 %v213
    %v807 = vunpack.c.h.b16 %v213
    %v808 = vunpack.c.l.b16 %v214
    %v809 = vunpack.c.h.b16 %v214
    %v810 = vunpack.c.l.b16 %v215
    %v811 = vunpack.c.h.b16 %v215
    %v812 = vunpack.c.l.b16 %v216
    %v813 = vunpack.c.h.b16 %v216
    %v814 = vunpack.c.l.b16 %v217
    %v815 = vunpack.c.h.b16 %v217
    %v816 = vunpack.c.l.b16 %v218
    %v817 = vunpack.c.h.b16 %v218
    %v818 = vunpack.c.l.b16 %v219
    %v819 = vunpack.c.h.b16 %v219
    %v820 = vunpack.c.l.b16 %v220
    %v821 = vunpack.c.h.b16 %v220
    %v822 = vunpack.c.l.b16 %v221
    %v823 = vunpack.c.h.b16 %v221
    %v824 = vunpack.c.l.b16 %v222
    %v825 = vunpack.c.h.b16 %v222
    %v826 = vunpack.c.l.b16 %v223
    %v827 = vunpack.c.h.b16 %v223
    %v828 = vunpack.c.l.b16 %v224
    %v829 = vunpack.c.h.b16 %v224
    %v830 = vunpack.c.l.b16 %v225
    %v831 = vunpack.c.h.b16 %v225
    %v832 = vunpack.c.l.b16 %v226
    %v833 = vunpack.c.h.b16 %v226
    %v834 = vunpack.c.l.b16 %v227
    %v835 = vunpack.c.h.b16 %v227
    %v836 = vunpack.c.l.b16 %v228
    %v837 = vunpack.c.h.b16 %v228
    %v838 = vunpack.c.l.b16 %v229
    %v839 = vunpack.c.h.b16 %v229
    %v840 = vunpack.c.l.b16 %v230
    %v841 = vunpack.c.h.b16 %v230
    %v842 = vunpack.c.l.b16 %v231
    %v843 = vunpack.c.h.b16 %v231
    %v844 = vunpack.c.l.b16 %v232
    %v845 = vunpack.c.h.b16 %v232
    %v846 = vunpack.c.l.b16 %v233
    %v847 = vunpack.c.h.b16 %v233
    %v848 = vunpack.c.l.b16 %v234
    %v849 = vunpack.c.h.b16 %v234
    %v850 = vunpack.c.l.b16 %v235
    %v851 = vunpack.c.h.b16 %v235
    %v852 = vunpack.c.l.b16 %v236
    %v853 = vunpack.c.h.b16 %v236
    %v854 = vunpack.c.l.b16 %v237
    %v855 = vunpack.c.h.b16 %v237
    %v856 = vunpack.c.l.b16 %v238
    %v857 = vunpack.c.h.b16 %v238
    %v858 = vunpack.c.l.b16 %v239
    %v859 = vunpack.c.h.b16 %v239
    %v860 = vunpack.c.l.b16 %v240
    %v861 = vunpack.c.h.b16 %v240
    %v862 = vunpack.c.l.b16 %v241
    %v863 = vunpack.c.h.b16 %v241
    %v864 = vunpack.c.l.b16 %v242
    %v865 = vunpack.c.h.b16 %v242
    %v866 = vunpack.c.l.b16 %v243
    %v867 = vunpack.c.h.b16 %v243
    %v868 = vunpack.c.l.b16 %v244
    %v869 = vunpack.c.h.b16 %v244
    %v870 = vunpack.c.l.b16 %v245
    %v871 = vunpack.c.h.b16 %v245
    %v872 = vunpack.c.l.b16 %v246
    %v873 = vunpack.c.h.b16 %v246
    %v874 = vunpack.c.l.b16 %v247
    %v875 = vunpack.c.h.b16 %v247
    %v876 = vunpack.c.l.b16 %v248
    %v877 = vunpack.c.h.b16 %v248
    %v878 = vunpack.c.l.b16 %v249
    %v879 = vunpack.c.h.b16 %v249
    %v880 = vunpack.c.l.b16 %v250
    %v881 = vunpack.c.h.b16 %v250
    %v882 = vunpack.c.l.b16 %v251
    %v883 = vunpack.c.h.b16 %v251
    %v884 = vunpack.c.l.b16 %v252
    %v885 = vunpack.c.h.b16 %v252
    %v886 = vunpack.c.l.b16 %v253
    %v887 = vunpack.c.h.b16 %v253
    %v888 = vunpack.c.l.b16 %v254
    %v889 = vunpack.c.h.b16 %v254
    %v890 = vunpack.c.l.b16 %v255
    %v891 = vunpack.c.h.b16 %v255
    %v892 = vunpack.c.l.b16 %v256
    %v893 = vunpack.c.h.b16 %v256
    %v894 = vunpack.c.l.b16 %v257
    %v895 = vunpack.c.h.b16 %v257
    %v896 = vunpack.c.l.b16 %v258
    %v897 = vunpack.c.h.b16 %v258
    %v898 = vunpack.c.l.b16 %v259
    %v899 = vunpack.c.h.b16 %v259
    %v900 = vunpack.c.l.b16 %v260
    %v901 = vunpack.c.h.b16 %v260
    %v902 = vunpack.c.l.b16 %v261
    %v903 = vunpack.c.h.b16 %v261
    %v904 = vunpack.c.l.b16 %v262
    %v905 = vunpack.c.h.b16 %v262
    %v906 = vunpack.c.l.b16 %v263
    %v907 = vunpack.c.h.b16 %v263
    %v908 = vunpack.c.l.b16 %v264
    %v909 = vunpack.c.h.b16 %v264
    %v910 = vunpack.c.l.b16 %v265
    %v911 = vunpack.c.h.b16 %v265
    %v912 = vunpack.c.l.b16 %v266
    %v913 = vunpack.c.h.b16 %v266
    %v914 = vunpack.c.l.b16 %v267
    %v915 = vunpack.c.h.b16 %v267
    %v916 = vunpack.c.l.b16 %v268
    %v917 = vunpack.c.h.b16 %v268
    %v918 = vunpack.c.l.b16 %v269
    %v919 = vunpack.c.h.b16 %v269
    %v920 = vunpack.c.l.b16 %v270
    %v921 = vunpack.c.h.b16 %v270
    %v922 = vunpack.c.l.b16 %v271
    %v923 = vunpack.c.h.b16 %v271
    %v924 = vunpack.c.l.b16 %v272
    %v925 = vunpack.c.h.b16 %v272
    %v926 = vunpack.c.l.b16 %v273
    %v927 = vunpack.c.h.b16 %v273
    %v928 = vunpack.c.l.b16 %v274
    %v929 = vunpack.c.h.b16 %v274
    %v930 = vunpack.c.l.b16 %v275
    %v931 = vunpack.c.h.b16 %v275
    %v932 = vunpack.c.l.b16 %v276
    %v933 = vunpack.c.h.b16 %v276
    %v934 = vunpack.c.l.b16 %v277
    %v935 = vunpack.c.h.b16 %v277
    %v936 = vunpack.c.l.b16 %v278
    %v937 = vunpack.c.h.b16 %v278
    %v938 = vunpack.c.l.b16 %v279
    %v939 = vunpack.c.h.b16 %v279
    %v940 = vunpack.c.l.b16 %v280
    %v941 = vunpack.c.h.b16 %v280
    %v942 = vunpack.c.l.b16 %v281
    %v943 = vunpack.c.h.b16 %v281
    %v944 = vunpack.c.l.b16 %v282
    %v945 = vunpack.c.h.b16 %v282
    %v946 = vunpack.c.l.b16 %v283
    %v947 = vunpack.c.h.b16 %v283
    %v948 = vunpack.c.l.b16 %v284
    %v949 = vunpack.c.h.b16 %v284
    %v950 = vunpack.c.l.b16 %v285
    %v951 = vunpack.c.h.b16 %v285
    %v952 = vunpack.c.l.b16 %v286
    %v953 = vunpack.c.h.b16 %v286
    %v954 = vunpack.c.l.b16 %v287
    %v955 = vunpack.c.h.b16 %v287
    %v956 = vunpack.c.l.b16 %v288
    %v957 = vunpack.c.h.b16 %v288
    %v958 = vunpack.c.l.b16 %v289
    %v959 = vunpack.c.h.b16 %v289
    %v960 = vunpack.c.l.b16 %v290
    %v961 = vunpack.c.h.b16 %v290
    %v962 = vunpack.c.l.b16 %v291
    %v963 = vunpack.c.h.b16 %v291
    %v964 = vunpack.c.l.b16 %v292
    %v965 = vunpack.c.h.b16 %v292
    %v966 = vunpack.c.l.b16 %v293
    %v967 = vunpack.c.h.b16 %v293
    %v968 = vunpack.c.l.b16 %v294
    %v969 = vunpack.c.h.b16 %v294
    %v970 = vunpack.c.l.b16 %v295
    %v971 = vunpack.c.h.b16 %v295
    %v972 = vunpack.c.l.b16 %v296
    %v973 = vunpack.c.h.b16 %v296
    %v974 = vunpack.c.l.b16 %v297
    %v975 = vunpack.c.h.b16 %v297
    %v976 = vunpack.c.l.b16 %v298
    %v977 = vunpack.c.h.b16 %v298
    %v978 = vunpack.c.l.b16 %v299
    %v979 = vunpack.c.h.b16 %v299
    %v980 = vunpack.c.l.b16 %v300
    %v981 = vunpack.c.h.b16 %v300
    %v982 = vunpack.c.l.b16 %v301
    %v983 = vunpack.c.h.b16 %v301
    %v984 = vunpack.c.l.b16 %v302
    %v985 = vunpack.c.h.b16 %v302
    %v986 = vunpack.c.l.b16 %v303
    %v987 = vunpack.c.h.b16 %v303
    %v988 = vunpack.c.l.b16 %v304
    %v989 = vunpack.c.h.b16 %v304
    %v990 = vunpack.c.l.b16 %v305
    %v991 = vunpack.c.h.b16 %v305
    %v992 = vunpack.c.l.b16 %v306
    %v993 = vunpack.c.h.b16 %v306
    %v994 = vunpack.c.l.b16 %v307
    %v995 = vunpack.c.h.b16 %v307
    %v996 = vunpack.c.l.b16 %v308
    %v997 = vunpack.c.h.b16 %v308
    %v998 = vunpack.c.l.b16 %v309
    %v999 = vunpack.c.h.b16 %v309
    %v1000 = vunpack.c.l.b16 %v310
    %v1001 = vunpack.c.h.b16 %v310
    %v1002 = vunpack.c.l.b16 %v311
    %v1003 = vunpack.c.h.b16 %v311
    %v1004 = vunpack.c.l.b16 %v312
    %v1005 = vunpack.c.h.b16 %v312
    %v1006 = vunpack.c.l.b16 %v313
    %v1007 = vunpack.c.h.b16 %v313
    %v1008 = vunpack.c.l.b16 %v314
    %v1009 = vunpack.c.h.b16 %v314
    %v1010 = vunpack.c.l.b16 %v315
    %v1011 = vunpack.c.h.b16 %v315
    %v1012 = vunpack.c.l.b16 %v316
    %v1013 = vunpack.c.h.b16 %v316
    %v1014 = vunpack.c.l.b16 %v317
    %v1015 = vunpack.c.h.b16 %v317
    %v1016 = vunpack.c.l.b16 %v318
    %v1017 = vunpack.c.h.b16 %v318
    %v1018 = vunpack.c.l.b16 %v319
    %v1019 = vunpack.c.h.b16 %v319
    %v1020 = vunpack.c.l.b16 %v320
    %v1021 = vunpack.c.h.b16 %v320
    %v1022 = vunpack.c.l.b16 %v321
    %v1023 = vunpack.c.h.b16 %v321
    %v1024 = vunpack.c.l.b16 %v322
    %v1025 = vunpack.c.h.b16 %v322
    %v1026 = vunpack.c.l.b16 %v323
    %v1027 = vunpack.c.h.b16 %v323
    %v1028 = vunpack.c.l.b16 %v324
    %v1029 = vunpack.c.h.b16 %v324
    %v1030 = vunpack.c.l.b16 %v325
    %v1031 = vunpack.c.h.b16 %v325
    %v1032 = vunpack.c.l.b16 %v326
    %v1033 = vunpack.c.h.b16 %v326
    %v1034 = vunpack.c.l.b16 %v327
    %v1035 = vunpack.c.h.b16 %v327
    %v1036 = vunpack.c.l.b16 %v328
    %v1037 = vunpack.c.h.b16 %v328
    %v1038 = vunpack.c.l.b16 %v329
    %v1039 = vunpack.c.h.b16 %v329
    %v1040 = vunpack.c.l.b16 %v330
    %v1041 = vunpack.c.h.b16 %v330
    %v1042 = vunpack.c.l.b16 %v331
    %v1043 = vunpack.c.h.b16 %v331
    %v1044 = vunpack.c.l.b16 %v332
    %v1045 = vunpack.c.h.b16 %v332
    %v1046 = vunpack.c.l.b16 %v333
    %v1047 = vunpack.c.h.b16 %v333
    %v1048 = vunpack.c.l.b16 %v334
    %v1049 = vunpack.c.h.b16 %v334
    %v1050 = vunpack.c.l.b16 %v335
    %v1051 = vunpack.c.h.b16 %v335
    %v1052 = vunpack.c.l.b16 %v336
    %v1053 = vunpack.c.h.b16 %v336
    %v1054 = vunpack.c.l.b16 %v337
    %v1055 = vunpack.c.h.b16 %v337
    %v1056 = vunpack.c.l.b16 %v338
    %v1057 = vunpack.c.h.b16 %v338
    %v1058 = vunpack.c.l.b16 %v339
    %v1059 = vunpack.c.h.b16 %v339
    %v1060 = vunpack.c.l.b16 %v340
    %v1061 = vunpack.c.h.b16 %v340
    %v1062 = vunpack.c.l.b16 %v341
    %v1063 = vunpack.c.h.b16 %v341
    %v1064 = vunpack.c.l.b16 %v342
    %v1065 = vunpack.c.h.b16 %v342
    %v1066 = vunpack.c.l.b16 %v343
    %v1067 = vunpack.c.h.b16 %v343
    %v1068 = vunpack.c.l.b16 %v344
    %v1069 = vunpack.c.h.b16 %v344
    %v1070 = vunpack.c.l.b16 %v345
    %v1071 = vunpack.c.h.b16 %v345
    %v1072 = vunpack.c.l.b16 %v346
    %v1073 = vunpack.c.h.b16 %v346
    %v1074 = vunpack.c.l.b16 %v347
    %v1075 = vunpack.c.h.b16 %v347
    %v1076 = vunpack.c.l.b16 %v348
    %v1077 = vunpack.c.h.b16 %v348
    %v1078 = vunpack.c.l.b16 %v349
    %v1079 = vunpack.c.h.b16 %v349
    %v1080 = vunpack.c.l.b16 %v350
    %v1081 = vunpack.c.h.b16 %v350
    %v1082 = vunpack.c.l.b16 %v351
    %v1083 = vunpack.c.h.b16 %v351
    %v1084 = vunpack.c.l.b16 %v352
    %v1085 = vunpack.c.h.b16 %v352
    %v1086 = vunpack.c.l.b16 %v353
    %v1087 = vunpack.c.h.b16 %v353
    %v1088 = vunpack.c.l.b16 %v354
    %v1089 = vunpack.c.h.b16 %v354
    %v1090 = vunpack.c.l.b16 %v355
    %v1091 = vunpack.c.h.b16 %v355
    %v1092 = vunpack.c.l.b16 %v356
    %v1093 = vunpack.c.h.b16 %v356
    %v1094 = vunpack.c.l.b16 %v357
    %v1095 = vunpack.c.h.b16 %v357
    %v1096 = vunpack.c.l.b16 %v358
    %v1097 = vunpack.c.h.b16 %v358
    %v1098 = vunpack.c.l.b16 %v359
    %v1099 = vunpack.c.h.b16 %v359
    %v1100 = vunpack.c.l.b16 %v360
    %v1101 = vunpack.c.h.b16 %v360
    %v1102 = vunpack.c.l.b16 %v361
    %v1103 = vunpack.c.h.b16 %v361
    %v1104 = vunpack.c.l.b16 %v362
    %v1105 = vunpack.c.h.b16 %v362
    %v1106 = vunpack.c.l.b16 %v363
    %v1107 = vunpack.c.h.b16 %v363
    %v1108 = vunpack.c.l.b16 %v364
    %v1109 = vunpack.c.h.b16 %v364
    %v1110 = vunpack.c.l.b16 %v365
    %v1111 = vunpack.c.h.b16 %v365
    %v1112 = vunpack.c.l.b16 %v366
    %v1113 = vunpack.c.h.b16 %v366
    %v1114 = vunpack.c.l.b16 %v367
    %v1115 = vunpack.c.h.b16 %v367
    %v1116 = vunpack.c.l.b16 %v368
    %v1117 = vunpack.c.h.b16 %v368
    %v1118 = vunpack.c.l.b16 %v369
    %v1119 = vunpack.c.h.b16 %v369
    %v1120 = vunpack.c.l.b16 %v370
    %v1121 = vunpack.c.h.b16 %v370
    %v1122 = vunpack.c.l.b16 %v371
    %v1123 = vunpack.c.h.b16 %v371
    %v1124 = vunpack.c.l.b16 %v372
    %v1125 = vunpack.c.h.b16 %v372
    %v1126 = vunpack.c.l.b16 %v373
    %v1127 = vunpack.c.h.b16 %v373
    %v1128 = vunpack.c.l.b16 %v374
    %v1129 = vunpack.c.h.b16 %v374
    %v1130 = vunpack.c.l.b16 %v375
    %v1131 = vunpack.c.h.b16 %v375
    %v1132 = vunpack.c.l.b16 %v376
    %v1133 = vunpack.c.h.b16 %v376
    %v1134 = vunpack.c.l.b16 %v377
    %v1135 = vunpack.c.h.b16 %v377
    %v1136 = vunpack.c.l.b16 %v378
    %v1137 = vunpack.c.h.b16 %v378
    %v1138 = vunpack.c.l.b16 %v379
    %v1139 = vunpack.c.h.b16 %v379
    %v1140 = vunpack.c.l.b16 %v380
    %v1141 = vunpack.c.h.b16 %v380
    %v1142 = vunpack.c.l.b16 %v381
    %v1143 = vunpack.c.h.b16 %v381
    %v1144 = vunpack.c.l.b16 %v382
    %v1145 = vunpack.c.h.b16 %v382
    %v1146 = vunpack.c.l.b16 %v383
    %v1147 = vunpack.c.h.b16 %v383
    %v1148 = vunpack.c.l.b16 %v384
    %v1149 = vunpack.c.h.b16 %v384
    %v1150 = vunpack.c.l.b16 %v385
    %v1151 = vunpack.c.h.b16 %v385
    %v1152 = vunpack.c.l.b16 %v386
    %v1153 = vunpack.c.h.b16 %v386
    %v1154 = vunpack.c.l.b16 %v387
    %v1155 = vunpack.c.h.b16 %v387
    %v1156 = vunpack.c.l.b16 %v388
    %v1157 = vunpack.c.h.b16 %v388
    %v1158 = vunpack.c.l.b16 %v389
    %v1159 = vunpack.c.h.b16 %v389
    %v1160 = vunpack.c.l.b16 %v390
    %v1161 = vunpack.c.h.b16 %v390
    %v1162 = vunpack.c.l.b16 %v391
    %v1163 = vunpack.c.h.b16 %v391
    %v1164 = vunpack.c.l.b16 %v392
    %v1165 = vunpack.c.h.b16 %v392
    %v1166 = vunpack.c.l.b16 %v393
    %v1167 = vunpack.c.h.b16 %v393
    %v1168 = vunpack.c.l.b16 %v394
    %v1169 = vunpack.c.h.b16 %v394
    %v1170 = vunpack.c.l.b16 %v395
    %v1171 = vunpack.c.h.b16 %v395
    %v1172 = vunpack.c.l.b16 %v396
    %v1173 = vunpack.c.h.b16 %v396
    %v1174 = vunpack.c.l.b16 %v397
    %v1175 = vunpack.c.h.b16 %v397
    %v1176 = vunpack.c.l.b16 %v398
    %v1177 = vunpack.c.h.b16 %v398
    %v1178 = vunpack.c.l.b16 %v399
    %v1179 = vunpack.c.h.b16 %v399
    %v1180 = vunpack.c.l.b16 %v400
    %v1181 = vunpack.c.h.b16 %v400
    %v1182 = vunpack.c.l.b16 %v401
    %v1183 = vunpack.c.h.b16 %v401
    %v1184 = vunpack.c.l.b16 %v402
    %v1185 = vunpack.c.h.b16 %v402
    %v1186 = vunpack.c.l.b16 %v403
    %v1187 = vunpack.c.h.b16 %v403
    %v1188 = vunpack.c.l.b16 %v404
    %v1189 = vunpack.c.h.b16 %v404
    %v1190 = vunpack.c.l.b16 %v405
    %v1191 = vunpack.c.h.b16 %v405
    %v1192 = vunpack.c.l.b16 %v406
    %v1193 = vunpack.c.h.b16 %v406
    %v1194 = vunpack.c.l.b16 %v407
    %v1195 = vunpack.c.h.b16 %v407
    %v1196 = vunpack.c.l.b16 %v408
    %v1197 = vunpack.c.h.b16 %v408
    %v1198 = vunpack.c.l.b16 %v409
    %v1199 = vunpack.c.h.b16 %v409
    %v1200 = vunpack.c.l.b16 %v410
    %v1201 = vunpack.c.h.b16 %v410
    %v1202 = vunpack.c.l.b16 %v411
    %v1203 = vunpack.c.h.b16 %v411
    %v1204 = vunpack.c.l.b16 %v412
    %v1205 = vunpack.c.h.b16 %v412
    %v1206 = vunpack.c.l.b16 %v413
    %v1207 = vunpack.c.h.b16 %v413
    %v1208 = vunpack.c.l.b16 %v414
    %v1209 = vunpack.c.h.b16 %v414
    %v1210 = vunpack.c.l.b16 %v415
    %v1211 = vunpack.c.h.b16 %v415
    %v1212 = vunpack.c.l.b16 %v416
    %v1213 = vunpack.c.h.b16 %v416
    %v1214 = vunpack.c.l.b16 %v417
    %v1215 = vunpack.c.h.b16 %v417
    %v1216 = vunpack.c.l.b16 %v418
    %v1217 = vunpack.c.h.b16 %v418
    %v1218 = vunpack.c.l.b16 %v419
    %v1219 = vunpack.c.h.b16 %v419
    %v1220 = vunpack.c.l.b16 %v420
    %v1221 = vunpack.c.h.b16 %v420
    %v1222 = vunpack.c.l.b16 %v421
    %v1223 = vunpack.c.h.b16 %v421
    %v1224 = vunpack.c.l.b16 %v422
    %v1225 = vunpack.c.h.b16 %v422
    %v1226 = vunpack.c.l.b16 %v423
    %v1227 = vunpack.c.h.b16 %v423
    %v1228 = vunpack.c.l.b16 %v424
    %v1229 = vunpack.c.h.b16 %v424
    %v1230 = vunpack.c.l.b16 %v425
    %v1231 = vunpack.c.h.b16 %v425
    %v1232 = vunpack.c.l.b16 %v426
    %v1233 = vunpack.c.h.b16 %v426
    %v1234 = vunpack.c.l.b16 %v427
    %v1235 = vunpack.c.h.b16 %v427
    %v1236 = vunpack.c.l.b16 %v428
    %v1237 = vunpack.c.h.b16 %v428
    %v1238 = vunpack.c.l.b16 %v429
    %v1239 = vunpack.c.h.b16 %v429
    %v1240 = vunpack.c.l.b16 %v430
    %v1241 = vunpack.c.h.b16 %v430
    %v1242 = vunpack.c.l.b16 %v431
    %v1243 = vunpack.c.h.b16 %v431
    %v1244 = vunpack.c.l.b16 %v432
    %v1245 = vunpack.c.h.b16 %v432
    %v1246 = vunpack.c.l.b16 %v433
    %v1247 = vunpack.c.h.b16 %v433
    %v1248 = vunpack.c.l.b16 %v434
    %v1249 = vunpack.c.h.b16 %v434
    %v1250 = vunpack.c.l.b16 %v435
    %v1251 = vunpack.c.h.b16 %v435
    %v1252 = vunpack.c.l.b16 %v436
    %v1253 = vunpack.c.h.b16 %v436
    %v1254 = vunpack.c.l.b16 %v437
    %v1255 = vunpack.c.h.b16 %v437
    %v1256 = vunpack.c.l.b16 %v438
    %v1257 = vunpack.c.h.b16 %v438
    %v1258 = vunpack.c.l.b16 %v439
    %v1259 = vunpack.c.h.b16 %v439
    %v1260 = vunpack.c.l.b16 %v440
    %v1261 = vunpack.c.h.b16 %v440
    %v1262 = vunpack.c.l.b16 %v441
    %v1263 = vunpack.c.h.b16 %v441
    %v1264 = vunpack.c.l.b16 %v442
    %v1265 = vunpack.c.h.b16 %v442
    %v1266 = vunpack.c.l.b16 %v443
    %v1267 = vunpack.c.h.b16 %v443
    %v1268 = vunpack.c.l.b16 %v444
    %v1269 = vunpack.c.h.b16 %v444
    %v1270 = vunpack.c.l.b16 %v445
    %v1271 = vunpack.c.h.b16 %v445
    %v1272 = vunpack.c.l.b16 %v446
    %v1273 = vunpack.c.h.b16 %v446
    %v1274 = vunpack.c.l.b16 %v447
    %v1275 = vunpack.c.h.b16 %v447
    %v1276 = vunpack.c.l.b16 %v448
    %v1277 = vunpack.c.h.b16 %v448
    %v1278 = vunpack.c.l.b16 %v449
    %v1279 = vunpack.c.h.b16 %v449
    %v1280 = vunpack.c.l.b16 %v450
    %v1281 = vunpack.c.h.b16 %v450
    %v1282 = vunpack.c.l.b16 %v451
    %v1283 = vunpack.c.h.b16 %v451
    %v1284 = vunpack.c.l.b16 %v452
    %v1285 = vunpack.c.h.b16 %v452
    %v1286 = vunpack.c.l.b16 %v453
    %v1287 = vunpack.c.h.b16 %v453
    %v1288 = vunpack.c.l.b16 %v454
    %v1289 = vunpack.c.h.b16 %v454
    %v1290 = vunpack.c.l.b16 %v455
    %v1291 = vunpack.c.h.b16 %v455
    %v1292 = vunpack.c.l.b16 %v456
    %v1293 = vunpack.c.h.b16 %v456
    %v1294 = vunpack.c.l.b16 %v457
    %v1295 = vunpack.c.h.b16 %v457
    %v1296 = vunpack.c.l.b16 %v458
    %v1297 = vunpack.c.h.b16 %v458
    %v1298 = vpack.c.b16 %v794, %v786
    %v1299 = vpack.c.b16 %v795, %v787
    %v1300 = vpack.c.b16 %v796, %v788
    %v1301 = vpack.c.b16 %v797, %v789
    %v1302 = vpack.c.b16 %v798, %v790
    %v1303 = vpack.c.b16 %v799, %v791
    %v1304 = vpack.c.b16 %v800, %v792
    %v1305 = vpack.c.b16 %v801, %v793
    %v1306 = vpack.c.b16 %v810, %v802
    %v1307 = vpack.c.b16 %v811, %v803
    %v1308 = vpack.c.b16 %v812, %v804
    %v1309 = vpack.c.b16 %v813, %v805
    %v1310 = vpack.c.b16 %v814, %v806
    %v1311 = vpack.c.b16 %v815, %v807
    %v1312 = vpack.c.b16 %v816, %v808
    %v1313 = vpack.c.b16 %v817, %v809
    %v1314 = vpack.c.b16 %v826, %v818
    %v1315 = vpack.c.b16 %v827, %v819
    %v1316 = vpack.c.b16 %v828, %v820
    %v1317 = vpack.c.b16 %v829, %v821
    %v1318 = vpack.c.b16 %v830, %v822
    %v1319 = vpack.c.b16 %v831, %v823
    %v1320 = vpack.c.b16 %v832, %v824
    %v1321 = vpack.c.b16 %v833, %v825
    %v1322 = vpack.c.b16 %v842, %v834
    %v1323 = vpack.c.b16 %v843, %v835
    %v1324 = vpack.c.b16 %v844, %v836
    %v1325 = vpack.c.b16 %v845, %v837
    %v1326 = vpack.c.b16 %v846, %v838
    %v1327 = vpack.c.b16 %v847, %v839
    %v1328 = vpack.c.b16 %v848, %v840
    %v1329 = vpack.c.b16 %v849, %v841
    %v1330 = vpack.c.b16 %v858, %v850
    %v1331 = vpack.c.b16 %v859, %v851
    %v1332 = vpack.c.b16 %v860, %v852
    %v1333 = vpack.c.b16 %v861, %v853
    %v1334 = vpack.c.b16 %v862, %v854
    %v1335 = vpack.c.b16 %v863, %v855
    %v1336 = vpack.c.b16 %v864, %v856
    %v1337 = vpack.c.b16 %v865, %v857
    %v1338 = vpack.c.b16 %v874, %v866
    %v1339 = vpack.c.b16 %v875, %v867
    %v1340 = vpack.c.b16 %v876, %v868
    %v1341 = vpack.c.b16 %v877, %v869
    %v1342 = vpack.c.b16 %v878, %v870
    %v1343 = vpack.c.b16 %v879, %v871
    %v1344 = vpack.c.b16 %v880, %v872
    %v1345 = vpack.c.b16 %v881, %v873
    %v1346 = vpack.c.b16 %v890, %v882
    %v1347 = vpack.c.b16 %v891, %v883
    %v1348 = vpack.c.b16 %v892, %v884
    %v1349 = vpack.c.b16 %v893, %v885
    %v1350 = vpack.c.b16 %v894, %v886
    %v1351 = vpack.c.b16 %v895, %v887
    %v1352 = vpack.c.b16 %v896, %v888
    %v1353 = vpack.c.b16 %v897, %v889
    %v1354 = vpack.c.b16 %v906, %v898
    %v1355 = vpack.c.b16 %v907, %v899
    %v1356 = vpack.c.b16 %v908, %v900
    %v1357 = vpack.c.b16 %v909, %v901
    %v1358 = vpack.c.b16 %v910, %v902
    %v1359 = vpack.c.b16 %v911, %v903
    %v1360 = vpack.c.b16 %v912, %v904
    %v1361 = vpack.c.b16 %v913, %v905
    %v1362 = vpack.c.b16 %v922, %v914
    %v1363 = vpack.c.b16 %v923, %v915
    %v1364 = vpack.c.b16 %v924, %v916
    %v1365 = vpack.c.b16 %v925, %v917
    %v1366 = vpack.c.b16 %v926, %v918
    %v1367 = vpack.c.b16 %v927, %v919
    %v1368 = vpack.c.b16 %v928, %v920
    %v1369 = vpack.c.b16 %v929, %v921
    %v1370 = vpack.c.b16 %v938, %v930
    %v1371 = vpack.c.b16 %v939, %v931
    %v1372 = vpack.c.b16 %v940, %v932
    %v1373 = vpack.c.b16 %v941, %v933
    %v1374 = vpack.c.b16 %v942, %v934
    %v1375 = vpack.c.b16 %v943, %v935
    %v1376 = vpack.c.b16 %v944, %v936
    %v1377 = vpack.c.b16 %v945, %v937
    %v1378 = vpack.c.b16 %v954, %v946
    %v1379 = vpack.c.b16 %v955, %v947
    %v1380 = vpack.c.b16 %v956, %v948
    %v1381 = vpack.c.b16 %v957, %v949
    %v1382 = vpack.c.b16 %v958, %v950
    %v1383 = vpack.c.b16 %v959, %v951
    %v1384 = vpack.c.b16 %v960, %v952
    %v1385 = vpack.c.b16 %v961, %v953
    %v1386 = vpack.c.b16 %v970, %v962
    %v1387 = vpack.c.b16 %v971, %v963
    %v1388 = vpack.c.b16 %v972, %v964
    %v1389 = vpack.c.b16 %v973, %v965
    %v1390 = vpack.c.b16 %v974, %v966
    %v1391 = vpack.c.b16 %v975, %v967
    %v1392 = vpack.c.b16 %v976, %v968
    %v1393 = vpack.c.b16 %v977, %v969
    %v1394 = vpack.c.b16 %v986, %v978
    %v1395 = vpack.c.b16 %v987, %v979
    %v1396 = vpack.c.b16 %v988, %v980
    %v1397 = vpack.c.b16 %v989, %v981
    %v1398 = vpack.c.b16 %v990, %v982
    %v1399 = vpack.c.b16 %v991, %v983
    %v1400 = vpack.c.b16 %v992, %v984
    %v1401 = vpack.c.b16 %v993, %v985
    %v1402 = vpack.c.b16 %v1002, %v994
    %v1403 = vpack.c.b16 %v1003, %v995
    %v1404 = vpack.c.b16 %v1004, %v996
    %v1405 = vpack.c.b16 %v1005, %v997
    %v1406 = vpack.c.b16 %v1006, %v998
    %v1407 = vpack.c.b16 %v1007, %v999
    %v1408 = vpack.c.b16 %v1008, %v1000
    %v1409 = vpack.c.b16 %v1009, %v1001
    %v1410 = vpack.c.b16 %v1018, %v1010
    %v1411 = vpack.c.b16 %v1019, %v1011
    %v1412 = vpack.c.b16 %v1020, %v1012
    %v1413 = vpack.c.b16 %v1021, %v1013
    %v1414 = vpack.c.b16 %v1022, %v1014
    %v1415 = vpack.c.b16 %v1023, %v1015
    %v1416 = vpack.c.b16 %v1024, %v1016
    %v1417 = vpack.c.b16 %v1025, %v1017
    %v1418 = vpack.c.b16 %v1034, %v1026
    %v1419 = vpack.c.b16 %v1035, %v1027
    %v1420 = vpack.c.b16 %v1036, %v1028
    %v1421 = vpack.c.b16 %v1037, %v1029
    %v1422 = vpack.c.b16 %v1038, %v1030
    %v1423 = vpack.c.b16 %v1039, %v1031
    %v1424 = vpack.c.b16 %v1040, %v1032
    %v1425 = vpack.c.b16 %v1041, %v1033
    %v1426 = vpack.c.b16 %v1050, %v1042
    %v1427 = vpack.c.b16 %v1051, %v1043
    %v1428 = vpack.c.b16 %v1052, %v1044
    %v1429 = vpack.c.b16 %v1053, %v1045
    %v1430 = vpack.c.b16 %v1054, %v1046
    %v1431 = vpack.c.b16 %v1055, %v1047
    %v1432 = vpack.c.b16 %v1056, %v1048
    %v1433 = vpack.c.b16 %v1057, %v1049
    %v1434 = vpack.c.b16 %v1066, %v1058
    %v1435 = vpack.c.b16 %v1067, %v1059
    %v1436 = vpack.c.b16 %v1068, %v1060
    %v1437 = vpack.c.b16 %v1069, %v1061
    %v1438 = vpack.c.b16 %v1070, %v1062
    %v1439 = vpack.c.b16 %v1071, %v1063
    %v1440 = vpack.c.b16 %v1072, %v1064
    %v1441 = vpack.c.b16 %v1073, %v1065
    %v1442 = vpack.c.b16 %v1082, %v1074
    %v1443 = vpack.c.b16 %v1083, %v1075
    %v1444 = vpack.c.b16 %v1084, %v1076
    %v1445 = vpack.c.b16 %v1085, %v1077
    %v1446 = vpack.c.b16 %v1086, %v1078
    %v1447 = vpack.c.b16 %v1087, %v1079
    %v1448 = vpack.c.b16 %v1088, %v1080
    %v1449 = vpack.c.b16 %v1089, %v1081
    %v1450 = vpack.c.b16 %v1098, %v1090
    %v1451 = vpack.c.b16 %v1099, %v1091
    %v1452 = vpack.c.b16 %v1100, %v1092
    %v1453 = vpack.c.b16 %v1101, %v1093
    %v1454 = vpack.c.b16 %v1102, %v1094
    %v1455 = vpack.c.b16 %v1103, %v1095
    %v1456 = vpack.c.b16 %v1104, %v1096
    %v1457 = vpack.c.b16 %v1105, %v1097
    %v1458 = vpack.c.b16 %v1114, %v1106
    %v1459 = vpack.c.b16 %v1115, %v1107
    %v1460 = vpack.c.b16 %v1116, %v1108
    %v1461 = vpack.c.b16 %v1117, %v1109
    %v1462 = vpack.c.b16 %v1118, %v1110
    %v1463 = vpack.c.b16 %v1119, %v1111
    %v1464 = vpack.c.b16 %v1120, %v1112
    %v1465 = vpack.c.b16 %v1121, %v1113
    %v1466 = vpack.c.b16 %v1130, %v1122
    %v1467 = vpack.c.b16 %v1131, %v1123
    %v1468 = vpack.c.b16 %v1132, %v1124
    %v1469 = vpack.c.b16 %v1133, %v1125
    %v1470 = vpack.c.b16 %v1134, %v1126
    %v1471 = vpack.c.b16 %v1135, %v1127
    %v1472 = vpack.c.b16 %v1136, %v1128
    %v1473 = vpack.c.b16 %v1137, %v1129
    %v1474 = vpack.c.b16 %v1146, %v1138
    %v1475 = vpack.c.b16 %v1147, %v1139
    %v1476 = vpack.c.b16 %v1148, %v1140
    %v1477 = vpack.c.b16 %v1149, %v1141
    %v1478 = vpack.c.b16 %v1150, %v1142
    %v1479 = vpack.c.b16 %v1151, %v1143
    %v1480 = vpack.c.b16 %v1152, %v1144
    %v1481 = vpack.c.b16 %v1153, %v1145
    %v1482 = vpack.c.b16 %v1162, %v1154
    %v1483 = vpack.c.b16 %v1163, %v1155
    %v1484 = vpack.c.b16 %v1164, %v1156
    %v1485 = vpack.c.b16 %v1165, %v1157
    %v1486 = vpack.c.b16 %v1166, %v1158
    %v1487 = vpack.c.b16 %v1167, %v1159
    %v1488 = vpack.c.b16 %v1168, %v1160
    %v1489 = vpack.c.b16 %v1169, %v1161
    %v1490 = vpack.c.b16 %v1178, %v1170
    %v1491 = vpack.c.b16 %v1179, %v1171
    %v1492 = vpack.c.b16 %v1180, %v1172
    %v1493 = vpack.c.b16 %v1181, %v1173
    %v1494 = vpack.c.b16 %v1182, %v1174
    %v1495 = vpack.c.b16 %v1183, %v1175
    %v1496 = vpack.c.b16 %v1184, %v1176
    %v1497 = vpack.c.b16 %v1185, %v1177
    %v1498 = vpack.c.b16 %v1194, %v1186
    %v1499 = vpack.c.b16 %v1195, %v1187
    %v1500 = vpack.c.b16 %v1196, %v1188
    %v1501 = vpack.c.b16 %v1197, %v1189
    %v1502 = vpack.c.b16 %v1198, %v1190
    %v1503 = vpack.c.b16 %v1199, %v1191
    %v1504 = vpack.c.b16 %v1200, %v1192
    %v1505 = vpack.c.b16 %v1201, %v1193
    %v1506 = vpack.c.b16 %v1210, %v1202
    %v1507 = vpack.c.b16 %v1211, %v1203
    %v1508 = vpack.c.b16 %v1212, %v1204
    %v1509 = vpack.c.b16 %v1213, %v1205
    %v1510 = vpack.c.b16 %v1214, %v1206
    %v1511 = vpack.c.b16 %v1215, %v1207
    %v1512 = vpack.c.b16 %v1216, %v1208
    %v1513 = vpack.c.b16 %v1217, %v1209
    %v1514 = vpack.c.b16 %v1226, %v1218
    %v1515 = vpack.c.b16 %v1227, %v1219
    %v1516 = vpack.c.b16 %v1228, %v1220
    %v1517 = vpack.c.b16 %v1229, %v1221
    %v1518 = vpack.c.b16 %v1230, %v1222
    %v1519 = vpack.c.b16 %v1231, %v1223
    %v1520 = vpack.c.b16 %v1232, %v1224
    %v1521 = vpack.c.b16 %v1233, %v1225
    %v1522 = vpack.c.b16 %v1242, %v1234
    %v1523 = vpack.c.b16 %v1243, %v1235
    %v1524 = vpack.c.b16 %v1244, %v1236
    %v1525 = vpack.c.b16 %v1245, %v1237
    %v1526 = vpack.c.b16 %v1246, %v1238
    %v1527 = vpack.c.b16 %v1247, %v1239
    %v1528 = vpack.c.b16 %v1248, %v1240
    %v1529 = vpack.c.b16 %v1249, %v1241
    %v1530 = vpack.c.b16 %v1258, %v1250
    %v1531 = vpack.c.b16 %v1259, %v1251
    %v1532 = vpack.c.b16 %v1260, %v1252
    %v1533 = vpack.c.b16 %v1261, %v1253
    %v1534 = vpack.c.b16 %v1262, %v1254
    %v1535 = vpack.c.b16 %v1263, %v1255
    %v1536 = vpack.c.b16 %v1264, %v1256
    %v1537 = vpack.c.b16 %v1265, %v1257
    %v1538 = vpack.c.b16 %v1274, %v1266
    %v1539 = vpack.c.b16 %v1275, %v1267
    %v1540 = vpack.c.b16 %v1276, %v1268
    %v1541 = vpack.c.b16 %v1277, %v1269
    %v1542 = vpack.c.b16 %v1278, %v1270
    %v1543 = vpack.c.b16 %v1279, %v1271
    %v1544 = vpack.c.b16 %v1280, %v1272
    %v1545 = vpack.c.b16 %v1281, %v1273
    %v1546 = vpack.c.b16 %v1290, %v1282
    %v1547 = vpack.c.b16 %v1291, %v1283
    %v1548 = vpack.c.b16 %v1292, %v1284
    %v1549 = vpack.c.b16 %v1293, %v1285
    %v1550 = vpack.c.b16 %v1294, %v1286
    %v1551 = vpack.c.b16 %v1295, %v1287
    %v1552 = vpack.c.b16 %v1296, %v1288
    %v1553 = vpack.c.b16 %v1297, %v1289
    %1810 = vmatprep.subr.bf16.mxu0 %v1355
    %1811 = vmatpush1.bf16.msra.mxu0 %v1354
    %1812 = vmatprep.subr.bf16.mxu0 %v1347
    %1813 = vmatpush1.bf16.msra.mxu0 %v1346
    %1814 = vmatprep.subr.bf16.mxu0 %v1339
    %1815 = vmatpush1.bf16.msra.mxu0 %v1338
    %1816 = vmatprep.subr.bf16.mxu0 %v1331
    %1817 = vmatpush1.bf16.msra.mxu0 %v1330
    %1818 = vmatprep.subr.bf16.mxu0 %v1323
    %1819 = vmatpush1.bf16.msra.mxu0 %v1322
    %1820 = vmatprep.subr.bf16.mxu0 %v1315
    %1821 = vmatpush1.bf16.msra.mxu0 %v1314
    %1822 = vmatprep.subr.bf16.mxu0 %v1307
    %1823 = vmatpush1.bf16.msra.mxu0 %v1306
    %1824 = vmatprep.subr.bf16.mxu0 %v1299
    %1825 = vmatpush1.bf16.msra.mxu0 %v1298
    %1826 = vmatprep.subr.bf16.mxu0 %v1419
    %1827 = vmatpush2.bf16.msra.mxu0 %v1418
    %1828 = vmatprep.subr.bf16.mxu0 %v1411
    %1829 = vmatpush2.bf16.msra.mxu0 %v1410
    %1830 = vmatprep.subr.bf16.mxu0 %v1403
    %1831 = vmatpush2.bf16.msra.mxu0 %v1402
    %1832 = vmatprep.subr.bf16.mxu0 %v1395
    %1833 = vmatpush2.bf16.msra.mxu0 %v1394
    %1834 = vmatprep.subr.bf16.mxu0 %v1387
    %1835 = vmatpush2.bf16.msra.mxu0 %v1386
    %1836 = vmatprep.subr.bf16.mxu0 %v1379
    %1837 = vmatpush2.bf16.msra.mxu0 %v1378
    %1838 = vmatprep.subr.bf16.mxu0 %v1371
    %1839 = vmatpush2.bf16.msra.mxu0 %v1370
    %1840 = vmatprep.subr.bf16.mxu0 %v1363
    %1841 = vmatpush2.bf16.msra.mxu0 %v1362
    %1842 = vmatprep.mubr.bf16.mxu0 %v523
    %1843 = vmatmul.mubr.bf16.gmra.mxu0 %v522
    %v1844 = vpop.f32.mrf.mxu0
    %v1845 = vadd.f32 %v464, %v1844
    %v1846 = vpop.f32.mrf.mxu0
    %v1847 = vadd.f32 %v468, %v1846
    %v1848 = vpop.f32.mrf.mxu0
    %v1849 = vpop.f32.mrf.mxu0
    %1850 = vdwg.mxu0
    %1851 = vmatprep.subr.bf16.mxu0 %v1483
    %1852 = vmatpush1.bf16.msra.mxu0 %v1482
    %1853 = vmatprep.subr.bf16.mxu0 %v1475
    %1854 = vmatpush1.bf16.msra.mxu0 %v1474
    %1855 = vmatprep.subr.bf16.mxu0 %v1467
    %1856 = vmatpush1.bf16.msra.mxu0 %v1466
    %1857 = vmatprep.subr.bf16.mxu0 %v1459
    %1858 = vmatpush1.bf16.msra.mxu0 %v1458
    %1859 = vmatprep.subr.bf16.mxu0 %v1451
    %1860 = vmatpush1.bf16.msra.mxu0 %v1450
    %1861 = vmatprep.subr.bf16.mxu0 %v1443
    %1862 = vmatpush1.bf16.msra.mxu0 %v1442
    %1863 = vmatprep.subr.bf16.mxu0 %v1435
    %1864 = vmatpush1.bf16.msra.mxu0 %v1434
    %1865 = vmatprep.subr.bf16.mxu0 %v1427
    %1866 = vmatpush1.bf16.msra.mxu0 %v1426
    %1867 = vmatprep.subr.bf16.mxu0 %v1547
    %1868 = vmatpush2.bf16.msra.mxu0 %v1546
    %1869 = vmatprep.subr.bf16.mxu0 %v1539
    %1870 = vmatpush2.bf16.msra.mxu0 %v1538
    %1871 = vmatprep.subr.bf16.mxu0 %v1531
    %1872 = vmatpush2.bf16.msra.mxu0 %v1530
    %1873 = vmatprep.subr.bf16.mxu0 %v1523
    %1874 = vmatpush2.bf16.msra.mxu0 %v1522
    %1875 = vmatprep.subr.bf16.mxu0 %v1515
    %1876 = vmatpush2.bf16.msra.mxu0 %v1514
    %1877 = vmatprep.subr.bf16.mxu0 %v1507
    %1878 = vmatpush2.bf16.msra.mxu0 %v1506
    %1879 = vmatprep.subr.bf16.mxu0 %v1499
    %1880 = vmatpush2.bf16.msra.mxu0 %v1498
    %1881 = vmatprep.subr.bf16.mxu0 %v1491
    %1882 = vmatpush2.bf16.msra.mxu0 %v1490
    %1883 = vmatprep.mubr.bf16.mxu0 %v525
    %1884 = vmatmul.mubr.bf16.gmra.mxu0 %v524
    %v1885 = vpop.f32.mrf.mxu0
    %v1886 = vadd.f32 %v1845, %v1885
    %v1887 = vpop.f32.mrf.mxu0
    %v1888 = vadd.f32 %v1847, %v1887
    %v1889 = vpop.f32.mrf.mxu0
    %v1890 = vpop.f32.mrf.mxu0
    %1891 = vdwg.mxu0
    %1892 = vmatprep.subr.bf16.mxu0 %v1357
    %1893 = vmatpush1.bf16.msra.mxu0 %v1356
    %1894 = vmatprep.subr.bf16.mxu0 %v1349
    %1895 = vmatpush1.bf16.msra.mxu0 %v1348
    %1896 = vmatprep.subr.bf16.mxu0 %v1341
    %1897 = vmatpush1.bf16.msra.mxu0 %v1340
    %1898 = vmatprep.subr.bf16.mxu0 %v1333
    %1899 = vmatpush1.bf16.msra.mxu0 %v1332
    %1900 = vmatprep.subr.bf16.mxu0 %v1325
    %1901 = vmatpush1.bf16.msra.mxu0 %v1324
    %1902 = vmatprep.subr.bf16.mxu0 %v1317
    %1903 = vmatpush1.bf16.msra.mxu0 %v1316
    %1904 = vmatprep.subr.bf16.mxu0 %v1309
    %1905 = vmatpush1.bf16.msra.mxu0 %v1308
    %1906 = vmatprep.subr.bf16.mxu0 %v1301
    %1907 = vmatpush1.bf16.msra.mxu0 %v1300
    %1908 = vmatprep.subr.bf16.mxu0 %v1421
    %1909 = vmatpush2.bf16.msra.mxu0 %v1420
    %1910 = vmatprep.subr.bf16.mxu0 %v1413
    %1911 = vmatpush2.bf16.msra.mxu0 %v1412
    %1912 = vmatprep.subr.bf16.mxu0 %v1405
    %1913 = vmatpush2.bf16.msra.mxu0 %v1404
    %1914 = vmatprep.subr.bf16.mxu0 %v1397
    %1915 = vmatpush2.bf16.msra.mxu0 %v1396
    %1916 = vmatprep.subr.bf16.mxu0 %v1389
    %1917 = vmatpush2.bf16.msra.mxu0 %v1388
    %1918 = vmatprep.subr.bf16.mxu0 %v1381
    %1919 = vmatpush2.bf16.msra.mxu0 %v1380
    %1920 = vmatprep.subr.bf16.mxu0 %v1373
    %1921 = vmatpush2.bf16.msra.mxu0 %v1372
    %1922 = vmatprep.subr.bf16.mxu0 %v1365
    %1923 = vmatpush2.bf16.msra.mxu0 %v1364
    %1924 = vmatprep.mubr.bf16.mxu0 %v523
    %1925 = vmatmul.mubr.bf16.gmra.mxu0 %v522
    %v1926 = vpop.f32.mrf.mxu0
    %v1927 = vadd.f32 %v472, %v1926
    %v1928 = vpop.f32.mrf.mxu0
    %v1929 = vadd.f32 %v476, %v1928
    %v1930 = vpop.f32.mrf.mxu0
    %v1931 = vpop.f32.mrf.mxu0
    %1932 = vdwg.mxu0
    %1933 = vmatprep.subr.bf16.mxu0 %v1485
    %1934 = vmatpush1.bf16.msra.mxu0 %v1484
    %1935 = vmatprep.subr.bf16.mxu0 %v1477
    %1936 = vmatpush1.bf16.msra.mxu0 %v1476
    %1937 = vmatprep.subr.bf16.mxu0 %v1469
    %1938 = vmatpush1.bf16.msra.mxu0 %v1468
    %1939 = vmatprep.subr.bf16.mxu0 %v1461
    %1940 = vmatpush1.bf16.msra.mxu0 %v1460
    %1941 = vmatprep.subr.bf16.mxu0 %v1453
    %1942 = vmatpush1.bf16.msra.mxu0 %v1452
    %1943 = vmatprep.subr.bf16.mxu0 %v1445
    %1944 = vmatpush1.bf16.msra.mxu0 %v1444
    %1945 = vmatprep.subr.bf16.mxu0 %v1437
    %1946 = vmatpush1.bf16.msra.mxu0 %v1436
    %1947 = vmatprep.subr.bf16.mxu0 %v1429
    %1948 = vmatpush1.bf16.msra.mxu0 %v1428
    %1949 = vmatprep.subr.bf16.mxu0 %v1549
    %1950 = vmatpush2.bf16.msra.mxu0 %v1548
    %1951 = vmatprep.subr.bf16.mxu0 %v1541
    %1952 = vmatpush2.bf16.msra.mxu0 %v1540
    %1953 = vmatprep.subr.bf16.mxu0 %v1533
    %1954 = vmatpush2.bf16.msra.mxu0 %v1532
    %1955 = vmatprep.subr.bf16.mxu0 %v1525
    %1956 = vmatpush2.bf16.msra.mxu0 %v1524
    %1957 = vmatprep.subr.bf16.mxu0 %v1517
    %1958 = vmatpush2.bf16.msra.mxu0 %v1516
    %1959 = vmatprep.subr.bf16.mxu0 %v1509
    %1960 = vmatpush2.bf16.msra.mxu0 %v1508
    %1961 = vmatprep.subr.bf16.mxu0 %v1501
    %1962 = vmatpush2.bf16.msra.mxu0 %v1500
    %1963 = vmatprep.subr.bf16.mxu0 %v1493
    %1964 = vmatpush2.bf16.msra.mxu0 %v1492
    %1965 = vmatprep.mubr.bf16.mxu0 %v525
    %1966 = vmatmul.mubr.bf16.gmra.mxu0 %v524
    %v1967 = vpop.f32.mrf.mxu0
    %v1968 = vadd.f32 %v1927, %v1967
    %v1969 = vpop.f32.mrf.mxu0
    %v1970 = vadd.f32 %v1929, %v1969
    %v1971 = vpop.f32.mrf.mxu0
    %v1972 = vpop.f32.mrf.mxu0
    %1973 = vdwg.mxu0
    %1974 = vmatprep.subr.bf16.mxu0 %v1359
    %1975 = vmatpush1.bf16.msra.mxu0 %v1358
    %1976 = vmatprep.subr.bf16.mxu0 %v1351
    %1977 = vmatpush1.bf16.msra.mxu0 %v1350
    %1978 = vmatprep.subr.bf16.mxu0 %v1343
    %1979 = vmatpush1.bf16.msra.mxu0 %v1342
    %1980 = vmatprep.subr.bf16.mxu0 %v1335
    %1981 = vmatpush1.bf16.msra.mxu0 %v1334
    %1982 = vmatprep.subr.bf16.mxu0 %v1327
    %1983 = vmatpush1.bf16.msra.mxu0 %v1326
    %1984 = vmatprep.subr.bf16.mxu0 %v1319
    %1985 = vmatpush1.bf16.msra.mxu0 %v1318
    %1986 = vmatprep.subr.bf16.mxu0 %v1311
    %1987 = vmatpush1.bf16.msra.mxu0 %v1310
    %1988 = vmatprep.subr.bf16.mxu0 %v1303
    %1989 = vmatpush1.bf16.msra.mxu0 %v1302
    %1990 = vmatprep.subr.bf16.mxu0 %v1423
    %1991 = vmatpush2.bf16.msra.mxu0 %v1422
    %1992 = vmatprep.subr.bf16.mxu0 %v1415
    %1993 = vmatpush2.bf16.msra.mxu0 %v1414
    %1994 = vmatprep.subr.bf16.mxu0 %v1407
    %1995 = vmatpush2.bf16.msra.mxu0 %v1406
    %1996 = vmatprep.subr.bf16.mxu0 %v1399
    %1997 = vmatpush2.bf16.msra.mxu0 %v1398
    %1998 = vmatprep.subr.bf16.mxu0 %v1391
    %1999 = vmatpush2.bf16.msra.mxu0 %v1390
    %2000 = vmatprep.subr.bf16.mxu0 %v1383
    %2001 = vmatpush2.bf16.msra.mxu0 %v1382
    %2002 = vmatprep.subr.bf16.mxu0 %v1375
    %2003 = vmatpush2.bf16.msra.mxu0 %v1374
    %2004 = vmatprep.subr.bf16.mxu0 %v1367
    %2005 = vmatpush2.bf16.msra.mxu0 %v1366
    %2006 = vmatprep.mubr.bf16.mxu0 %v523
    %2007 = vmatmul.mubr.bf16.gmra.mxu0 %v522
    %v2008 = vpop.f32.mrf.mxu0
    %v2009 = vadd.f32 %v480, %v2008
    %v2010 = vpop.f32.mrf.mxu0
    %v2011 = vadd.f32 %v484, %v2010
    %v2012 = vpop.f32.mrf.mxu0
    %v2013 = vpop.f32.mrf.mxu0
    %2014 = vdwg.mxu0
    %2015 = vmatprep.subr.bf16.mxu0 %v1487
    %2016 = vmatpush1.bf16.msra.mxu0 %v1486
    %2017 = vmatprep.subr.bf16.mxu0 %v1479
    %2018 = vmatpush1.bf16.msra.mxu0 %v1478
    %2019 = vmatprep.subr.bf16.mxu0 %v1471
    %2020 = vmatpush1.bf16.msra.mxu0 %v1470
    %2021 = vmatprep.subr.bf16.mxu0 %v1463
    %2022 = vmatpush1.bf16.msra.mxu0 %v1462
    %2023 = vmatprep.subr.bf16.mxu0 %v1455
    %2024 = vmatpush1.bf16.msra.mxu0 %v1454
    %2025 = vmatprep.subr.bf16.mxu0 %v1447
    %2026 = vmatpush1.bf16.msra.mxu0 %v1446
    %2027 = vmatprep.subr.bf16.mxu0 %v1439
    %2028 = vmatpush1.bf16.msra.mxu0 %v1438
    %2029 = vmatprep.subr.bf16.mxu0 %v1431
    %2030 = vmatpush1.bf16.msra.mxu0 %v1430
    %2031 = vmatprep.subr.bf16.mxu0 %v1551
    %2032 = vmatpush2.bf16.msra.mxu0 %v1550
    %2033 = vmatprep.subr.bf16.mxu0 %v1543
    %2034 = vmatpush2.bf16.msra.mxu0 %v1542
    %2035 = vmatprep.subr.bf16.mxu0 %v1535
    %2036 = vmatpush2.bf16.msra.mxu0 %v1534
    %2037 = vmatprep.subr.bf16.mxu0 %v1527
    %2038 = vmatpush2.bf16.msra.mxu0 %v1526
    %2039 = vmatprep.subr.bf16.mxu0 %v1519
    %2040 = vmatpush2.bf16.msra.mxu0 %v1518
    %2041 = vmatprep.subr.bf16.mxu0 %v1511
    %2042 = vmatpush2.bf16.msra.mxu0 %v1510
    %2043 = vmatprep.subr.bf16.mxu0 %v1503
    %2044 = vmatpush2.bf16.msra.mxu0 %v1502
    %2045 = vmatprep.subr.bf16.mxu0 %v1495
    %2046 = vmatpush2.bf16.msra.mxu0 %v1494
    %2047 = vmatprep.mubr.bf16.mxu0 %v525
    %2048 = vmatmul.mubr.bf16.gmra.mxu0 %v524
    %v2049 = vpop.f32.mrf.mxu0
    %v2050 = vadd.f32 %v2009, %v2049
    %v2051 = vpop.f32.mrf.mxu0
    %v2052 = vadd.f32 %v2011, %v2051
    %v2053 = vpop.f32.mrf.mxu0
    %v2054 = vpop.f32.mrf.mxu0
    %2055 = vdwg.mxu0
    %2056 = vmatprep.subr.bf16.mxu0 %v1361
    %2057 = vmatpush1.bf16.msra.mxu0 %v1360
    %2058 = vmatprep.subr.bf16.mxu0 %v1353
    %2059 = vmatpush1.bf16.msra.mxu0 %v1352
    %2060 = vmatprep.subr.bf16.mxu0 %v1345
    %2061 = vmatpush1.bf16.msra.mxu0 %v1344
    %2062 = vmatprep.subr.bf16.mxu0 %v1337
    %2063 = vmatpush1.bf16.msra.mxu0 %v1336
    %2064 = vmatprep.subr.bf16.mxu0 %v1329
    %2065 = vmatpush1.bf16.msra.mxu0 %v1328
    %2066 = vmatprep.subr.bf16.mxu0 %v1321
    %2067 = vmatpush1.bf16.msra.mxu0 %v1320
    %2068 = vmatprep.subr.bf16.mxu0 %v1313
    %2069 = vmatpush1.bf16.msra.mxu0 %v1312
    %2070 = vmatprep.subr.bf16.mxu0 %v1305
    %2071 = vmatpush1.bf16.msra.mxu0 %v1304
    %2072 = vmatprep.subr.bf16.mxu0 %v1425
    %2073 = vmatpush2.bf16.msra.mxu0 %v1424
    %2074 = vmatprep.subr.bf16.mxu0 %v1417
    %2075 = vmatpush2.bf16.msra.mxu0 %v1416
    %2076 = vmatprep.subr.bf16.mxu0 %v1409
    %2077 = vmatpush2.bf16.msra.mxu0 %v1408
    %2078 = vmatprep.subr.bf16.mxu0 %v1401
    %2079 = vmatpush2.bf16.msra.mxu0 %v1400
    %2080 = vmatprep.subr.bf16.mxu0 %v1393
    %2081 = vmatpush2.bf16.msra.mxu0 %v1392
    %2082 = vmatprep.subr.bf16.mxu0 %v1385
    %2083 = vmatpush2.bf16.msra.mxu0 %v1384
    %2084 = vmatprep.subr.bf16.mxu0 %v1377
    %2085 = vmatpush2.bf16.msra.mxu0 %v1376
    %2086 = vmatprep.subr.bf16.mxu0 %v1369
    %2087 = vmatpush2.bf16.msra.mxu0 %v1368
    %2088 = vmatprep.mubr.bf16.mxu0 %v523
    %2089 = vmatmul.mubr.bf16.gmra.mxu0 %v522
    %v2090 = vpop.f32.mrf.mxu0
    %v2091 = vadd.f32 %v488, %v2090
    %v2092 = vpop.f32.mrf.mxu0
    %v2093 = vadd.f32 %v492, %v2092
    %v2094 = vpop.f32.mrf.mxu0
    %v2095 = vpop.f32.mrf.mxu0
    %2096 = vdwg.mxu0
    %2097 = vmatprep.subr.bf16.mxu0 %v1489
    %2098 = vmatpush1.bf16.msra.mxu0 %v1488
    %2099 = vmatprep.subr.bf16.mxu0 %v1481
    %2100 = vmatpush1.bf16.msra.mxu0 %v1480
    %2101 = vmatprep.subr.bf16.mxu0 %v1473
    %2102 = vmatpush1.bf16.msra.mxu0 %v1472
    %2103 = vmatprep.subr.bf16.mxu0 %v1465
    %2104 = vmatpush1.bf16.msra.mxu0 %v1464
    %2105 = vmatprep.subr.bf16.mxu0 %v1457
    %2106 = vmatpush1.bf16.msra.mxu0 %v1456
    %2107 = vmatprep.subr.bf16.mxu0 %v1449
    %2108 = vmatpush1.bf16.msra.mxu0 %v1448
    %2109 = vmatprep.subr.bf16.mxu0 %v1441
    %2110 = vmatpush1.bf16.msra.mxu0 %v1440
    %2111 = vmatprep.subr.bf16.mxu0 %v1433
    %2112 = vmatpush1.bf16.msra.mxu0 %v1432
    %2113 = vmatprep.subr.bf16.mxu0 %v1553
    %2114 = vmatpush2.bf16.msra.mxu0 %v1552
    %2115 = vmatprep.subr.bf16.mxu0 %v1545
    %2116 = vmatpush2.bf16.msra.mxu0 %v1544
    %2117 = vmatprep.subr.bf16.mxu0 %v1537
    %2118 = vmatpush2.bf16.msra.mxu0 %v1536
    %2119 = vmatprep.subr.bf16.mxu0 %v1529
    %2120 = vmatpush2.bf16.msra.mxu0 %v1528
    %2121 = vmatprep.subr.bf16.mxu0 %v1521
    %2122 = vmatpush2.bf16.msra.mxu0 %v1520
    %2123 = vmatprep.subr.bf16.mxu0 %v1513
    %2124 = vmatpush2.bf16.msra.mxu0 %v1512
    %2125 = vmatprep.subr.bf16.mxu0 %v1505
    %2126 = vmatpush2.bf16.msra.mxu0 %v1504
    %2127 = vmatprep.subr.bf16.mxu0 %v1497
    %2128 = vmatpush2.bf16.msra.mxu0 %v1496
    %2129 = vmatprep.mubr.bf16.mxu0 %v525
    %2130 = vmatmul.mubr.bf16.gmra.mxu0 %v524
    %v2131 = vpop.f32.mrf.mxu0
    %v2132 = vadd.f32 %v2091, %v2131
    %v2133 = vpop.f32.mrf.mxu0
    %v2134 = vadd.f32 %v2093, %v2133
    %v2135 = vpop.f32.mrf.mxu0
    %v2136 = vpop.f32.mrf.mxu0
    %2137 = vdwg.mxu0
    %v2138 = vmax.f32 %v1886, 0.0
    %v2139 = vmax.f32 %v1888, 0.0
    %v2140 = vmax.f32 %v1968, 0.0
    %v2141 = vmax.f32 %v1970, 0.0
    %v2142 = vmax.f32 %v2050, 0.0
    %v2143 = vmax.f32 %v2052, 0.0
    %v2144 = vmax.f32 %v2132, 0.0
    %v2145 = vmax.f32 %v2134, 0.0
    %v2146 = vpack.c.bf16 %v2138, %v2138
    %v2147 = vpack.c.bf16 %v2139, %v2139
    %v2148 = vpack.c.bf16 %v2140, %v2140
    %v2149 = vpack.c.bf16 %v2141, %v2141
    %v2150 = vpack.c.bf16 %v2142, %v2142
    %v2151 = vpack.c.bf16 %v2143, %v2143
    %v2152 = vpack.c.bf16 %v2144, %v2144
    %v2153 = vpack.c.bf16 %v2145, %v2145
    %v2154 = vld [vmem:[%s3] sm:$0xff]
    %v2155 = vld [vmem:[%s3 + $0x8] sm:$0xff]
    %v2156 = vld [vmem:[%s3 + $0x10] sm:$0xff]
    %v2157 = vld [vmem:[%s3 + $0x18] sm:$0xff]
    %v2158 = vld [vmem:[%s3 + $0x20] sm:$0xff]
    %v2159 = vld [vmem:[%s3 + $0x28] sm:$0xff]
    %v2160 = vld [vmem:[%s3 + $0x30] sm:$0xff]
    %v2161 = vld [vmem:[%s3 + $0x38] sm:$0xff]
    %v2162 = vld [vmem:[%s3 + $0x40] sm:$0xff]
    %v2163 = vld [vmem:[%s3 + $0x48] sm:$0xff]
    %v2164 = vld [vmem:[%s3 + $0x50] sm:$0xff]
    %v2165 = vld [vmem:[%s3 + $0x58] sm:$0xff]
    %v2166 = vld [vmem:[%s3 + $0x60] sm:$0xff]
    %v2167 = vld [vmem:[%s3 + $0x68] sm:$0xff]
    %v2168 = vld [vmem:[%s3 + $0x70] sm:$0xff]
    %v2169 = vld [vmem:[%s3 + $0x78] sm:$0xff]
    %v2170 = vld [vmem:[%s3 + $0x80] sm:$0xff]
    %v2171 = vld [vmem:[%s3 + $0x88] sm:$0xff]
    %v2172 = vld [vmem:[%s3 + $0x90] sm:$0xff]
    %v2173 = vld [vmem:[%s3 + $0x98] sm:$0xff]
    %v2174 = vld [vmem:[%s3 + $0xa0] sm:$0xff]
    %v2175 = vld [vmem:[%s3 + $0xa8] sm:$0xff]
    %v2176 = vld [vmem:[%s3 + $0xb0] sm:$0xff]
    %v2177 = vld [vmem:[%s3 + $0xb8] sm:$0xff]
    %v2178 = vld [vmem:[%s3 + $0xc0] sm:$0xff]
    %v2179 = vld [vmem:[%s3 + $0xc8] sm:$0xff]
    %v2180 = vld [vmem:[%s3 + $0xd0] sm:$0xff]
    %v2181 = vld [vmem:[%s3 + $0xd8] sm:$0xff]
    %v2182 = vld [vmem:[%s3 + $0xe0] sm:$0xff]
    %v2183 = vld [vmem:[%s3 + $0xe8] sm:$0xff]
    %v2184 = vld [vmem:[%s3 + $0xf0] sm:$0xff]
    %v2185 = vld [vmem:[%s3 + $0xf8] sm:$0xff]
    %v2186 = vld [vmem:[%s3 + $0x100] sm:$0xff]
    %v2187 = vld [vmem:[%s3 + $0x108] sm:$0xff]
    %v2188 = vld [vmem:[%s3 + $0x110] sm:$0xff]
    %v2189 = vld [vmem:[%s3 + $0x118] sm:$0xff]
    %v2190 = vld [vmem:[%s3 + $0x120] sm:$0xff]
    %v2191 = vld [vmem:[%s3 + $0x128] sm:$0xff]
    %v2192 = vld [vmem:[%s3 + $0x130] sm:$0xff]
    %v2193 = vld [vmem:[%s3 + $0x138] sm:$0xff]
    %v2194 = vld [vmem:[%s3 + $0x140] sm:$0xff]
    %v2195 = vld [vmem:[%s3 + $0x148] sm:$0xff]
    %v2196 = vld [vmem:[%s3 + $0x150] sm:$0xff]
    %v2197 = vld [vmem:[%s3 + $0x158] sm:$0xff]
    %v2198 = vld [vmem:[%s3 + $0x160] sm:$0xff]
    %v2199 = vld [vmem:[%s3 + $0x168] sm:$0xff]
    %v2200 = vld [vmem:[%s3 + $0x170] sm:$0xff]
    %v2201 = vld [vmem:[%s3 + $0x178] sm:$0xff]
    %v2202 = vld [vmem:[%s3 + $0x180] sm:$0xff]
    %v2203 = vld [vmem:[%s3 + $0x188] sm:$0xff]
    %v2204 = vld [vmem:[%s3 + $0x190] sm:$0xff]
    %v2205 = vld [vmem:[%s3 + $0x198] sm:$0xff]
    %v2206 = vld [vmem:[%s3 + $0x1a0] sm:$0xff]
    %v2207 = vld [vmem:[%s3 + $0x1a8] sm:$0xff]
    %v2208 = vld [vmem:[%s3 + $0x1b0] sm:$0xff]
    %v2209 = vld [vmem:[%s3 + $0x1b8] sm:$0xff]
    %v2210 = vld [vmem:[%s3 + $0x1c0] sm:$0xff]
    %v2211 = vld [vmem:[%s3 + $0x1c8] sm:$0xff]
    %v2212 = vld [vmem:[%s3 + $0x1d0] sm:$0xff]
    %v2213 = vld [vmem:[%s3 + $0x1d8] sm:$0xff]
    %v2214 = vld [vmem:[%s3 + $0x1e0] sm:$0xff]
    %v2215 = vld [vmem:[%s3 + $0x1e8] sm:$0xff]
    %v2216 = vld [vmem:[%s3 + $0x1f0] sm:$0xff]
    %v2217 = vld [vmem:[%s3 + $0x1f8] sm:$0xff]
    %v2218 = vld [vmem:[%s3 + $0x200] sm:$0xff]
    %v2219 = vld [vmem:[%s3 + $0x208] sm:$0xff]
    %v2220 = vld [vmem:[%s3 + $0x210] sm:$0xff]
    %v2221 = vld [vmem:[%s3 + $0x218] sm:$0xff]
    %v2222 = vld [vmem:[%s3 + $0x220] sm:$0xff]
    %v2223 = vld [vmem:[%s3 + $0x228] sm:$0xff]
    %v2224 = vld [vmem:[%s3 + $0x230] sm:$0xff]
    %v2225 = vld [vmem:[%s3 + $0x238] sm:$0xff]
    %v2226 = vld [vmem:[%s3 + $0x240] sm:$0xff]
    %v2227 = vld [vmem:[%s3 + $0x248] sm:$0xff]
    %v2228 = vld [vmem:[%s3 + $0x250] sm:$0xff]
    %v2229 = vld [vmem:[%s3 + $0x258] sm:$0xff]
    %v2230 = vld [vmem:[%s3 + $0x260] sm:$0xff]
    %v2231 = vld [vmem:[%s3 + $0x268] sm:$0xff]
    %v2232 = vld [vmem:[%s3 + $0x270] sm:$0xff]
    %v2233 = vld [vmem:[%s3 + $0x278] sm:$0xff]
    %v2234 = vld [vmem:[%s3 + $0x280] sm:$0xff]
    %v2235 = vld [vmem:[%s3 + $0x288] sm:$0xff]
    %v2236 = vld [vmem:[%s3 + $0x290] sm:$0xff]
    %v2237 = vld [vmem:[%s3 + $0x298] sm:$0xff]
    %v2238 = vld [vmem:[%s3 + $0x2a0] sm:$0xff]
    %v2239 = vld [vmem:[%s3 + $0x2a8] sm:$0xff]
    %v2240 = vld [vmem:[%s3 + $0x2b0] sm:$0xff]
    %v2241 = vld [vmem:[%s3 + $0x2b8] sm:$0xff]
    %v2242 = vld [vmem:[%s3 + $0x2c0] sm:$0xff]
    %v2243 = vld [vmem:[%s3 + $0x2c8] sm:$0xff]
    %v2244 = vld [vmem:[%s3 + $0x2d0] sm:$0xff]
    %v2245 = vld [vmem:[%s3 + $0x2d8] sm:$0xff]
    %v2246 = vld [vmem:[%s3 + $0x2e0] sm:$0xff]
    %v2247 = vld [vmem:[%s3 + $0x2e8] sm:$0xff]
    %v2248 = vld [vmem:[%s3 + $0x2f0] sm:$0xff]
    %v2249 = vld [vmem:[%s3 + $0x2f8] sm:$0xff]
    %v2250 = vld [vmem:[%s3 + $0x300] sm:$0xff]
    %v2251 = vld [vmem:[%s3 + $0x308] sm:$0xff]
    %v2252 = vld [vmem:[%s3 + $0x310] sm:$0xff]
    %v2253 = vld [vmem:[%s3 + $0x318] sm:$0xff]
    %v2254 = vld [vmem:[%s3 + $0x320] sm:$0xff]
    %v2255 = vld [vmem:[%s3 + $0x328] sm:$0xff]
    %v2256 = vld [vmem:[%s3 + $0x330] sm:$0xff]
    %v2257 = vld [vmem:[%s3 + $0x338] sm:$0xff]
    %v2258 = vld [vmem:[%s3 + $0x340] sm:$0xff]
    %v2259 = vld [vmem:[%s3 + $0x348] sm:$0xff]
    %v2260 = vld [vmem:[%s3 + $0x350] sm:$0xff]
    %v2261 = vld [vmem:[%s3 + $0x358] sm:$0xff]
    %v2262 = vld [vmem:[%s3 + $0x360] sm:$0xff]
    %v2263 = vld [vmem:[%s3 + $0x368] sm:$0xff]
    %v2264 = vld [vmem:[%s3 + $0x370] sm:$0xff]
    %v2265 = vld [vmem:[%s3 + $0x378] sm:$0xff]
    %v2266 = vld [vmem:[%s3 + $0x380] sm:$0xff]
    %v2267 = vld [vmem:[%s3 + $0x388] sm:$0xff]
    %v2268 = vld [vmem:[%s3 + $0x390] sm:$0xff]
    %v2269 = vld [vmem:[%s3 + $0x398] sm:$0xff]
    %v2270 = vld [vmem:[%s3 + $0x3a0] sm:$0xff]
    %v2271 = vld [vmem:[%s3 + $0x3a8] sm:$0xff]
    %v2272 = vld [vmem:[%s3 + $0x3b0] sm:$0xff]
    %v2273 = vld [vmem:[%s3 + $0x3b8] sm:$0xff]
    %v2274 = vld [vmem:[%s3 + $0x3c0] sm:$0xff]
    %v2275 = vld [vmem:[%s3 + $0x3c8] sm:$0xff]
    %v2276 = vld [vmem:[%s3 + $0x3d0] sm:$0xff]
    %v2277 = vld [vmem:[%s3 + $0x3d8] sm:$0xff]
    %v2278 = vld [vmem:[%s3 + $0x3e0] sm:$0xff]
    %v2279 = vld [vmem:[%s3 + $0x3e8] sm:$0xff]
    %v2280 = vld [vmem:[%s3 + $0x3f0] sm:$0xff]
    %v2281 = vld [vmem:[%s3 + $0x3f8] sm:$0xff]
    %v2282 = vld [vmem:[%s3 + $0x400] sm:$0xff]
    %v2283 = vld [vmem:[%s3 + $0x408] sm:$0xff]
    %v2284 = vld [vmem:[%s3 + $0x410] sm:$0xff]
    %v2285 = vld [vmem:[%s3 + $0x418] sm:$0xff]
    %v2286 = vld [vmem:[%s3 + $0x420] sm:$0xff]
    %v2287 = vld [vmem:[%s3 + $0x428] sm:$0xff]
    %v2288 = vld [vmem:[%s3 + $0x430] sm:$0xff]
    %v2289 = vld [vmem:[%s3 + $0x438] sm:$0xff]
    %v2290 = vld [vmem:[%s3 + $0x440] sm:$0xff]
    %v2291 = vld [vmem:[%s3 + $0x448] sm:$0xff]
    %v2292 = vld [vmem:[%s3 + $0x450] sm:$0xff]
    %v2293 = vld [vmem:[%s3 + $0x458] sm:$0xff]
    %v2294 = vld [vmem:[%s3 + $0x460] sm:$0xff]
    %v2295 = vld [vmem:[%s3 + $0x468] sm:$0xff]
    %v2296 = vld [vmem:[%s3 + $0x470] sm:$0xff]
    %v2297 = vld [vmem:[%s3 + $0x478] sm:$0xff]
    %v2298 = vld [vmem:[%s3 + $0x480] sm:$0xff]
    %v2299 = vld [vmem:[%s3 + $0x488] sm:$0xff]
    %v2300 = vld [vmem:[%s3 + $0x490] sm:$0xff]
    %v2301 = vld [vmem:[%s3 + $0x498] sm:$0xff]
    %v2302 = vld [vmem:[%s3 + $0x4a0] sm:$0xff]
    %v2303 = vld [vmem:[%s3 + $0x4a8] sm:$0xff]
    %v2304 = vld [vmem:[%s3 + $0x4b0] sm:$0xff]
    %v2305 = vld [vmem:[%s3 + $0x4b8] sm:$0xff]
    %v2306 = vld [vmem:[%s3 + $0x4c0] sm:$0xff]
    %v2307 = vld [vmem:[%s3 + $0x4c8] sm:$0xff]
    %v2308 = vld [vmem:[%s3 + $0x4d0] sm:$0xff]
    %v2309 = vld [vmem:[%s3 + $0x4d8] sm:$0xff]
    %v2310 = vld [vmem:[%s3 + $0x4e0] sm:$0xff]
    %v2311 = vld [vmem:[%s3 + $0x4e8] sm:$0xff]
    %v2312 = vld [vmem:[%s3 + $0x4f0] sm:$0xff]
    %v2313 = vld [vmem:[%s3 + $0x4f8] sm:$0xff]
    %v2314 = vld [vmem:[%s3 + $0x500] sm:$0xff]
    %v2315 = vld [vmem:[%s3 + $0x508] sm:$0xff]
    %v2316 = vld [vmem:[%s3 + $0x510] sm:$0xff]
    %v2317 = vld [vmem:[%s3 + $0x518] sm:$0xff]
    %v2318 = vld [vmem:[%s3 + $0x520] sm:$0xff]
    %v2319 = vld [vmem:[%s3 + $0x528] sm:$0xff]
    %v2320 = vld [vmem:[%s3 + $0x530] sm:$0xff]
    %v2321 = vld [vmem:[%s3 + $0x538] sm:$0xff]
    %v2322 = vld [vmem:[%s3 + $0x540] sm:$0xff]
    %v2323 = vld [vmem:[%s3 + $0x548] sm:$0xff]
    %v2324 = vld [vmem:[%s3 + $0x550] sm:$0xff]
    %v2325 = vld [vmem:[%s3 + $0x558] sm:$0xff]
    %v2326 = vld [vmem:[%s3 + $0x560] sm:$0xff]
    %v2327 = vld [vmem:[%s3 + $0x568] sm:$0xff]
    %v2328 = vld [vmem:[%s3 + $0x570] sm:$0xff]
    %v2329 = vld [vmem:[%s3 + $0x578] sm:$0xff]
    %v2330 = vld [vmem:[%s3 + $0x580] sm:$0xff]
    %v2331 = vld [vmem:[%s3 + $0x588] sm:$0xff]
    %v2332 = vld [vmem:[%s3 + $0x590] sm:$0xff]
    %v2333 = vld [vmem:[%s3 + $0x598] sm:$0xff]
    %v2334 = vld [vmem:[%s3 + $0x5a0] sm:$0xff]
    %v2335 = vld [vmem:[%s3 + $0x5a8] sm:$0xff]
    %v2336 = vld [vmem:[%s3 + $0x5b0] sm:$0xff]
    %v2337 = vld [vmem:[%s3 + $0x5b8] sm:$0xff]
    %v2338 = vld [vmem:[%s3 + $0x5c0] sm:$0xff]
    %v2339 = vld [vmem:[%s3 + $0x5c8] sm:$0xff]
    %v2340 = vld [vmem:[%s3 + $0x5d0] sm:$0xff]
    %v2341 = vld [vmem:[%s3 + $0x5d8] sm:$0xff]
    %v2342 = vld [vmem:[%s3 + $0x5e0] sm:$0xff]
    %v2343 = vld [vmem:[%s3 + $0x5e8] sm:$0xff]
    %v2344 = vld [vmem:[%s3 + $0x5f0] sm:$0xff]
    %v2345 = vld [vmem:[%s3 + $0x5f8] sm:$0xff]
    %v2346 = vld [vmem:[%s3 + $0x600] sm:$0xff]
    %v2347 = vld [vmem:[%s3 + $0x608] sm:$0xff]
    %v2348 = vld [vmem:[%s3 + $0x610] sm:$0xff]
    %v2349 = vld [vmem:[%s3 + $0x618] sm:$0xff]
    %v2350 = vld [vmem:[%s3 + $0x620] sm:$0xff]
    %v2351 = vld [vmem:[%s3 + $0x628] sm:$0xff]
    %v2352 = vld [vmem:[%s3 + $0x630] sm:$0xff]
    %v2353 = vld [vmem:[%s3 + $0x638] sm:$0xff]
    %v2354 = vld [vmem:[%s3 + $0x640] sm:$0xff]
    %v2355 = vld [vmem:[%s3 + $0x648] sm:$0xff]
    %v2356 = vld [vmem:[%s3 + $0x650] sm:$0xff]
    %v2357 = vld [vmem:[%s3 + $0x658] sm:$0xff]
    %v2358 = vld [vmem:[%s3 + $0x660] sm:$0xff]
    %v2359 = vld [vmem:[%s3 + $0x668] sm:$0xff]
    %v2360 = vld [vmem:[%s3 + $0x670] sm:$0xff]
    %v2361 = vld [vmem:[%s3 + $0x678] sm:$0xff]
    %v2362 = vld [vmem:[%s3 + $0x680] sm:$0xff]
    %v2363 = vld [vmem:[%s3 + $0x688] sm:$0xff]
    %v2364 = vld [vmem:[%s3 + $0x690] sm:$0xff]
    %v2365 = vld [vmem:[%s3 + $0x698] sm:$0xff]
    %v2366 = vld [vmem:[%s3 + $0x6a0] sm:$0xff]
    %v2367 = vld [vmem:[%s3 + $0x6a8] sm:$0xff]
    %v2368 = vld [vmem:[%s3 + $0x6b0] sm:$0xff]
    %v2369 = vld [vmem:[%s3 + $0x6b8] sm:$0xff]
    %v2370 = vld [vmem:[%s3 + $0x6c0] sm:$0xff]
    %v2371 = vld [vmem:[%s3 + $0x6c8] sm:$0xff]
    %v2372 = vld [vmem:[%s3 + $0x6d0] sm:$0xff]
    %v2373 = vld [vmem:[%s3 + $0x6d8] sm:$0xff]
    %v2374 = vld [vmem:[%s3 + $0x6e0] sm:$0xff]
    %v2375 = vld [vmem:[%s3 + $0x6e8] sm:$0xff]
    %v2376 = vld [vmem:[%s3 + $0x6f0] sm:$0xff]
    %v2377 = vld [vmem:[%s3 + $0x6f8] sm:$0xff]
    %v2378 = vld [vmem:[%s3 + $0x700] sm:$0xff]
    %v2379 = vld [vmem:[%s3 + $0x708] sm:$0xff]
    %v2380 = vld [vmem:[%s3 + $0x710] sm:$0xff]
    %v2381 = vld [vmem:[%s3 + $0x718] sm:$0xff]
    %v2382 = vld [vmem:[%s3 + $0x720] sm:$0xff]
    %v2383 = vld [vmem:[%s3 + $0x728] sm:$0xff]
    %v2384 = vld [vmem:[%s3 + $0x730] sm:$0xff]
    %v2385 = vld [vmem:[%s3 + $0x738] sm:$0xff]
    %v2386 = vld [vmem:[%s3 + $0x740] sm:$0xff]
    %v2387 = vld [vmem:[%s3 + $0x748] sm:$0xff]
    %v2388 = vld [vmem:[%s3 + $0x750] sm:$0xff]
    %v2389 = vld [vmem:[%s3 + $0x758] sm:$0xff]
    %v2390 = vld [vmem:[%s3 + $0x760] sm:$0xff]
    %v2391 = vld [vmem:[%s3 + $0x768] sm:$0xff]
    %v2392 = vld [vmem:[%s3 + $0x770] sm:$0xff]
    %v2393 = vld [vmem:[%s3 + $0x778] sm:$0xff]
    %v2394 = vld [vmem:[%s3 + $0x780] sm:$0xff]
    %v2395 = vld [vmem:[%s3 + $0x788] sm:$0xff]
    %v2396 = vld [vmem:[%s3 + $0x790] sm:$0xff]
    %v2397 = vld [vmem:[%s3 + $0x798] sm:$0xff]
    %v2398 = vld [vmem:[%s3 + $0x7a0] sm:$0xff]
    %v2399 = vld [vmem:[%s3 + $0x7a8] sm:$0xff]
    %v2400 = vld [vmem:[%s3 + $0x7b0] sm:$0xff]
    %v2401 = vld [vmem:[%s3 + $0x7b8] sm:$0xff]
    %v2402 = vld [vmem:[%s3 + $0x7c0] sm:$0xff]
    %v2403 = vld [vmem:[%s3 + $0x7c8] sm:$0xff]
    %v2404 = vld [vmem:[%s3 + $0x7d0] sm:$0xff]
    %v2405 = vld [vmem:[%s3 + $0x7d8] sm:$0xff]
    %v2406 = vld [vmem:[%s3 + $0x7e0] sm:$0xff]
    %v2407 = vld [vmem:[%s3 + $0x7e8] sm:$0xff]
    %v2408 = vld [vmem:[%s3 + $0x7f0] sm:$0xff]
    %v2409 = vld [vmem:[%s3 + $0x7f8] sm:$0xff]
    %v2410 = vld [vmem:[%s4] sm:$0xf]
    %v2412 = vlaneseq
    %v2413 = vshrl.u32 %v2412, 7
    %v2414 = vsub.s32 0, %v2413
    %v2415 = vrot.slane %v2410, %v2414
    %v2416 = vlaneseq
    %v2417 = vshrl.u32 %v2416, 7
    %v2418 = vsub.s32 1, %v2417
    %v2419 = vrot.slane %v2410, %v2418
    %v2420 = vlaneseq
    %v2421 = vshrl.u32 %v2420, 7
    %v2422 = vsub.s32 2, %v2421
    %v2423 = vrot.slane %v2410, %v2422
    %v2424 = vlaneseq
    %v2425 = vshrl.u32 %v2424, 7
    %v2426 = vsub.s32 3, %v2425
    %v2427 = vrot.slane %v2410, %v2426
    %v2688 = vunpack.c.l.b16 %v2154
    %v2689 = vunpack.c.h.b16 %v2154
    %v2690 = vunpack.c.l.b16 %v2155
    %v2691 = vunpack.c.h.b16 %v2155
    %v2692 = vunpack.c.l.b16 %v2156
    %v2693 = vunpack.c.h.b16 %v2156
    %v2694 = vunpack.c.l.b16 %v2157
    %v2695 = vunpack.c.h.b16 %v2157
    %v2696 = vunpack.c.l.b16 %v2158
    %v2697 = vunpack.c.h.b16 %v2158
    %v2698 = vunpack.c.l.b16 %v2159
    %v2699 = vunpack.c.h.b16 %v2159
    %v2700 = vunpack.c.l.b16 %v2160
    %v2701 = vunpack.c.h.b16 %v2160
    %v2702 = vunpack.c.l.b16 %v2161
    %v2703 = vunpack.c.h.b16 %v2161
    %v2704 = vunpack.c.l.b16 %v2162
    %v2705 = vunpack.c.h.b16 %v2162
    %v2706 = vunpack.c.l.b16 %v2163
    %v2707 = vunpack.c.h.b16 %v2163
    %v2708 = vunpack.c.l.b16 %v2164
    %v2709 = vunpack.c.h.b16 %v2164
    %v2710 = vunpack.c.l.b16 %v2165
    %v2711 = vunpack.c.h.b16 %v2165
    %v2712 = vunpack.c.l.b16 %v2166
    %v2713 = vunpack.c.h.b16 %v2166
    %v2714 = vunpack.c.l.b16 %v2167
    %v2715 = vunpack.c.h.b16 %v2167
    %v2716 = vunpack.c.l.b16 %v2168
    %v2717 = vunpack.c.h.b16 %v2168
    %v2718 = vunpack.c.l.b16 %v2169
    %v2719 = vunpack.c.h.b16 %v2169
    %v2720 = vunpack.c.l.b16 %v2170
    %v2721 = vunpack.c.h.b16 %v2170
    %v2722 = vunpack.c.l.b16 %v2171
    %v2723 = vunpack.c.h.b16 %v2171
    %v2724 = vunpack.c.l.b16 %v2172
    %v2725 = vunpack.c.h.b16 %v2172
    %v2726 = vunpack.c.l.b16 %v2173
    %v2727 = vunpack.c.h.b16 %v2173
    %v2728 = vunpack.c.l.b16 %v2174
    %v2729 = vunpack.c.h.b16 %v2174
    %v2730 = vunpack.c.l.b16 %v2175
    %v2731 = vunpack.c.h.b16 %v2175
    %v2732 = vunpack.c.l.b16 %v2176
    %v2733 = vunpack.c.h.b16 %v2176
    %v2734 = vunpack.c.l.b16 %v2177
    %v2735 = vunpack.c.h.b16 %v2177
    %v2736 = vunpack.c.l.b16 %v2178
    %v2737 = vunpack.c.h.b16 %v2178
    %v2738 = vunpack.c.l.b16 %v2179
    %v2739 = vunpack.c.h.b16 %v2179
    %v2740 = vunpack.c.l.b16 %v2180
    %v2741 = vunpack.c.h.b16 %v2180
    %v2742 = vunpack.c.l.b16 %v2181
    %v2743 = vunpack.c.h.b16 %v2181
    %v2744 = vunpack.c.l.b16 %v2182
    %v2745 = vunpack.c.h.b16 %v2182
    %v2746 = vunpack.c.l.b16 %v2183
    %v2747 = vunpack.c.h.b16 %v2183
    %v2748 = vunpack.c.l.b16 %v2184
    %v2749 = vunpack.c.h.b16 %v2184
    %v2750 = vunpack.c.l.b16 %v2185
    %v2751 = vunpack.c.h.b16 %v2185
    %v2752 = vunpack.c.l.b16 %v2186
    %v2753 = vunpack.c.h.b16 %v2186
    %v2754 = vunpack.c.l.b16 %v2187
    %v2755 = vunpack.c.h.b16 %v2187
    %v2756 = vunpack.c.l.b16 %v2188
    %v2757 = vunpack.c.h.b16 %v2188
    %v2758 = vunpack.c.l.b16 %v2189
    %v2759 = vunpack.c.h.b16 %v2189
    %v2760 = vunpack.c.l.b16 %v2190
    %v2761 = vunpack.c.h.b16 %v2190
    %v2762 = vunpack.c.l.b16 %v2191
    %v2763 = vunpack.c.h.b16 %v2191
    %v2764 = vunpack.c.l.b16 %v2192
    %v2765 = vunpack.c.h.b16 %v2192
    %v2766 = vunpack.c.l.b16 %v2193
    %v2767 = vunpack.c.h.b16 %v2193
    %v2768 = vunpack.c.l.b16 %v2194
    %v2769 = vunpack.c.h.b16 %v2194
    %v2770 = vunpack.c.l.b16 %v2195
    %v2771 = vunpack.c.h.b16 %v2195
    %v2772 = vunpack.c.l.b16 %v2196
    %v2773 = vunpack.c.h.b16 %v2196
    %v2774 = vunpack.c.l.b16 %v2197
    %v2775 = vunpack.c.h.b16 %v2197
    %v2776 = vunpack.c.l.b16 %v2198
    %v2777 = vunpack.c.h.b16 %v2198
    %v2778 = vunpack.c.l.b16 %v2199
    %v2779 = vunpack.c.h.b16 %v2199
    %v2780 = vunpack.c.l.b16 %v2200
    %v2781 = vunpack.c.h.b16 %v2200
    %v2782 = vunpack.c.l.b16 %v2201
    %v2783 = vunpack.c.h.b16 %v2201
    %v2784 = vunpack.c.l.b16 %v2202
    %v2785 = vunpack.c.h.b16 %v2202
    %v2786 = vunpack.c.l.b16 %v2203
    %v2787 = vunpack.c.h.b16 %v2203
    %v2788 = vunpack.c.l.b16 %v2204
    %v2789 = vunpack.c.h.b16 %v2204
    %v2790 = vunpack.c.l.b16 %v2205
    %v2791 = vunpack.c.h.b16 %v2205
    %v2792 = vunpack.c.l.b16 %v2206
    %v2793 = vunpack.c.h.b16 %v2206
    %v2794 = vunpack.c.l.b16 %v2207
    %v2795 = vunpack.c.h.b16 %v2207
    %v2796 = vunpack.c.l.b16 %v2208
    %v2797 = vunpack.c.h.b16 %v2208
    %v2798 = vunpack.c.l.b16 %v2209
    %v2799 = vunpack.c.h.b16 %v2209
    %v2800 = vunpack.c.l.b16 %v2210
    %v2801 = vunpack.c.h.b16 %v2210
    %v2802 = vunpack.c.l.b16 %v2211
    %v2803 = vunpack.c.h.b16 %v2211
    %v2804 = vunpack.c.l.b16 %v2212
    %v2805 = vunpack.c.h.b16 %v2212
    %v2806 = vunpack.c.l.b16 %v2213
    %v2807 = vunpack.c.h.b16 %v2213
    %v2808 = vunpack.c.l.b16 %v2214
    %v2809 = vunpack.c.h.b16 %v2214
    %v2810 = vunpack.c.l.b16 %v2215
    %v2811 = vunpack.c.h.b16 %v2215
    %v2812 = vunpack.c.l.b16 %v2216
    %v2813 = vunpack.c.h.b16 %v2216
    %v2814 = vunpack.c.l.b16 %v2217
    %v2815 = vunpack.c.h.b16 %v2217
    %v2816 = vunpack.c.l.b16 %v2218
    %v2817 = vunpack.c.h.b16 %v2218
    %v2818 = vunpack.c.l.b16 %v2219
    %v2819 = vunpack.c.h.b16 %v2219
    %v2820 = vunpack.c.l.b16 %v2220
    %v2821 = vunpack.c.h.b16 %v2220
    %v2822 = vunpack.c.l.b16 %v2221
    %v2823 = vunpack.c.h.b16 %v2221
    %v2824 = vunpack.c.l.b16 %v2222
    %v2825 = vunpack.c.h.b16 %v2222
    %v2826 = vunpack.c.l.b16 %v2223
    %v2827 = vunpack.c.h.b16 %v2223
    %v2828 = vunpack.c.l.b16 %v2224
    %v2829 = vunpack.c.h.b16 %v2224
    %v2830 = vunpack.c.l.b16 %v2225
    %v2831 = vunpack.c.h.b16 %v2225
    %v2832 = vunpack.c.l.b16 %v2226
    %v2833 = vunpack.c.h.b16 %v2226
    %v2834 = vunpack.c.l.b16 %v2227
    %v2835 = vunpack.c.h.b16 %v2227
    %v2836 = vunpack.c.l.b16 %v2228
    %v2837 = vunpack.c.h.b16 %v2228
    %v2838 = vunpack.c.l.b16 %v2229
    %v2839 = vunpack.c.h.b16 %v2229
    %v2840 = vunpack.c.l.b16 %v2230
    %v2841 = vunpack.c.h.b16 %v2230
    %v2842 = vunpack.c.l.b16 %v2231
    %v2843 = vunpack.c.h.b16 %v2231
    %v2844 = vunpack.c.l.b16 %v2232
    %v2845 = vunpack.c.h.b16 %v2232
    %v2846 = vunpack.c.l.b16 %v2233
    %v2847 = vunpack.c.h.b16 %v2233
    %v2848 = vunpack.c.l.b16 %v2234
    %v2849 = vunpack.c.h.b16 %v2234
    %v2850 = vunpack.c.l.b16 %v2235
    %v2851 = vunpack.c.h.b16 %v2235
    %v2852 = vunpack.c.l.b16 %v2236
    %v2853 = vunpack.c.h.b16 %v2236
    %v2854 = vunpack.c.l.b16 %v2237
    %v2855 = vunpack.c.h.b16 %v2237
    %v2856 = vunpack.c.l.b16 %v2238
    %v2857 = vunpack.c.h.b16 %v2238
    %v2858 = vunpack.c.l.b16 %v2239
    %v2859 = vunpack.c.h.b16 %v2239
    %v2860 = vunpack.c.l.b16 %v2240
    %v2861 = vunpack.c.h.b16 %v2240
    %v2862 = vunpack.c.l.b16 %v2241
    %v2863 = vunpack.c.h.b16 %v2241
    %v2864 = vunpack.c.l.b16 %v2242
    %v2865 = vunpack.c.h.b16 %v2242
    %v2866 = vunpack.c.l.b16 %v2243
    %v2867 = vunpack.c.h.b16 %v2243
    %v2868 = vunpack.c.l.b16 %v2244
    %v2869 = vunpack.c.h.b16 %v2244
    %v2870 = vunpack.c.l.b16 %v2245
    %v2871 = vunpack.c.h.b16 %v2245
    %v2872 = vunpack.c.l.b16 %v2246
    %v2873 = vunpack.c.h.b16 %v2246
    %v2874 = vunpack.c.l.b16 %v2247
    %v2875 = vunpack.c.h.b16 %v2247
    %v2876 = vunpack.c.l.b16 %v2248
    %v2877 = vunpack.c.h.b16 %v2248
    %v2878 = vunpack.c.l.b16 %v2249
    %v2879 = vunpack.c.h.b16 %v2249
    %v2880 = vunpack.c.l.b16 %v2250
    %v2881 = vunpack.c.h.b16 %v2250
    %v2882 = vunpack.c.l.b16 %v2251
    %v2883 = vunpack.c.h.b16 %v2251
    %v2884 = vunpack.c.l.b16 %v2252
    %v2885 = vunpack.c.h.b16 %v2252
    %v2886 = vunpack.c.l.b16 %v2253
    %v2887 = vunpack.c.h.b16 %v2253
    %v2888 = vunpack.c.l.b16 %v2254
    %v2889 = vunpack.c.h.b16 %v2254
    %v2890 = vunpack.c.l.b16 %v2255
    %v2891 = vunpack.c.h.b16 %v2255
    %v2892 = vunpack.c.l.b16 %v2256
    %v2893 = vunpack.c.h.b16 %v2256
    %v2894 = vunpack.c.l.b16 %v2257
    %v2895 = vunpack.c.h.b16 %v2257
    %v2896 = vunpack.c.l.b16 %v2258
    %v2897 = vunpack.c.h.b16 %v2258
    %v2898 = vunpack.c.l.b16 %v2259
    %v2899 = vunpack.c.h.b16 %v2259
    %v2900 = vunpack.c.l.b16 %v2260
    %v2901 = vunpack.c.h.b16 %v2260
    %v2902 = vunpack.c.l.b16 %v2261
    %v2903 = vunpack.c.h.b16 %v2261
    %v2904 = vunpack.c.l.b16 %v2262
    %v2905 = vunpack.c.h.b16 %v2262
    %v2906 = vunpack.c.l.b16 %v2263
    %v2907 = vunpack.c.h.b16 %v2263
    %v2908 = vunpack.c.l.b16 %v2264
    %v2909 = vunpack.c.h.b16 %v2264
    %v2910 = vunpack.c.l.b16 %v2265
    %v2911 = vunpack.c.h.b16 %v2265
    %v2912 = vunpack.c.l.b16 %v2266
    %v2913 = vunpack.c.h.b16 %v2266
    %v2914 = vunpack.c.l.b16 %v2267
    %v2915 = vunpack.c.h.b16 %v2267
    %v2916 = vunpack.c.l.b16 %v2268
    %v2917 = vunpack.c.h.b16 %v2268
    %v2918 = vunpack.c.l.b16 %v2269
    %v2919 = vunpack.c.h.b16 %v2269
    %v2920 = vunpack.c.l.b16 %v2270
    %v2921 = vunpack.c.h.b16 %v2270
    %v2922 = vunpack.c.l.b16 %v2271
    %v2923 = vunpack.c.h.b16 %v2271
    %v2924 = vunpack.c.l.b16 %v2272
    %v2925 = vunpack.c.h.b16 %v2272
    %v2926 = vunpack.c.l.b16 %v2273
    %v2927 = vunpack.c.h.b16 %v2273
    %v2928 = vunpack.c.l.b16 %v2274
    %v2929 = vunpack.c.h.b16 %v2274
    %v2930 = vunpack.c.l.b16 %v2275
    %v2931 = vunpack.c.h.b16 %v2275
    %v2932 = vunpack.c.l.b16 %v2276
    %v2933 = vunpack.c.h.b16 %v2276
    %v2934 = vunpack.c.l.b16 %v2277
    %v2935 = vunpack.c.h.b16 %v2277
    %v2936 = vunpack.c.l.b16 %v2278
    %v2937 = vunpack.c.h.b16 %v2278
    %v2938 = vunpack.c.l.b16 %v2279
    %v2939 = vunpack.c.h.b16 %v2279
    %v2940 = vunpack.c.l.b16 %v2280
    %v2941 = vunpack.c.h.b16 %v2280
    %v2942 = vunpack.c.l.b16 %v2281
    %v2943 = vunpack.c.h.b16 %v2281
    %v2944 = vunpack.c.l.b16 %v2282
    %v2945 = vunpack.c.h.b16 %v2282
    %v2946 = vunpack.c.l.b16 %v2283
    %v2947 = vunpack.c.h.b16 %v2283
    %v2948 = vunpack.c.l.b16 %v2284
    %v2949 = vunpack.c.h.b16 %v2284
    %v2950 = vunpack.c.l.b16 %v2285
    %v2951 = vunpack.c.h.b16 %v2285
    %v2952 = vunpack.c.l.b16 %v2286
    %v2953 = vunpack.c.h.b16 %v2286
    %v2954 = vunpack.c.l.b16 %v2287
    %v2955 = vunpack.c.h.b16 %v2287
    %v2956 = vunpack.c.l.b16 %v2288
    %v2957 = vunpack.c.h.b16 %v2288
    %v2958 = vunpack.c.l.b16 %v2289
    %v2959 = vunpack.c.h.b16 %v2289
    %v2960 = vunpack.c.l.b16 %v2290
    %v2961 = vunpack.c.h.b16 %v2290
    %v2962 = vunpack.c.l.b16 %v2291
    %v2963 = vunpack.c.h.b16 %v2291
    %v2964 = vunpack.c.l.b16 %v2292
    %v2965 = vunpack.c.h.b16 %v2292
    %v2966 = vunpack.c.l.b16 %v2293
    %v2967 = vunpack.c.h.b16 %v2293
    %v2968 = vunpack.c.l.b16 %v2294
    %v2969 = vunpack.c.h.b16 %v2294
    %v2970 = vunpack.c.l.b16 %v2295
    %v2971 = vunpack.c.h.b16 %v2295
    %v2972 = vunpack.c.l.b16 %v2296
    %v2973 = vunpack.c.h.b16 %v2296
    %v2974 = vunpack.c.l.b16 %v2297
    %v2975 = vunpack.c.h.b16 %v2297
    %v2976 = vunpack.c.l.b16 %v2298
    %v2977 = vunpack.c.h.b16 %v2298
    %v2978 = vunpack.c.l.b16 %v2299
    %v2979 = vunpack.c.h.b16 %v2299
    %v2980 = vunpack.c.l.b16 %v2300
    %v2981 = vunpack.c.h.b16 %v2300
    %v2982 = vunpack.c.l.b16 %v2301
    %v2983 = vunpack.c.h.b16 %v2301
    %v2984 = vunpack.c.l.b16 %v2302
    %v2985 = vunpack.c.h.b16 %v2302
    %v2986 = vunpack.c.l.b16 %v2303
    %v2987 = vunpack.c.h.b16 %v2303
    %v2988 = vunpack.c.l.b16 %v2304
    %v2989 = vunpack.c.h.b16 %v2304
    %v2990 = vunpack.c.l.b16 %v2305
    %v2991 = vunpack.c.h.b16 %v2305
    %v2992 = vunpack.c.l.b16 %v2306
    %v2993 = vunpack.c.h.b16 %v2306
    %v2994 = vunpack.c.l.b16 %v2307
    %v2995 = vunpack.c.h.b16 %v2307
    %v2996 = vunpack.c.l.b16 %v2308
    %v2997 = vunpack.c.h.b16 %v2308
    %v2998 = vunpack.c.l.b16 %v2309
    %v2999 = vunpack.c.h.b16 %v2309
    %v3000 = vunpack.c.l.b16 %v2310
    %v3001 = vunpack.c.h.b16 %v2310
    %v3002 = vunpack.c.l.b16 %v2311
    %v3003 = vunpack.c.h.b16 %v2311
    %v3004 = vunpack.c.l.b16 %v2312
    %v3005 = vunpack.c.h.b16 %v2312
    %v3006 = vunpack.c.l.b16 %v2313
    %v3007 = vunpack.c.h.b16 %v2313
    %v3008 = vunpack.c.l.b16 %v2314
    %v3009 = vunpack.c.h.b16 %v2314
    %v3010 = vunpack.c.l.b16 %v2315
    %v3011 = vunpack.c.h.b16 %v2315
    %v3012 = vunpack.c.l.b16 %v2316
    %v3013 = vunpack.c.h.b16 %v2316
    %v3014 = vunpack.c.l.b16 %v2317
    %v3015 = vunpack.c.h.b16 %v2317
    %v3016 = vunpack.c.l.b16 %v2318
    %v3017 = vunpack.c.h.b16 %v2318
    %v3018 = vunpack.c.l.b16 %v2319
    %v3019 = vunpack.c.h.b16 %v2319
    %v3020 = vunpack.c.l.b16 %v2320
    %v3021 = vunpack.c.h.b16 %v2320
    %v3022 = vunpack.c.l.b16 %v2321
    %v3023 = vunpack.c.h.b16 %v2321
    %v3024 = vunpack.c.l.b16 %v2322
    %v3025 = vunpack.c.h.b16 %v2322
    %v3026 = vunpack.c.l.b16 %v2323
    %v3027 = vunpack.c.h.b16 %v2323
    %v3028 = vunpack.c.l.b16 %v2324
    %v3029 = vunpack.c.h.b16 %v2324
    %v3030 = vunpack.c.l.b16 %v2325
    %v3031 = vunpack.c.h.b16 %v2325
    %v3032 = vunpack.c.l.b16 %v2326
    %v3033 = vunpack.c.h.b16 %v2326
    %v3034 = vunpack.c.l.b16 %v2327
    %v3035 = vunpack.c.h.b16 %v2327
    %v3036 = vunpack.c.l.b16 %v2328
    %v3037 = vunpack.c.h.b16 %v2328
    %v3038 = vunpack.c.l.b16 %v2329
    %v3039 = vunpack.c.h.b16 %v2329
    %v3040 = vunpack.c.l.b16 %v2330
    %v3041 = vunpack.c.h.b16 %v2330
    %v3042 = vunpack.c.l.b16 %v2331
    %v3043 = vunpack.c.h.b16 %v2331
    %v3044 = vunpack.c.l.b16 %v2332
    %v3045 = vunpack.c.h.b16 %v2332
    %v3046 = vunpack.c.l.b16 %v2333
    %v3047 = vunpack.c.h.b16 %v2333
    %v3048 = vunpack.c.l.b16 %v2334
    %v3049 = vunpack.c.h.b16 %v2334
    %v3050 = vunpack.c.l.b16 %v2335
    %v3051 = vunpack.c.h.b16 %v2335
    %v3052 = vunpack.c.l.b16 %v2336
    %v3053 = vunpack.c.h.b16 %v2336
    %v3054 = vunpack.c.l.b16 %v2337
    %v3055 = vunpack.c.h.b16 %v2337
    %v3056 = vunpack.c.l.b16 %v2338
    %v3057 = vunpack.c.h.b16 %v2338
    %v3058 = vunpack.c.l.b16 %v2339
    %v3059 = vunpack.c.h.b16 %v2339
    %v3060 = vunpack.c.l.b16 %v2340
    %v3061 = vunpack.c.h.b16 %v2340
    %v3062 = vunpack.c.l.b16 %v2341
    %v3063 = vunpack.c.h.b16 %v2341
    %v3064 = vunpack.c.l.b16 %v2342
    %v3065 = vunpack.c.h.b16 %v2342
    %v3066 = vunpack.c.l.b16 %v2343
    %v3067 = vunpack.c.h.b16 %v2343
    %v3068 = vunpack.c.l.b16 %v2344
    %v3069 = vunpack.c.h.b16 %v2344
    %v3070 = vunpack.c.l.b16 %v2345
    %v3071 = vunpack.c.h.b16 %v2345
    %v3072 = vunpack.c.l.b16 %v2346
    %v3073 = vunpack.c.h.b16 %v2346
    %v3074 = vunpack.c.l.b16 %v2347
    %v3075 = vunpack.c.h.b16 %v2347
    %v3076 = vunpack.c.l.b16 %v2348
    %v3077 = vunpack.c.h.b16 %v2348
    %v3078 = vunpack.c.l.b16 %v2349
    %v3079 = vunpack.c.h.b16 %v2349
    %v3080 = vunpack.c.l.b16 %v2350
    %v3081 = vunpack.c.h.b16 %v2350
    %v3082 = vunpack.c.l.b16 %v2351
    %v3083 = vunpack.c.h.b16 %v2351
    %v3084 = vunpack.c.l.b16 %v2352
    %v3085 = vunpack.c.h.b16 %v2352
    %v3086 = vunpack.c.l.b16 %v2353
    %v3087 = vunpack.c.h.b16 %v2353
    %v3088 = vunpack.c.l.b16 %v2354
    %v3089 = vunpack.c.h.b16 %v2354
    %v3090 = vunpack.c.l.b16 %v2355
    %v3091 = vunpack.c.h.b16 %v2355
    %v3092 = vunpack.c.l.b16 %v2356
    %v3093 = vunpack.c.h.b16 %v2356
    %v3094 = vunpack.c.l.b16 %v2357
    %v3095 = vunpack.c.h.b16 %v2357
    %v3096 = vunpack.c.l.b16 %v2358
    %v3097 = vunpack.c.h.b16 %v2358
    %v3098 = vunpack.c.l.b16 %v2359
    %v3099 = vunpack.c.h.b16 %v2359
    %v3100 = vunpack.c.l.b16 %v2360
    %v3101 = vunpack.c.h.b16 %v2360
    %v3102 = vunpack.c.l.b16 %v2361
    %v3103 = vunpack.c.h.b16 %v2361
    %v3104 = vunpack.c.l.b16 %v2362
    %v3105 = vunpack.c.h.b16 %v2362
    %v3106 = vunpack.c.l.b16 %v2363
    %v3107 = vunpack.c.h.b16 %v2363
    %v3108 = vunpack.c.l.b16 %v2364
    %v3109 = vunpack.c.h.b16 %v2364
    %v3110 = vunpack.c.l.b16 %v2365
    %v3111 = vunpack.c.h.b16 %v2365
    %v3112 = vunpack.c.l.b16 %v2366
    %v3113 = vunpack.c.h.b16 %v2366
    %v3114 = vunpack.c.l.b16 %v2367
    %v3115 = vunpack.c.h.b16 %v2367
    %v3116 = vunpack.c.l.b16 %v2368
    %v3117 = vunpack.c.h.b16 %v2368
    %v3118 = vunpack.c.l.b16 %v2369
    %v3119 = vunpack.c.h.b16 %v2369
    %v3120 = vunpack.c.l.b16 %v2370
    %v3121 = vunpack.c.h.b16 %v2370
    %v3122 = vunpack.c.l.b16 %v2371
    %v3123 = vunpack.c.h.b16 %v2371
    %v3124 = vunpack.c.l.b16 %v2372
    %v3125 = vunpack.c.h.b16 %v2372
    %v3126 = vunpack.c.l.b16 %v2373
    %v3127 = vunpack.c.h.b16 %v2373
    %v3128 = vunpack.c.l.b16 %v2374
    %v3129 = vunpack.c.h.b16 %v2374
    %v3130 = vunpack.c.l.b16 %v2375
    %v3131 = vunpack.c.h.b16 %v2375
    %v3132 = vunpack.c.l.b16 %v2376
    %v3133 = vunpack.c.h.b16 %v2376
    %v3134 = vunpack.c.l.b16 %v2377
    %v3135 = vunpack.c.h.b16 %v2377
    %v3136 = vunpack.c.l.b16 %v2378
    %v3137 = vunpack.c.h.b16 %v2378
    %v3138 = vunpack.c.l.b16 %v2379
    %v3139 = vunpack.c.h.b16 %v2379
    %v3140 = vunpack.c.l.b16 %v2380
    %v3141 = vunpack.c.h.b16 %v2380
    %v3142 = vunpack.c.l.b16 %v2381
    %v3143 = vunpack.c.h.b16 %v2381
    %v3144 = vunpack.c.l.b16 %v2382
    %v3145 = vunpack.c.h.b16 %v2382
    %v3146 = vunpack.c.l.b16 %v2383
    %v3147 = vunpack.c.h.b16 %v2383
    %v3148 = vunpack.c.l.b16 %v2384
    %v3149 = vunpack.c.h.b16 %v2384
    %v3150 = vunpack.c.l.b16 %v2385
    %v3151 = vunpack.c.h.b16 %v2385
    %v3152 = vunpack.c.l.b16 %v2386
    %v3153 = vunpack.c.h.b16 %v2386
    %v3154 = vunpack.c.l.b16 %v2387
    %v3155 = vunpack.c.h.b16 %v2387
    %v3156 = vunpack.c.l.b16 %v2388
    %v3157 = vunpack.c.h.b16 %v2388
    %v3158 = vunpack.c.l.b16 %v2389
    %v3159 = vunpack.c.h.b16 %v2389
    %v3160 = vunpack.c.l.b16 %v2390
    %v3161 = vunpack.c.h.b16 %v2390
    %v3162 = vunpack.c.l.b16 %v2391
    %v3163 = vunpack.c.h.b16 %v2391
    %v3164 = vunpack.c.l.b16 %v2392
    %v3165 = vunpack.c.h.b16 %v2392
    %v3166 = vunpack.c.l.b16 %v2393
    %v3167 = vunpack.c.h.b16 %v2393
    %v3168 = vunpack.c.l.b16 %v2394
    %v3169 = vunpack.c.h.b16 %v2394
    %v3170 = vunpack.c.l.b16 %v2395
    %v3171 = vunpack.c.h.b16 %v2395
    %v3172 = vunpack.c.l.b16 %v2396
    %v3173 = vunpack.c.h.b16 %v2396
    %v3174 = vunpack.c.l.b16 %v2397
    %v3175 = vunpack.c.h.b16 %v2397
    %v3176 = vunpack.c.l.b16 %v2398
    %v3177 = vunpack.c.h.b16 %v2398
    %v3178 = vunpack.c.l.b16 %v2399
    %v3179 = vunpack.c.h.b16 %v2399
    %v3180 = vunpack.c.l.b16 %v2400
    %v3181 = vunpack.c.h.b16 %v2400
    %v3182 = vunpack.c.l.b16 %v2401
    %v3183 = vunpack.c.h.b16 %v2401
    %v3184 = vunpack.c.l.b16 %v2402
    %v3185 = vunpack.c.h.b16 %v2402
    %v3186 = vunpack.c.l.b16 %v2403
    %v3187 = vunpack.c.h.b16 %v2403
    %v3188 = vunpack.c.l.b16 %v2404
    %v3189 = vunpack.c.h.b16 %v2404
    %v3190 = vunpack.c.l.b16 %v2405
    %v3191 = vunpack.c.h.b16 %v2405
    %v3192 = vunpack.c.l.b16 %v2406
    %v3193 = vunpack.c.h.b16 %v2406
    %v3194 = vunpack.c.l.b16 %v2407
    %v3195 = vunpack.c.h.b16 %v2407
    %v3196 = vunpack.c.l.b16 %v2408
    %v3197 = vunpack.c.h.b16 %v2408
    %v3198 = vunpack.c.l.b16 %v2409
    %v3199 = vunpack.c.h.b16 %v2409
    %v3200 = vpack.c.b16 %v2692, %v2688
    %v3201 = vpack.c.b16 %v2693, %v2689
    %v3202 = vpack.c.b16 %v2694, %v2690
    %v3203 = vpack.c.b16 %v2695, %v2691
    %v3204 = vpack.c.b16 %v2700, %v2696
    %v3205 = vpack.c.b16 %v2701, %v2697
    %v3206 = vpack.c.b16 %v2702, %v2698
    %v3207 = vpack.c.b16 %v2703, %v2699
    %v3208 = vpack.c.b16 %v2708, %v2704
    %v3209 = vpack.c.b16 %v2709, %v2705
    %v3210 = vpack.c.b16 %v2710, %v2706
    %v3211 = vpack.c.b16 %v2711, %v2707
    %v3212 = vpack.c.b16 %v2716, %v2712
    %v3213 = vpack.c.b16 %v2717, %v2713
    %v3214 = vpack.c.b16 %v2718, %v2714
    %v3215 = vpack.c.b16 %v2719, %v2715
    %v3216 = vpack.c.b16 %v2724, %v2720
    %v3217 = vpack.c.b16 %v2725, %v2721
    %v3218 = vpack.c.b16 %v2726, %v2722
    %v3219 = vpack.c.b16 %v2727, %v2723
    %v3220 = vpack.c.b16 %v2732, %v2728
    %v3221 = vpack.c.b16 %v2733, %v2729
    %v3222 = vpack.c.b16 %v2734, %v2730
    %v3223 = vpack.c.b16 %v2735, %v2731
    %v3224 = vpack.c.b16 %v2740, %v2736
    %v3225 = vpack.c.b16 %v2741, %v2737
    %v3226 = vpack.c.b16 %v2742, %v2738
    %v3227 = vpack.c.b16 %v2743, %v2739
    %v3228 = vpack.c.b16 %v2748, %v2744
    %v3229 = vpack.c.b16 %v2749, %v2745
    %v3230 = vpack.c.b16 %v2750, %v2746
    %v3231 = vpack.c.b16 %v2751, %v2747
    %v3232 = vpack.c.b16 %v2756, %v2752
    %v3233 = vpack.c.b16 %v2757, %v2753
    %v3234 = vpack.c.b16 %v2758, %v2754
    %v3235 = vpack.c.b16 %v2759, %v2755
    %v3236 = vpack.c.b16 %v2764, %v2760
    %v3237 = vpack.c.b16 %v2765, %v2761
    %v3238 = vpack.c.b16 %v2766, %v2762
    %v3239 = vpack.c.b16 %v2767, %v2763
    %v3240 = vpack.c.b16 %v2772, %v2768
    %v3241 = vpack.c.b16 %v2773, %v2769
    %v3242 = vpack.c.b16 %v2774, %v2770
    %v3243 = vpack.c.b16 %v2775, %v2771
    %v3244 = vpack.c.b16 %v2780, %v2776
    %v3245 = vpack.c.b16 %v2781, %v2777
    %v3246 = vpack.c.b16 %v2782, %v2778
    %v3247 = vpack.c.b16 %v2783, %v2779
    %v3248 = vpack.c.b16 %v2788, %v2784
    %v3249 = vpack.c.b16 %v2789, %v2785
    %v3250 = vpack.c.b16 %v2790, %v2786
    %v3251 = vpack.c.b16 %v2791, %v2787
    %v3252 = vpack.c.b16 %v2796, %v2792
    %v3253 = vpack.c.b16 %v2797, %v2793
    %v3254 = vpack.c.b16 %v2798, %v2794
    %v3255 = vpack.c.b16 %v2799, %v2795
    %v3256 = vpack.c.b16 %v2804, %v2800
    %v3257 = vpack.c.b16 %v2805, %v2801
    %v3258 = vpack.c.b16 %v2806, %v2802
    %v3259 = vpack.c.b16 %v2807, %v2803
    %v3260 = vpack.c.b16 %v2812, %v2808
    %v3261 = vpack.c.b16 %v2813, %v2809
    %v3262 = vpack.c.b16 %v2814, %v2810
    %v3263 = vpack.c.b16 %v2815, %v2811
    %v3264 = vpack.c.b16 %v2820, %v2816
    %v3265 = vpack.c.b16 %v2821, %v2817
    %v3266 = vpack.c.b16 %v2822, %v2818
    %v3267 = vpack.c.b16 %v2823, %v2819
    %v3268 = vpack.c.b16 %v2828, %v2824
    %v3269 = vpack.c.b16 %v2829, %v2825
    %v3270 = vpack.c.b16 %v2830, %v2826
    %v3271 = vpack.c.b16 %v2831, %v2827
    %v3272 = vpack.c.b16 %v2836, %v2832
    %v3273 = vpack.c.b16 %v2837, %v2833
    %v3274 = vpack.c.b16 %v2838, %v2834
    %v3275 = vpack.c.b16 %v2839, %v2835
    %v3276 = vpack.c.b16 %v2844, %v2840
    %v3277 = vpack.c.b16 %v2845, %v2841
    %v3278 = vpack.c.b16 %v2846, %v2842
    %v3279 = vpack.c.b16 %v2847, %v2843
    %v3280 = vpack.c.b16 %v2852, %v2848
    %v3281 = vpack.c.b16 %v2853, %v2849
    %v3282 = vpack.c.b16 %v2854, %v2850
    %v3283 = vpack.c.b16 %v2855, %v2851
    %v3284 = vpack.c.b16 %v2860, %v2856
    %v3285 = vpack.c.b16 %v2861, %v2857
    %v3286 = vpack.c.b16 %v2862, %v2858
    %v3287 = vpack.c.b16 %v2863, %v2859
    %v3288 = vpack.c.b16 %v2868, %v2864
    %v3289 = vpack.c.b16 %v2869, %v2865
    %v3290 = vpack.c.b16 %v2870, %v2866
    %v3291 = vpack.c.b16 %v2871, %v2867
    %v3292 = vpack.c.b16 %v2876, %v2872
    %v3293 = vpack.c.b16 %v2877, %v2873
    %v3294 = vpack.c.b16 %v2878, %v2874
    %v3295 = vpack.c.b16 %v2879, %v2875
    %v3296 = vpack.c.b16 %v2884, %v2880
    %v3297 = vpack.c.b16 %v2885, %v2881
    %v3298 = vpack.c.b16 %v2886, %v2882
    %v3299 = vpack.c.b16 %v2887, %v2883
    %v3300 = vpack.c.b16 %v2892, %v2888
    %v3301 = vpack.c.b16 %v2893, %v2889
    %v3302 = vpack.c.b16 %v2894, %v2890
    %v3303 = vpack.c.b16 %v2895, %v2891
    %v3304 = vpack.c.b16 %v2900, %v2896
    %v3305 = vpack.c.b16 %v2901, %v2897
    %v3306 = vpack.c.b16 %v2902, %v2898
    %v3307 = vpack.c.b16 %v2903, %v2899
    %v3308 = vpack.c.b16 %v2908, %v2904
    %v3309 = vpack.c.b16 %v2909, %v2905
    %v3310 = vpack.c.b16 %v2910, %v2906
    %v3311 = vpack.c.b16 %v2911, %v2907
    %v3312 = vpack.c.b16 %v2916, %v2912
    %v3313 = vpack.c.b16 %v2917, %v2913
    %v3314 = vpack.c.b16 %v2918, %v2914
    %v3315 = vpack.c.b16 %v2919, %v2915
    %v3316 = vpack.c.b16 %v2924, %v2920
    %v3317 = vpack.c.b16 %v2925, %v2921
    %v3318 = vpack.c.b16 %v2926, %v2922
    %v3319 = vpack.c.b16 %v2927, %v2923
    %v3320 = vpack.c.b16 %v2932, %v2928
    %v3321 = vpack.c.b16 %v2933, %v2929
    %v3322 = vpack.c.b16 %v2934, %v2930
    %v3323 = vpack.c.b16 %v2935, %v2931
    %v3324 = vpack.c.b16 %v2940, %v2936
    %v3325 = vpack.c.b16 %v2941, %v2937
    %v3326 = vpack.c.b16 %v2942, %v2938
    %v3327 = vpack.c.b16 %v2943, %v2939
    %v3328 = vpack.c.b16 %v2948, %v2944
    %v3329 = vpack.c.b16 %v2949, %v2945
    %v3330 = vpack.c.b16 %v2950, %v2946
    %v3331 = vpack.c.b16 %v2951, %v2947
    %v3332 = vpack.c.b16 %v2956, %v2952
    %v3333 = vpack.c.b16 %v2957, %v2953
    %v3334 = vpack.c.b16 %v2958, %v2954
    %v3335 = vpack.c.b16 %v2959, %v2955
    %v3336 = vpack.c.b16 %v2964, %v2960
    %v3337 = vpack.c.b16 %v2965, %v2961
    %v3338 = vpack.c.b16 %v2966, %v2962
    %v3339 = vpack.c.b16 %v2967, %v2963
    %v3340 = vpack.c.b16 %v2972, %v2968
    %v3341 = vpack.c.b16 %v2973, %v2969
    %v3342 = vpack.c.b16 %v2974, %v2970
    %v3343 = vpack.c.b16 %v2975, %v2971
    %v3344 = vpack.c.b16 %v2980, %v2976
    %v3345 = vpack.c.b16 %v2981, %v2977
    %v3346 = vpack.c.b16 %v2982, %v2978
    %v3347 = vpack.c.b16 %v2983, %v2979
    %v3348 = vpack.c.b16 %v2988, %v2984
    %v3349 = vpack.c.b16 %v2989, %v2985
    %v3350 = vpack.c.b16 %v2990, %v2986
    %v3351 = vpack.c.b16 %v2991, %v2987
    %v3352 = vpack.c.b16 %v2996, %v2992
    %v3353 = vpack.c.b16 %v2997, %v2993
    %v3354 = vpack.c.b16 %v2998, %v2994
    %v3355 = vpack.c.b16 %v2999, %v2995
    %v3356 = vpack.c.b16 %v3004, %v3000
    %v3357 = vpack.c.b16 %v3005, %v3001
    %v3358 = vpack.c.b16 %v3006, %v3002
    %v3359 = vpack.c.b16 %v3007, %v3003
    %v3360 = vpack.c.b16 %v3012, %v3008
    %v3361 = vpack.c.b16 %v3013, %v3009
    %v3362 = vpack.c.b16 %v3014, %v3010
    %v3363 = vpack.c.b16 %v3015, %v3011
    %v3364 = vpack.c.b16 %v3020, %v3016
    %v3365 = vpack.c.b16 %v3021, %v3017
    %v3366 = vpack.c.b16 %v3022, %v3018
    %v3367 = vpack.c.b16 %v3023, %v3019
    %v3368 = vpack.c.b16 %v3028, %v3024
    %v3369 = vpack.c.b16 %v3029, %v3025
    %v3370 = vpack.c.b16 %v3030, %v3026
    %v3371 = vpack.c.b16 %v3031, %v3027
    %v3372 = vpack.c.b16 %v3036, %v3032
    %v3373 = vpack.c.b16 %v3037, %v3033
    %v3374 = vpack.c.b16 %v3038, %v3034
    %v3375 = vpack.c.b16 %v3039, %v3035
    %v3376 = vpack.c.b16 %v3044, %v3040
    %v3377 = vpack.c.b16 %v3045, %v3041
    %v3378 = vpack.c.b16 %v3046, %v3042
    %v3379 = vpack.c.b16 %v3047, %v3043
    %v3380 = vpack.c.b16 %v3052, %v3048
    %v3381 = vpack.c.b16 %v3053, %v3049
    %v3382 = vpack.c.b16 %v3054, %v3050
    %v3383 = vpack.c.b16 %v3055, %v3051
    %v3384 = vpack.c.b16 %v3060, %v3056
    %v3385 = vpack.c.b16 %v3061, %v3057
    %v3386 = vpack.c.b16 %v3062, %v3058
    %v3387 = vpack.c.b16 %v3063, %v3059
    %v3388 = vpack.c.b16 %v3068, %v3064
    %v3389 = vpack.c.b16 %v3069, %v3065
    %v3390 = vpack.c.b16 %v3070, %v3066
    %v3391 = vpack.c.b16 %v3071, %v3067
    %v3392 = vpack.c.b16 %v3076, %v3072
    %v3393 = vpack.c.b16 %v3077, %v3073
    %v3394 = vpack.c.b16 %v3078, %v3074
    %v3395 = vpack.c.b16 %v3079, %v3075
    %v3396 = vpack.c.b16 %v3084, %v3080
    %v3397 = vpack.c.b16 %v3085, %v3081
    %v3398 = vpack.c.b16 %v3086, %v3082
    %v3399 = vpack.c.b16 %v3087, %v3083
    %v3400 = vpack.c.b16 %v3092, %v3088
    %v3401 = vpack.c.b16 %v3093, %v3089
    %v3402 = vpack.c.b16 %v3094, %v3090
    %v3403 = vpack.c.b16 %v3095, %v3091
    %v3404 = vpack.c.b16 %v3100, %v3096
    %v3405 = vpack.c.b16 %v3101, %v3097
    %v3406 = vpack.c.b16 %v3102, %v3098
    %v3407 = vpack.c.b16 %v3103, %v3099
    %v3408 = vpack.c.b16 %v3108, %v3104
    %v3409 = vpack.c.b16 %v3109, %v3105
    %v3410 = vpack.c.b16 %v3110, %v3106
    %v3411 = vpack.c.b16 %v3111, %v3107
    %v3412 = vpack.c.b16 %v3116, %v3112
    %v3413 = vpack.c.b16 %v3117, %v3113
    %v3414 = vpack.c.b16 %v3118, %v3114
    %v3415 = vpack.c.b16 %v3119, %v3115
    %v3416 = vpack.c.b16 %v3124, %v3120
    %v3417 = vpack.c.b16 %v3125, %v3121
    %v3418 = vpack.c.b16 %v3126, %v3122
    %v3419 = vpack.c.b16 %v3127, %v3123
    %v3420 = vpack.c.b16 %v3132, %v3128
    %v3421 = vpack.c.b16 %v3133, %v3129
    %v3422 = vpack.c.b16 %v3134, %v3130
    %v3423 = vpack.c.b16 %v3135, %v3131
    %v3424 = vpack.c.b16 %v3140, %v3136
    %v3425 = vpack.c.b16 %v3141, %v3137
    %v3426 = vpack.c.b16 %v3142, %v3138
    %v3427 = vpack.c.b16 %v3143, %v3139
    %v3428 = vpack.c.b16 %v3148, %v3144
    %v3429 = vpack.c.b16 %v3149, %v3145
    %v3430 = vpack.c.b16 %v3150, %v3146
    %v3431 = vpack.c.b16 %v3151, %v3147
    %v3432 = vpack.c.b16 %v3156, %v3152
    %v3433 = vpack.c.b16 %v3157, %v3153
    %v3434 = vpack.c.b16 %v3158, %v3154
    %v3435 = vpack.c.b16 %v3159, %v3155
    %v3436 = vpack.c.b16 %v3164, %v3160
    %v3437 = vpack.c.b16 %v3165, %v3161
    %v3438 = vpack.c.b16 %v3166, %v3162
    %v3439 = vpack.c.b16 %v3167, %v3163
    %v3440 = vpack.c.b16 %v3172, %v3168
    %v3441 = vpack.c.b16 %v3173, %v3169
    %v3442 = vpack.c.b16 %v3174, %v3170
    %v3443 = vpack.c.b16 %v3175, %v3171
    %v3444 = vpack.c.b16 %v3180, %v3176
    %v3445 = vpack.c.b16 %v3181, %v3177
    %v3446 = vpack.c.b16 %v3182, %v3178
    %v3447 = vpack.c.b16 %v3183, %v3179
    %v3448 = vpack.c.b16 %v3188, %v3184
    %v3449 = vpack.c.b16 %v3189, %v3185
    %v3450 = vpack.c.b16 %v3190, %v3186
    %v3451 = vpack.c.b16 %v3191, %v3187
    %v3452 = vpack.c.b16 %v3196, %v3192
    %v3453 = vpack.c.b16 %v3197, %v3193
    %v3454 = vpack.c.b16 %v3198, %v3194
    %v3455 = vpack.c.b16 %v3199, %v3195
    %3712 = vmatprep.subr.bf16.mxu0 %v3229
    %3713 = vmatpush1.bf16.msra.mxu0 %v3228
    %3714 = vmatprep.subr.bf16.mxu0 %v3225
    %3715 = vmatpush1.bf16.msra.mxu0 %v3224
    %3716 = vmatprep.subr.bf16.mxu0 %v3221
    %3717 = vmatpush1.bf16.msra.mxu0 %v3220
    %3718 = vmatprep.subr.bf16.mxu0 %v3217
    %3719 = vmatpush1.bf16.msra.mxu0 %v3216
    %3720 = vmatprep.subr.bf16.mxu0 %v3213
    %3721 = vmatpush1.bf16.msra.mxu0 %v3212
    %3722 = vmatprep.subr.bf16.mxu0 %v3209
    %3723 = vmatpush1.bf16.msra.mxu0 %v3208
    %3724 = vmatprep.subr.bf16.mxu0 %v3205
    %3725 = vmatpush1.bf16.msra.mxu0 %v3204
    %3726 = vmatprep.subr.bf16.mxu0 %v3201
    %3727 = vmatpush1.bf16.msra.mxu0 %v3200
    %3728 = vmatprep.subr.bf16.mxu0 %v3261
    %3729 = vmatpush2.bf16.msra.mxu0 %v3260
    %3730 = vmatprep.subr.bf16.mxu0 %v3257
    %3731 = vmatpush2.bf16.msra.mxu0 %v3256
    %3732 = vmatprep.subr.bf16.mxu0 %v3253
    %3733 = vmatpush2.bf16.msra.mxu0 %v3252
    %3734 = vmatprep.subr.bf16.mxu0 %v3249
    %3735 = vmatpush2.bf16.msra.mxu0 %v3248
    %3736 = vmatprep.subr.bf16.mxu0 %v3245
    %3737 = vmatpush2.bf16.msra.mxu0 %v3244
    %3738 = vmatprep.subr.bf16.mxu0 %v3241
    %3739 = vmatpush2.bf16.msra.mxu0 %v3240
    %3740 = vmatprep.subr.bf16.mxu0 %v3237
    %3741 = vmatpush2.bf16.msra.mxu0 %v3236
    %3742 = vmatprep.subr.bf16.mxu0 %v3233
    %3743 = vmatpush2.bf16.msra.mxu0 %v3232
    %3744 = vmatprep.mubr.bf16.mxu0 %v2147
    %3745 = vmatmul.mubr.bf16.gmra.mxu0 %v2146
    %v3746 = vpop.f32.mrf.mxu0
    %v3747 = vadd.f32 %v2415, %v3746
    %v3748 = vpop.f32.mrf.mxu0
    %v3749 = vadd.f32 %v2419, %v3748
    %v3750 = vpop.f32.mrf.mxu0
    %v3751 = vpop.f32.mrf.mxu0
    %3752 = vdwg.mxu0
    %3753 = vmatprep.subr.bf16.mxu0 %v3293
    %3754 = vmatpush1.bf16.msra.mxu0 %v3292
    %3755 = vmatprep.subr.bf16.mxu0 %v3289
    %3756 = vmatpush1.bf16.msra.mxu0 %v3288
    %3757 = vmatprep.subr.bf16.mxu0 %v3285
    %3758 = vmatpush1.bf16.msra.mxu0 %v3284
    %3759 = vmatprep.subr.bf16.mxu0 %v3281
    %3760 = vmatpush1.bf16.msra.mxu0 %v3280
    %3761 = vmatprep.subr.bf16.mxu0 %v3277
    %3762 = vmatpush1.bf16.msra.mxu0 %v3276
    %3763 = vmatprep.subr.bf16.mxu0 %v3273
    %3764 = vmatpush1.bf16.msra.mxu0 %v3272
    %3765 = vmatprep.subr.bf16.mxu0 %v3269
    %3766 = vmatpush1.bf16.msra.mxu0 %v3268
    %3767 = vmatprep.subr.bf16.mxu0 %v3265
    %3768 = vmatpush1.bf16.msra.mxu0 %v3264
    %3769 = vmatprep.subr.bf16.mxu0 %v3325
    %3770 = vmatpush2.bf16.msra.mxu0 %v3324
    %3771 = vmatprep.subr.bf16.mxu0 %v3321
    %3772 = vmatpush2.bf16.msra.mxu0 %v3320
    %3773 = vmatprep.subr.bf16.mxu0 %v3317
    %3774 = vmatpush2.bf16.msra.mxu0 %v3316
    %3775 = vmatprep.subr.bf16.mxu0 %v3313
    %3776 = vmatpush2.bf16.msra.mxu0 %v3312
    %3777 = vmatprep.subr.bf16.mxu0 %v3309
    %3778 = vmatpush2.bf16.msra.mxu0 %v3308
    %3779 = vmatprep.subr.bf16.mxu0 %v3305
    %3780 = vmatpush2.bf16.msra.mxu0 %v3304
    %3781 = vmatprep.subr.bf16.mxu0 %v3301
    %3782 = vmatpush2.bf16.msra.mxu0 %v3300
    %3783 = vmatprep.subr.bf16.mxu0 %v3297
    %3784 = vmatpush2.bf16.msra.mxu0 %v3296
    %3785 = vmatprep.mubr.bf16.mxu0 %v2149
    %3786 = vmatmul.mubr.bf16.gmra.mxu0 %v2148
    %v3787 = vpop.f32.mrf.mxu0
    %v3788 = vadd.f32 %v3747, %v3787
    %v3789 = vpop.f32.mrf.mxu0
    %v3790 = vadd.f32 %v3749, %v3789
    %v3791 = vpop.f32.mrf.mxu0
    %v3792 = vpop.f32.mrf.mxu0
    %3793 = vdwg.mxu0
    %3794 = vmatprep.subr.bf16.mxu0 %v3357
    %3795 = vmatpush1.bf16.msra.mxu0 %v3356
    %3796 = vmatprep.subr.bf16.mxu0 %v3353
    %3797 = vmatpush1.bf16.msra.mxu0 %v3352
    %3798 = vmatprep.subr.bf16.mxu0 %v3349
    %3799 = vmatpush1.bf16.msra.mxu0 %v3348
    %3800 = vmatprep.subr.bf16.mxu0 %v3345
    %3801 = vmatpush1.bf16.msra.mxu0 %v3344
    %3802 = vmatprep.subr.bf16.mxu0 %v3341
    %3803 = vmatpush1.bf16.msra.mxu0 %v3340
    %3804 = vmatprep.subr.bf16.mxu0 %v3337
    %3805 = vmatpush1.bf16.msra.mxu0 %v3336
    %3806 = vmatprep.subr.bf16.mxu0 %v3333
    %3807 = vmatpush1.bf16.msra.mxu0 %v3332
    %3808 = vmatprep.subr.bf16.mxu0 %v3329
    %3809 = vmatpush1.bf16.msra.mxu0 %v3328
    %3810 = vmatprep.subr.bf16.mxu0 %v3389
    %3811 = vmatpush2.bf16.msra.mxu0 %v3388
    %3812 = vmatprep.subr.bf16.mxu0 %v3385
    %3813 = vmatpush2.bf16.msra.mxu0 %v3384
    %3814 = vmatprep.subr.bf16.mxu0 %v3381
    %3815 = vmatpush2.bf16.msra.mxu0 %v3380
    %3816 = vmatprep.subr.bf16.mxu0 %v3377
    %3817 = vmatpush2.bf16.msra.mxu0 %v3376
    %3818 = vmatprep.subr.bf16.mxu0 %v3373
    %3819 = vmatpush2.bf16.msra.mxu0 %v3372
    %3820 = vmatprep.subr.bf16.mxu0 %v3369
    %3821 = vmatpush2.bf16.msra.mxu0 %v3368
    %3822 = vmatprep.subr.bf16.mxu0 %v3365
    %3823 = vmatpush2.bf16.msra.mxu0 %v3364
    %3824 = vmatprep.subr.bf16.mxu0 %v3361
    %3825 = vmatpush2.bf16.msra.mxu0 %v3360
    %3826 = vmatprep.mubr.bf16.mxu0 %v2151
    %3827 = vmatmul.mubr.bf16.gmra.mxu0 %v2150
    %v3828 = vpop.f32.mrf.mxu0
    %v3829 = vadd.f32 %v3788, %v3828
    %v3830 = vpop.f32.mrf.mxu0
    %v3831 = vadd.f32 %v3790, %v3830
    %v3832 = vpop.f32.mrf.mxu0
    %v3833 = vpop.f32.mrf.mxu0
    %3834 = vdwg.mxu0
    %3835 = vmatprep.subr.bf16.mxu0 %v3421
    %3836 = vmatpush1.bf16.msra.mxu0 %v3420
    %3837 = vmatprep.subr.bf16.mxu0 %v3417
    %3838 = vmatpush1.bf16.msra.mxu0 %v3416
    %3839 = vmatprep.subr.bf16.mxu0 %v3413
    %3840 = vmatpush1.bf16.msra.mxu0 %v3412
    %3841 = vmatprep.subr.bf16.mxu0 %v3409
    %3842 = vmatpush1.bf16.msra.mxu0 %v3408
    %3843 = vmatprep.subr.bf16.mxu0 %v3405
    %3844 = vmatpush1.bf16.msra.mxu0 %v3404
    %3845 = vmatprep.subr.bf16.mxu0 %v3401
    %3846 = vmatpush1.bf16.msra.mxu0 %v3400
    %3847 = vmatprep.subr.bf16.mxu0 %v3397
    %3848 = vmatpush1.bf16.msra.mxu0 %v3396
    %3849 = vmatprep.subr.bf16.mxu0 %v3393
    %3850 = vmatpush1.bf16.msra.mxu0 %v3392
    %3851 = vmatprep.subr.bf16.mxu0 %v3453
    %3852 = vmatpush2.bf16.msra.mxu0 %v3452
    %3853 = vmatprep.subr.bf16.mxu0 %v3449
    %3854 = vmatpush2.bf16.msra.mxu0 %v3448
    %3855 = vmatprep.subr.bf16.mxu0 %v3445
    %3856 = vmatpush2.bf16.msra.mxu0 %v3444
    %3857 = vmatprep.subr.bf16.mxu0 %v3441
    %3858 = vmatpush2.bf16.msra.mxu0 %v3440
    %3859 = vmatprep.subr.bf16.mxu0 %v3437
    %3860 = vmatpush2.bf16.msra.mxu0 %v3436
    %3861 = vmatprep.subr.bf16.mxu0 %v3433
    %3862 = vmatpush2.bf16.msra.mxu0 %v3432
    %3863 = vmatprep.subr.bf16.mxu0 %v3429
    %3864 = vmatpush2.bf16.msra.mxu0 %v3428
    %3865 = vmatprep.subr.bf16.mxu0 %v3425
    %3866 = vmatpush2.bf16.msra.mxu0 %v3424
    %3867 = vmatprep.mubr.bf16.mxu0 %v2153
    %3868 = vmatmul.mubr.bf16.gmra.mxu0 %v2152
    %v3869 = vpop.f32.mrf.mxu0
    %v3870 = vadd.f32 %v3829, %v3869
    %v3871 = vpop.f32.mrf.mxu0
    %v3872 = vadd.f32 %v3831, %v3871
    %v3873 = vpop.f32.mrf.mxu0
    %v3874 = vpop.f32.mrf.mxu0
    %3875 = vdwg.mxu0
    %3876 = vmatprep.subr.bf16.mxu0 %v3231
    %3877 = vmatpush1.bf16.msra.mxu0 %v3230
    %3878 = vmatprep.subr.bf16.mxu0 %v3227
    %3879 = vmatpush1.bf16.msra.mxu0 %v3226
    %3880 = vmatprep.subr.bf16.mxu0 %v3223
    %3881 = vmatpush1.bf16.msra.mxu0 %v3222
    %3882 = vmatprep.subr.bf16.mxu0 %v3219
    %3883 = vmatpush1.bf16.msra.mxu0 %v3218
    %3884 = vmatprep.subr.bf16.mxu0 %v3215
    %3885 = vmatpush1.bf16.msra.mxu0 %v3214
    %3886 = vmatprep.subr.bf16.mxu0 %v3211
    %3887 = vmatpush1.bf16.msra.mxu0 %v3210
    %3888 = vmatprep.subr.bf16.mxu0 %v3207
    %3889 = vmatpush1.bf16.msra.mxu0 %v3206
    %3890 = vmatprep.subr.bf16.mxu0 %v3203
    %3891 = vmatpush1.bf16.msra.mxu0 %v3202
    %3892 = vmatprep.subr.bf16.mxu0 %v3263
    %3893 = vmatpush2.bf16.msra.mxu0 %v3262
    %3894 = vmatprep.subr.bf16.mxu0 %v3259
    %3895 = vmatpush2.bf16.msra.mxu0 %v3258
    %3896 = vmatprep.subr.bf16.mxu0 %v3255
    %3897 = vmatpush2.bf16.msra.mxu0 %v3254
    %3898 = vmatprep.subr.bf16.mxu0 %v3251
    %3899 = vmatpush2.bf16.msra.mxu0 %v3250
    %3900 = vmatprep.subr.bf16.mxu0 %v3247
    %3901 = vmatpush2.bf16.msra.mxu0 %v3246
    %3902 = vmatprep.subr.bf16.mxu0 %v3243
    %3903 = vmatpush2.bf16.msra.mxu0 %v3242
    %3904 = vmatprep.subr.bf16.mxu0 %v3239
    %3905 = vmatpush2.bf16.msra.mxu0 %v3238
    %3906 = vmatprep.subr.bf16.mxu0 %v3235
    %3907 = vmatpush2.bf16.msra.mxu0 %v3234
    %3908 = vmatprep.mubr.bf16.mxu0 %v2147
    %3909 = vmatmul.mubr.bf16.gmra.mxu0 %v2146
    %v3910 = vpop.f32.mrf.mxu0
    %v3911 = vadd.f32 %v2423, %v3910
    %v3912 = vpop.f32.mrf.mxu0
    %v3913 = vadd.f32 %v2427, %v3912
    %v3914 = vpop.f32.mrf.mxu0
    %v3915 = vpop.f32.mrf.mxu0
    %3916 = vdwg.mxu0
    %3917 = vmatprep.subr.bf16.mxu0 %v3295
    %3918 = vmatpush1.bf16.msra.mxu0 %v3294
    %3919 = vmatprep.subr.bf16.mxu0 %v3291
    %3920 = vmatpush1.bf16.msra.mxu0 %v3290
    %3921 = vmatprep.subr.bf16.mxu0 %v3287
    %3922 = vmatpush1.bf16.msra.mxu0 %v3286
    %3923 = vmatprep.subr.bf16.mxu0 %v3283
    %3924 = vmatpush1.bf16.msra.mxu0 %v3282
    %3925 = vmatprep.subr.bf16.mxu0 %v3279
    %3926 = vmatpush1.bf16.msra.mxu0 %v3278
    %3927 = vmatprep.subr.bf16.mxu0 %v3275
    %3928 = vmatpush1.bf16.msra.mxu0 %v3274
    %3929 = vmatprep.subr.bf16.mxu0 %v3271
    %3930 = vmatpush1.bf16.msra.mxu0 %v3270
    %3931 = vmatprep.subr.bf16.mxu0 %v3267
    %3932 = vmatpush1.bf16.msra.mxu0 %v3266
    %3933 = vmatprep.subr.bf16.mxu0 %v3327
    %3934 = vmatpush2.bf16.msra.mxu0 %v3326
    %3935 = vmatprep.subr.bf16.mxu0 %v3323
    %3936 = vmatpush2.bf16.msra.mxu0 %v3322
    %3937 = vmatprep.subr.bf16.mxu0 %v3319
    %3938 = vmatpush2.bf16.msra.mxu0 %v3318
    %3939 = vmatprep.subr.bf16.mxu0 %v3315
    %3940 = vmatpush2.bf16.msra.mxu0 %v3314
    %3941 = vmatprep.subr.bf16.mxu0 %v3311
    %3942 = vmatpush2.bf16.msra.mxu0 %v3310
    %3943 = vmatprep.subr.bf16.mxu0 %v3307
    %3944 = vmatpush2.bf16.msra.mxu0 %v3306
    %3945 = vmatprep.subr.bf16.mxu0 %v3303
    %3946 = vmatpush2.bf16.msra.mxu0 %v3302
    %3947 = vmatprep.subr.bf16.mxu0 %v3299
    %3948 = vmatpush2.bf16.msra.mxu0 %v3298
    %3949 = vmatprep.mubr.bf16.mxu0 %v2149
    %3950 = vmatmul.mubr.bf16.gmra.mxu0 %v2148
    %v3951 = vpop.f32.mrf.mxu0
    %v3952 = vadd.f32 %v3911, %v3951
    %v3953 = vpop.f32.mrf.mxu0
    %v3954 = vadd.f32 %v3913, %v3953
    %v3955 = vpop.f32.mrf.mxu0
    %v3956 = vpop.f32.mrf.mxu0
    %3957 = vdwg.mxu0
    %3958 = vmatprep.subr.bf16.mxu0 %v3359
    %3959 = vmatpush1.bf16.msra.mxu0 %v3358
    %3960 = vmatprep.subr.bf16.mxu0 %v3355
    %3961 = vmatpush1.bf16.msra.mxu0 %v3354
    %3962 = vmatprep.subr.bf16.mxu0 %v3351
    %3963 = vmatpush1.bf16.msra.mxu0 %v3350
    %3964 = vmatprep.subr.bf16.mxu0 %v3347
    %3965 = vmatpush1.bf16.msra.mxu0 %v3346
    %3966 = vmatprep.subr.bf16.mxu0 %v3343
    %3967 = vmatpush1.bf16.msra.mxu0 %v3342
    %3968 = vmatprep.subr.bf16.mxu0 %v3339
    %3969 = vmatpush1.bf16.msra.mxu0 %v3338
    %3970 = vmatprep.subr.bf16.mxu0 %v3335
    %3971 = vmatpush1.bf16.msra.mxu0 %v3334
    %3972 = vmatprep.subr.bf16.mxu0 %v3331
    %3973 = vmatpush1.bf16.msra.mxu0 %v3330
    %3974 = vmatprep.subr.bf16.mxu0 %v3391
    %3975 = vmatpush2.bf16.msra.mxu0 %v3390
    %3976 = vmatprep.subr.bf16.mxu0 %v3387
    %3977 = vmatpush2.bf16.msra.mxu0 %v3386
    %3978 = vmatprep.subr.bf16.mxu0 %v3383
    %3979 = vmatpush2.bf16.msra.mxu0 %v3382
    %3980 = vmatprep.subr.bf16.mxu0 %v3379
    %3981 = vmatpush2.bf16.msra.mxu0 %v3378
    %3982 = vmatprep.subr.bf16.mxu0 %v3375
    %3983 = vmatpush2.bf16.msra.mxu0 %v3374
    %3984 = vmatprep.subr.bf16.mxu0 %v3371
    %3985 = vmatpush2.bf16.msra.mxu0 %v3370
    %3986 = vmatprep.subr.bf16.mxu0 %v3367
    %3987 = vmatpush2.bf16.msra.mxu0 %v3366
    %3988 = vmatprep.subr.bf16.mxu0 %v3363
    %3989 = vmatpush2.bf16.msra.mxu0 %v3362
    %3990 = vmatprep.mubr.bf16.mxu0 %v2151
    %3991 = vmatmul.mubr.bf16.gmra.mxu0 %v2150
    %v3992 = vpop.f32.mrf.mxu0
    %v3993 = vadd.f32 %v3952, %v3992
    %v3994 = vpop.f32.mrf.mxu0
    %v3995 = vadd.f32 %v3954, %v3994
    %v3996 = vpop.f32.mrf.mxu0
    %v3997 = vpop.f32.mrf.mxu0
    %3998 = vdwg.mxu0
    %3999 = vmatprep.subr.bf16.mxu0 %v3423
    %4000 = vmatpush1.bf16.msra.mxu0 %v3422
    %4001 = vmatprep.subr.bf16.mxu0 %v3419
    %4002 = vmatpush1.bf16.msra.mxu0 %v3418
    %4003 = vmatprep.subr.bf16.mxu0 %v3415
    %4004 = vmatpush1.bf16.msra.mxu0 %v3414
    %4005 = vmatprep.subr.bf16.mxu0 %v3411
    %4006 = vmatpush1.bf16.msra.mxu0 %v3410
    %4007 = vmatprep.subr.bf16.mxu0 %v3407
    %4008 = vmatpush1.bf16.msra.mxu0 %v3406
    %4009 = vmatprep.subr.bf16.mxu0 %v3403
    %4010 = vmatpush1.bf16.msra.mxu0 %v3402
    %4011 = vmatprep.subr.bf16.mxu0 %v3399
    %4012 = vmatpush1.bf16.msra.mxu0 %v3398
    %4013 = vmatprep.subr.bf16.mxu0 %v3395
    %4014 = vmatpush1.bf16.msra.mxu0 %v3394
    %4015 = vmatprep.subr.bf16.mxu0 %v3455
    %4016 = vmatpush2.bf16.msra.mxu0 %v3454
    %4017 = vmatprep.subr.bf16.mxu0 %v3451
    %4018 = vmatpush2.bf16.msra.mxu0 %v3450
    %4019 = vmatprep.subr.bf16.mxu0 %v3447
    %4020 = vmatpush2.bf16.msra.mxu0 %v3446
    %4021 = vmatprep.subr.bf16.mxu0 %v3443
    %4022 = vmatpush2.bf16.msra.mxu0 %v3442
    %4023 = vmatprep.subr.bf16.mxu0 %v3439
    %4024 = vmatpush2.bf16.msra.mxu0 %v3438
    %4025 = vmatprep.subr.bf16.mxu0 %v3435
    %4026 = vmatpush2.bf16.msra.mxu0 %v3434
    %4027 = vmatprep.subr.bf16.mxu0 %v3431
    %4028 = vmatpush2.bf16.msra.mxu0 %v3430
    %4029 = vmatprep.subr.bf16.mxu0 %v3427
    %4030 = vmatpush2.bf16.msra.mxu0 %v3426
    %4031 = vmatprep.mubr.bf16.mxu0 %v2153
    %4032 = vmatmul.mubr.bf16.gmra.mxu0 %v2152
    %v4033 = vpop.f32.mrf.mxu0
    %v4034 = vadd.f32 %v3993, %v4033
    %v4035 = vpop.f32.mrf.mxu0
    %v4036 = vadd.f32 %v3995, %v4035
    %v4037 = vpop.f32.mrf.mxu0
    %v4038 = vpop.f32.mrf.mxu0
    %4039 = vdwg.mxu0
    %v4040 = vmax.f32 %v3870, 0.0
    %v4041 = vmax.f32 %v3872, 0.0
    %v4042 = vmax.f32 %v4034, 0.0
    %v4043 = vmax.f32 %v4036, 0.0
    %v4044 = vpack.c.bf16 %v4040, %v4040
    %v4045 = vpack.c.bf16 %v4041, %v4041
    %v4046 = vpack.c.bf16 %v4042, %v4042
    %v4047 = vpack.c.bf16 %v4043, %v4043
    %v4048 = vld [vmem:[%s5] sm:$0xff]
    %v4049 = vld [vmem:[%s5 + $0x8] sm:$0xff]
    %v4050 = vld [vmem:[%s5 + $0x10] sm:$0xff]
    %v4051 = vld [vmem:[%s5 + $0x18] sm:$0xff]
    %v4052 = vld [vmem:[%s5 + $0x20] sm:$0xff]
    %v4053 = vld [vmem:[%s5 + $0x28] sm:$0xff]
    %v4054 = vld [vmem:[%s5 + $0x30] sm:$0xff]
    %v4055 = vld [vmem:[%s5 + $0x38] sm:$0xff]
    %v4056 = vld [vmem:[%s5 + $0x40] sm:$0xff]
    %v4057 = vld [vmem:[%s5 + $0x48] sm:$0xff]
    %v4058 = vld [vmem:[%s5 + $0x50] sm:$0xff]
    %v4059 = vld [vmem:[%s5 + $0x58] sm:$0xff]
    %v4060 = vld [vmem:[%s5 + $0x60] sm:$0xff]
    %v4061 = vld [vmem:[%s5 + $0x68] sm:$0xff]
    %v4062 = vld [vmem:[%s5 + $0x70] sm:$0xff]
    %v4063 = vld [vmem:[%s5 + $0x78] sm:$0xff]
    %v4064 = vld [vmem:[%s5 + $0x80] sm:$0xff]
    %v4065 = vld [vmem:[%s5 + $0x88] sm:$0xff]
    %v4066 = vld [vmem:[%s5 + $0x90] sm:$0xff]
    %v4067 = vld [vmem:[%s5 + $0x98] sm:$0xff]
    %v4068 = vld [vmem:[%s5 + $0xa0] sm:$0xff]
    %v4069 = vld [vmem:[%s5 + $0xa8] sm:$0xff]
    %v4070 = vld [vmem:[%s5 + $0xb0] sm:$0xff]
    %v4071 = vld [vmem:[%s5 + $0xb8] sm:$0xff]
    %v4072 = vld [vmem:[%s5 + $0xc0] sm:$0xff]
    %v4073 = vld [vmem:[%s5 + $0xc8] sm:$0xff]
    %v4074 = vld [vmem:[%s5 + $0xd0] sm:$0xff]
    %v4075 = vld [vmem:[%s5 + $0xd8] sm:$0xff]
    %v4076 = vld [vmem:[%s5 + $0xe0] sm:$0xff]
    %v4077 = vld [vmem:[%s5 + $0xe8] sm:$0xff]
    %v4078 = vld [vmem:[%s5 + $0xf0] sm:$0xff]
    %v4079 = vld [vmem:[%s5 + $0xf8] sm:$0xff]
    %v4080 = vld [vmem:[%s5 + $0x100] sm:$0xff]
    %v4081 = vld [vmem:[%s5 + $0x108] sm:$0xff]
    %v4082 = vld [vmem:[%s5 + $0x110] sm:$0xff]
    %v4083 = vld [vmem:[%s5 + $0x118] sm:$0xff]
    %v4084 = vld [vmem:[%s5 + $0x120] sm:$0xff]
    %v4085 = vld [vmem:[%s5 + $0x128] sm:$0xff]
    %v4086 = vld [vmem:[%s5 + $0x130] sm:$0xff]
    %v4087 = vld [vmem:[%s5 + $0x138] sm:$0xff]
    %v4088 = vld [vmem:[%s5 + $0x140] sm:$0xff]
    %v4089 = vld [vmem:[%s5 + $0x148] sm:$0xff]
    %v4090 = vld [vmem:[%s5 + $0x150] sm:$0xff]
    %v4091 = vld [vmem:[%s5 + $0x158] sm:$0xff]
    %v4092 = vld [vmem:[%s5 + $0x160] sm:$0xff]
    %v4093 = vld [vmem:[%s5 + $0x168] sm:$0xff]
    %v4094 = vld [vmem:[%s5 + $0x170] sm:$0xff]
    %v4095 = vld [vmem:[%s5 + $0x178] sm:$0xff]
    %v4096 = vld [vmem:[%s5 + $0x180] sm:$0xff]
    %v4097 = vld [vmem:[%s5 + $0x188] sm:$0xff]
    %v4098 = vld [vmem:[%s5 + $0x190] sm:$0xff]
    %v4099 = vld [vmem:[%s5 + $0x198] sm:$0xff]
    %v4100 = vld [vmem:[%s5 + $0x1a0] sm:$0xff]
    %v4101 = vld [vmem:[%s5 + $0x1a8] sm:$0xff]
    %v4102 = vld [vmem:[%s5 + $0x1b0] sm:$0xff]
    %v4103 = vld [vmem:[%s5 + $0x1b8] sm:$0xff]
    %v4104 = vld [vmem:[%s5 + $0x1c0] sm:$0xff]
    %v4105 = vld [vmem:[%s5 + $0x1c8] sm:$0xff]
    %v4106 = vld [vmem:[%s5 + $0x1d0] sm:$0xff]
    %v4107 = vld [vmem:[%s5 + $0x1d8] sm:$0xff]
    %v4108 = vld [vmem:[%s5 + $0x1e0] sm:$0xff]
    %v4109 = vld [vmem:[%s5 + $0x1e8] sm:$0xff]
    %v4110 = vld [vmem:[%s5 + $0x1f0] sm:$0xff]
    %v4111 = vld [vmem:[%s5 + $0x1f8] sm:$0xff]
    %v4112 = vld [vmem:[%s6] sm:$0x3]
    %v4114 = vlaneseq
    %v4115 = vshrl.u32 %v4114, 7
    %v4116 = vsub.s32 0, %v4115
    %v4117 = vrot.slane %v4112, %v4116
    %v4118 = vlaneseq
    %v4119 = vshrl.u32 %v4118, 7
    %v4120 = vsub.s32 1, %v4119
    %v4121 = vrot.slane %v4112, %v4120
    %v4188 = vunpack.c.l.b16 %v4048
    %v4189 = vunpack.c.h.b16 %v4048
    %v4190 = vunpack.c.l.b16 %v4049
    %v4191 = vunpack.c.h.b16 %v4049
    %v4192 = vunpack.c.l.b16 %v4050
    %v4193 = vunpack.c.h.b16 %v4050
    %v4194 = vunpack.c.l.b16 %v4051
    %v4195 = vunpack.c.h.b16 %v4051
    %v4196 = vunpack.c.l.b16 %v4052
    %v4197 = vunpack.c.h.b16 %v4052
    %v4198 = vunpack.c.l.b16 %v4053
    %v4199 = vunpack.c.h.b16 %v4053
    %v4200 = vunpack.c.l.b16 %v4054
    %v4201 = vunpack.c.h.b16 %v4054
    %v4202 = vunpack.c.l.b16 %v4055
    %v4203 = vunpack.c.h.b16 %v4055
    %v4204 = vunpack.c.l.b16 %v4056
    %v4205 = vunpack.c.h.b16 %v4056
    %v4206 = vunpack.c.l.b16 %v4057
    %v4207 = vunpack.c.h.b16 %v4057
    %v4208 = vunpack.c.l.b16 %v4058
    %v4209 = vunpack.c.h.b16 %v4058
    %v4210 = vunpack.c.l.b16 %v4059
    %v4211 = vunpack.c.h.b16 %v4059
    %v4212 = vunpack.c.l.b16 %v4060
    %v4213 = vunpack.c.h.b16 %v4060
    %v4214 = vunpack.c.l.b16 %v4061
    %v4215 = vunpack.c.h.b16 %v4061
    %v4216 = vunpack.c.l.b16 %v4062
    %v4217 = vunpack.c.h.b16 %v4062
    %v4218 = vunpack.c.l.b16 %v4063
    %v4219 = vunpack.c.h.b16 %v4063
    %v4220 = vunpack.c.l.b16 %v4064
    %v4221 = vunpack.c.h.b16 %v4064
    %v4222 = vunpack.c.l.b16 %v4065
    %v4223 = vunpack.c.h.b16 %v4065
    %v4224 = vunpack.c.l.b16 %v4066
    %v4225 = vunpack.c.h.b16 %v4066
    %v4226 = vunpack.c.l.b16 %v4067
    %v4227 = vunpack.c.h.b16 %v4067
    %v4228 = vunpack.c.l.b16 %v4068
    %v4229 = vunpack.c.h.b16 %v4068
    %v4230 = vunpack.c.l.b16 %v4069
    %v4231 = vunpack.c.h.b16 %v4069
    %v4232 = vunpack.c.l.b16 %v4070
    %v4233 = vunpack.c.h.b16 %v4070
    %v4234 = vunpack.c.l.b16 %v4071
    %v4235 = vunpack.c.h.b16 %v4071
    %v4236 = vunpack.c.l.b16 %v4072
    %v4237 = vunpack.c.h.b16 %v4072
    %v4238 = vunpack.c.l.b16 %v4073
    %v4239 = vunpack.c.h.b16 %v4073
    %v4240 = vunpack.c.l.b16 %v4074
    %v4241 = vunpack.c.h.b16 %v4074
    %v4242 = vunpack.c.l.b16 %v4075
    %v4243 = vunpack.c.h.b16 %v4075
    %v4244 = vunpack.c.l.b16 %v4076
    %v4245 = vunpack.c.h.b16 %v4076
    %v4246 = vunpack.c.l.b16 %v4077
    %v4247 = vunpack.c.h.b16 %v4077
    %v4248 = vunpack.c.l.b16 %v4078
    %v4249 = vunpack.c.h.b16 %v4078
    %v4250 = vunpack.c.l.b16 %v4079
    %v4251 = vunpack.c.h.b16 %v4079
    %v4252 = vunpack.c.l.b16 %v4080
    %v4253 = vunpack.c.h.b16 %v4080
    %v4254 = vunpack.c.l.b16 %v4081
    %v4255 = vunpack.c.h.b16 %v4081
    %v4256 = vunpack.c.l.b16 %v4082
    %v4257 = vunpack.c.h.b16 %v4082
    %v4258 = vunpack.c.l.b16 %v4083
    %v4259 = vunpack.c.h.b16 %v4083
    %v4260 = vunpack.c.l.b16 %v4084
    %v4261 = vunpack.c.h.b16 %v4084
    %v4262 = vunpack.c.l.b16 %v4085
    %v4263 = vunpack.c.h.b16 %v4085
    %v4264 = vunpack.c.l.b16 %v4086
    %v4265 = vunpack.c.h.b16 %v4086
    %v4266 = vunpack.c.l.b16 %v4087
    %v4267 = vunpack.c.h.b16 %v4087
    %v4268 = vunpack.c.l.b16 %v4088
    %v4269 = vunpack.c.h.b16 %v4088
    %v4270 = vunpack.c.l.b16 %v4089
    %v4271 = vunpack.c.h.b16 %v4089
    %v4272 = vunpack.c.l.b16 %v4090
    %v4273 = vunpack.c.h.b16 %v4090
    %v4274 = vunpack.c.l.b16 %v4091
    %v4275 = vunpack.c.h.b16 %v4091
    %v4276 = vunpack.c.l.b16 %v4092
    %v4277 = vunpack.c.h.b16 %v4092
    %v4278 = vunpack.c.l.b16 %v4093
    %v4279 = vunpack.c.h.b16 %v4093
    %v4280 = vunpack.c.l.b16 %v4094
    %v4281 = vunpack.c.h.b16 %v4094
    %v4282 = vunpack.c.l.b16 %v4095
    %v4283 = vunpack.c.h.b16 %v4095
    %v4284 = vunpack.c.l.b16 %v4096
    %v4285 = vunpack.c.h.b16 %v4096
    %v4286 = vunpack.c.l.b16 %v4097
    %v4287 = vunpack.c.h.b16 %v4097
    %v4288 = vunpack.c.l.b16 %v4098
    %v4289 = vunpack.c.h.b16 %v4098
    %v4290 = vunpack.c.l.b16 %v4099
    %v4291 = vunpack.c.h.b16 %v4099
    %v4292 = vunpack.c.l.b16 %v4100
    %v4293 = vunpack.c.h.b16 %v4100
    %v4294 = vunpack.c.l.b16 %v4101
    %v4295 = vunpack.c.h.b16 %v4101
    %v4296 = vunpack.c.l.b16 %v4102
    %v4297 = vunpack.c.h.b16 %v4102
    %v4298 = vunpack.c.l.b16 %v4103
    %v4299 = vunpack.c.h.b16 %v4103
    %v4300 = vunpack.c.l.b16 %v4104
    %v4301 = vunpack.c.h.b16 %v4104
    %v4302 = vunpack.c.l.b16 %v4105
    %v4303 = vunpack.c.h.b16 %v4105
    %v4304 = vunpack.c.l.b16 %v4106
    %v4305 = vunpack.c.h.b16 %v4106
    %v4306 = vunpack.c.l.b16 %v4107
    %v4307 = vunpack.c.h.b16 %v4107
    %v4308 = vunpack.c.l.b16 %v4108
    %v4309 = vunpack.c.h.b16 %v4108
    %v4310 = vunpack.c.l.b16 %v4109
    %v4311 = vunpack.c.h.b16 %v4109
    %v4312 = vunpack.c.l.b16 %v4110
    %v4313 = vunpack.c.h.b16 %v4110
    %v4314 = vunpack.c.l.b16 %v4111
    %v4315 = vunpack.c.h.b16 %v4111
    %v4316 = vpack.c.b16 %v4190, %v4188
    %v4317 = vpack.c.b16 %v4191, %v4189
    %v4318 = vpack.c.b16 %v4194, %v4192
    %v4319 = vpack.c.b16 %v4195, %v4193
    %v4320 = vpack.c.b16 %v4198, %v4196
    %v4321 = vpack.c.b16 %v4199, %v4197
    %v4322 = vpack.c.b16 %v4202, %v4200
    %v4323 = vpack.c.b16 %v4203, %v4201
    %v4324 = vpack.c.b16 %v4206, %v4204
    %v4325 = vpack.c.b16 %v4207, %v4205
    %v4326 = vpack.c.b16 %v4210, %v4208
    %v4327 = vpack.c.b16 %v4211, %v4209
    %v4328 = vpack.c.b16 %v4214, %v4212
    %v4329 = vpack.c.b16 %v4215, %v4213
    %v4330 = vpack.c.b16 %v4218, %v4216
    %v4331 = vpack.c.b16 %v4219, %v4217
    %v4332 = vpack.c.b16 %v4222, %v4220
    %v4333 = vpack.c.b16 %v4223, %v4221
    %v4334 = vpack.c.b16 %v4226, %v4224
    %v4335 = vpack.c.b16 %v4227, %v4225
    %v4336 = vpack.c.b16 %v4230, %v4228
    %v4337 = vpack.c.b16 %v4231, %v4229
    %v4338 = vpack.c.b16 %v4234, %v4232
    %v4339 = vpack.c.b16 %v4235, %v4233
    %v4340 = vpack.c.b16 %v4238, %v4236
    %v4341 = vpack.c.b16 %v4239, %v4237
    %v4342 = vpack.c.b16 %v4242, %v4240
    %v4343 = vpack.c.b16 %v4243, %v4241
    %v4344 = vpack.c.b16 %v4246, %v4244
    %v4345 = vpack.c.b16 %v4247, %v4245
    %v4346 = vpack.c.b16 %v4250, %v4248
    %v4347 = vpack.c.b16 %v4251, %v4249
    %v4348 = vpack.c.b16 %v4254, %v4252
    %v4349 = vpack.c.b16 %v4255, %v4253
    %v4350 = vpack.c.b16 %v4258, %v4256
    %v4351 = vpack.c.b16 %v4259, %v4257
    %v4352 = vpack.c.b16 %v4262, %v4260
    %v4353 = vpack.c.b16 %v4263, %v4261
    %v4354 = vpack.c.b16 %v4266, %v4264
    %v4355 = vpack.c.b16 %v4267, %v4265
    %v4356 = vpack.c.b16 %v4270, %v4268
    %v4357 = vpack.c.b16 %v4271, %v4269
    %v4358 = vpack.c.b16 %v4274, %v4272
    %v4359 = vpack.c.b16 %v4275, %v4273
    %v4360 = vpack.c.b16 %v4278, %v4276
    %v4361 = vpack.c.b16 %v4279, %v4277
    %v4362 = vpack.c.b16 %v4282, %v4280
    %v4363 = vpack.c.b16 %v4283, %v4281
    %v4364 = vpack.c.b16 %v4286, %v4284
    %v4365 = vpack.c.b16 %v4287, %v4285
    %v4366 = vpack.c.b16 %v4290, %v4288
    %v4367 = vpack.c.b16 %v4291, %v4289
    %v4368 = vpack.c.b16 %v4294, %v4292
    %v4369 = vpack.c.b16 %v4295, %v4293
    %v4370 = vpack.c.b16 %v4298, %v4296
    %v4371 = vpack.c.b16 %v4299, %v4297
    %v4372 = vpack.c.b16 %v4302, %v4300
    %v4373 = vpack.c.b16 %v4303, %v4301
    %v4374 = vpack.c.b16 %v4306, %v4304
    %v4375 = vpack.c.b16 %v4307, %v4305
    %v4376 = vpack.c.b16 %v4310, %v4308
    %v4377 = vpack.c.b16 %v4311, %v4309
    %v4378 = vpack.c.b16 %v4314, %v4312
    %v4379 = vpack.c.b16 %v4315, %v4313
    %4444 = vmatprep.subr.bf16.mxu0 %v4331
    %4445 = vmatpush1.bf16.msra.mxu0 %v4330
    %4446 = vmatprep.subr.bf16.mxu0 %v4329
    %4447 = vmatpush1.bf16.msra.mxu0 %v4328
    %4448 = vmatprep.subr.bf16.mxu0 %v4327
    %4449 = vmatpush1.bf16.msra.mxu0 %v4326
    %4450 = vmatprep.subr.bf16.mxu0 %v4325
    %4451 = vmatpush1.bf16.msra.mxu0 %v4324
    %4452 = vmatprep.subr.bf16.mxu0 %v4323
    %4453 = vmatpush1.bf16.msra.mxu0 %v4322
    %4454 = vmatprep.subr.bf16.mxu0 %v4321
    %4455 = vmatpush1.bf16.msra.mxu0 %v4320
    %4456 = vmatprep.subr.bf16.mxu0 %v4319
    %4457 = vmatpush1.bf16.msra.mxu0 %v4318
    %4458 = vmatprep.subr.bf16.mxu0 %v4317
    %4459 = vmatpush1.bf16.msra.mxu0 %v4316
    %4460 = vmatprep.subr.bf16.mxu0 %v4347
    %4461 = vmatpush2.bf16.msra.mxu0 %v4346
    %4462 = vmatprep.subr.bf16.mxu0 %v4345
    %4463 = vmatpush2.bf16.msra.mxu0 %v4344
    %4464 = vmatprep.subr.bf16.mxu0 %v4343
    %4465 = vmatpush2.bf16.msra.mxu0 %v4342
    %4466 = vmatprep.subr.bf16.mxu0 %v4341
    %4467 = vmatpush2.bf16.msra.mxu0 %v4340
    %4468 = vmatprep.subr.bf16.mxu0 %v4339
    %4469 = vmatpush2.bf16.msra.mxu0 %v4338
    %4470 = vmatprep.subr.bf16.mxu0 %v4337
    %4471 = vmatpush2.bf16.msra.mxu0 %v4336
    %4472 = vmatprep.subr.bf16.mxu0 %v4335
    %4473 = vmatpush2.bf16.msra.mxu0 %v4334
    %4474 = vmatprep.subr.bf16.mxu0 %v4333
    %4475 = vmatpush2.bf16.msra.mxu0 %v4332
    %4476 = vmatprep.mubr.bf16.mxu0 %v4045
    %4477 = vmatmul.mubr.bf16.gmra.mxu0 %v4044
    %v4478 = vpop.f32.mrf.mxu0
    %v4479 = vadd.f32 %v4117, %v4478
    %v4480 = vpop.f32.mrf.mxu0
    %v4481 = vadd.f32 %v4121, %v4480
    %v4482 = vpop.f32.mrf.mxu0
    %v4483 = vpop.f32.mrf.mxu0
    %4484 = vdwg.mxu0
    %4485 = vmatprep.subr.bf16.mxu0 %v4363
    %4486 = vmatpush1.bf16.msra.mxu0 %v4362
    %4487 = vmatprep.subr.bf16.mxu0 %v4361
    %4488 = vmatpush1.bf16.msra.mxu0 %v4360
    %4489 = vmatprep.subr.bf16.mxu0 %v4359
    %4490 = vmatpush1.bf16.msra.mxu0 %v4358
    %4491 = vmatprep.subr.bf16.mxu0 %v4357
    %4492 = vmatpush1.bf16.msra.mxu0 %v4356
    %4493 = vmatprep.subr.bf16.mxu0 %v4355
    %4494 = vmatpush1.bf16.msra.mxu0 %v4354
    %4495 = vmatprep.subr.bf16.mxu0 %v4353
    %4496 = vmatpush1.bf16.msra.mxu0 %v4352
    %4497 = vmatprep.subr.bf16.mxu0 %v4351
    %4498 = vmatpush1.bf16.msra.mxu0 %v4350
    %4499 = vmatprep.subr.bf16.mxu0 %v4349
    %4500 = vmatpush1.bf16.msra.mxu0 %v4348
    %4501 = vmatprep.subr.bf16.mxu0 %v4379
    %4502 = vmatpush2.bf16.msra.mxu0 %v4378
    %4503 = vmatprep.subr.bf16.mxu0 %v4377
    %4504 = vmatpush2.bf16.msra.mxu0 %v4376
    %4505 = vmatprep.subr.bf16.mxu0 %v4375
    %4506 = vmatpush2.bf16.msra.mxu0 %v4374
    %4507 = vmatprep.subr.bf16.mxu0 %v4373
    %4508 = vmatpush2.bf16.msra.mxu0 %v4372
    %4509 = vmatprep.subr.bf16.mxu0 %v4371
    %4510 = vmatpush2.bf16.msra.mxu0 %v4370
    %4511 = vmatprep.subr.bf16.mxu0 %v4369
    %4512 = vmatpush2.bf16.msra.mxu0 %v4368
    %4513 = vmatprep.subr.bf16.mxu0 %v4367
    %4514 = vmatpush2.bf16.msra.mxu0 %v4366
    %4515 = vmatprep.subr.bf16.mxu0 %v4365
    %4516 = vmatpush2.bf16.msra.mxu0 %v4364
    %4517 = vmatprep.mubr.bf16.mxu0 %v4047
    %4518 = vmatmul.mubr.bf16.gmra.mxu0 %v4046
    %v4519 = vpop.f32.mrf.mxu0
    %v4520 = vadd.f32 %v4479, %v4519
    %v4521 = vpop.f32.mrf.mxu0
    %v4522 = vadd.f32 %v4481, %v4521
    %v4523 = vpop.f32.mrf.mxu0
    %v4524 = vpop.f32.mrf.mxu0
    %4525 = vdwg.mxu0
    %v4528 = vcombine.low %v4520, %v4522
    %v4530 = vunpack.c.l.s4 1983009808
    %v4531 = vunpack.c.0.s8 %v4530
    %v4532 = vlaneseq
    %v4533 = vshrl.u32 %v4532, 7
    %v4534 = vsub.s32 %v4531, %v4533
    %v4535 = vrot.slane %v4528, %v4534
    %4537 = vst [vmem:[#allocation2] sm:$0xf] %v4535
    // Predicated region
    $region30: #{multitasknet_forward.1} parent=1 // pred_check
      _
    $region31: #{multitasknet_forward.1} parent=1 // pred_check_branch
      %4539 = sbr.rel (0) target = $region33
    $region32: #{multitasknet_forward.1} parent=1 // pred_region
      %s4541 = ssub.s32 64, 64
      %4542 = vsyncadd [#allocation3], %s4541
      %s4544 = sshll.u32 [#allocation2], 4
      %s4545 = int_to_ptr.vmem [resolvable:$true] %s4544
      %4547 = dma.vmem_to_hbm [thread:$0]  %s4545, 64, %s7, [#allocation3]
    $region33: #{multitasknet_forward.1} parent=1 // pred_fallthru
      _
    // Predicated region
    $region34: #{multitasknet_forward.1} parent=1 // pred_check
      _
    $region35: #{multitasknet_forward.1} parent=1 // pred_check_branch
      %4549 = sbr.rel (0) target = $region37
    $region36: #{multitasknet_forward.1} parent=1 // pred_region
      %4550 = dma.done [#allocation3], 64
    $region37: #{multitasknet_forward.1} parent=1 // pred_fallthru
      _
    %4551 = vsyncpa [#allocation3], 1

</llo_original>
